<compile_context>
chip_gen: v5e
topology: v5e:2x2
jax: 0.10.0
libtpu: 0.0.40
codegen_flags: <defaults>
</compile_context>

<pallas_src>
import jax
import jax.numpy as jnp
from jax.experimental import pallas as pl
from jax.experimental.pallas import tpu as pltpu


# ----------------------------------------------------------------------------
# Pallas kernels
# ----------------------------------------------------------------------------
def _conv_mm_kernel(w_ref, p_ref, b_ref, o_ref):
    # (Cout, K) @ (K, B*Ho*Wo) -> lane-dense (Cout, B*Ho*Wo), fused bias + ReLU.
    acc = jnp.dot(w_ref[...], p_ref[...], preferred_element_type=jnp.float32)
    acc = jnp.maximum(acc + b_ref[...], 0.0)
    o_ref[...] = acc.astype(o_ref.dtype)


def conv_mm_pallas(w, p, b, out_dtype=jnp.bfloat16):
    """w: (Cout, K) bf16, p: (K, S) bf16, b: (Cout, 1) f32 -> (Cout, S)."""
    Cout, K = w.shape
    K2, S = p.shape
    assert K == K2
    return pl.pallas_call(
        _conv_mm_kernel,
        out_shape=jax.ShapeDtypeStruct((Cout, S), out_dtype),
        grid=(1,),
        in_specs=[
            pl.BlockSpec((Cout, K), lambda i: (0, 0)),
            pl.BlockSpec((K, S), lambda i: (0, 0)),
            pl.BlockSpec((Cout, 1), lambda i: (0, 0)),
        ],
        out_specs=pl.BlockSpec((Cout, S), lambda i: (0, 0)),
        compiler_params=pltpu.CompilerParams(
            dimension_semantics=("arbitrary",)),
    )(w, p, b)


def _fc_head_kernel(x_ref, wfc_ref, bfc_ref, wh_ref, bh_ref, o_ref):
    # fused: h = relu(x @ Wfc + bfc);  y = h @ Wh + bh   (h stays in VMEM/vregs)
    h = jnp.dot(x_ref[...], wfc_ref[...], preferred_element_type=jnp.float32)
    h = jnp.maximum(h + bfc_ref[...], 0.0)
    y = jnp.dot(h.astype(jnp.bfloat16), wh_ref[...],
                preferred_element_type=jnp.float32)
    o_ref[...] = (y + bh_ref[...]).astype(o_ref.dtype)


def fc_head_pallas(x, wfc, bfc, wh, bh):
    """x: (B, 2592) bf16 -> (B, E) f32 through fused fc(ReLU) + head."""
    B, K = x.shape
    K2, H = wfc.shape
    H2, E = wh.shape
    assert K == K2 and H == H2
    return pl.pallas_call(
        _fc_head_kernel,
        out_shape=jax.ShapeDtypeStruct((B, E), jnp.float32),
        grid=(1,),
        in_specs=[
            pl.BlockSpec((B, K), lambda i: (0, 0)),
            pl.BlockSpec((K, H), lambda i: (0, 0)),
            pl.BlockSpec((1, H), lambda i: (0, 0)),
            pl.BlockSpec((H, E), lambda i: (0, 0)),
            pl.BlockSpec((1, E), lambda i: (0, 0)),
        ],
        out_specs=pl.BlockSpec((B, E), lambda i: (0, 0)),
        compiler_params=pltpu.CompilerParams(
            dimension_semantics=("arbitrary",)),
    )(x, wfc, bfc, wh, bh)


# ----------------------------------------------------------------------------
# im2col glue (plain JAX, layout plumbing only)
# ----------------------------------------------------------------------------
def _im2col_T(a_cbhw, kh, kw, stride):
    """a: (C, B, H, W) -> patches^T (C*kh*kw, B*Ho*Wo); feature order (C,kh,kw)
    matches PyTorch OIHW weight flattening."""
    C, B, H, W = a_cbhw.shape
    Ho = (H - kh) // stride + 1
    Wo = (W - kw) // stride + 1
    cols = []
    for i in range(kh):
        for j in range(kw):
            cols.append(a_cbhw[:, :, i:i + stride * Ho:stride,
                               j:j + stride * Wo:stride])      # (C, B, Ho, Wo)
    p = jnp.stack(cols, axis=0).reshape(kh, kw, C, B, Ho, Wo)
    p = p.transpose(2, 0, 1, 3, 4, 5)                          # (C,kh,kw,B,Ho,Wo)
    return p.reshape(C * kh * kw, B * Ho * Wo), Ho, Wo


# ----------------------------------------------------------------------------
# Parameters
# ----------------------------------------------------------------------------
def init_params(embedding_size, key):
    ks = jax.random.split(key, 8)
    s = 0.05
    return {
        "conv1_w": s * jax.random.normal(ks[0], (16, 4, 8, 8), jnp.float32),
        "conv1_b": s * jax.random.normal(ks[1], (16,), jnp.float32),
        "conv2_w": s * jax.random.normal(ks[2], (32, 16, 4, 4), jnp.float32),
        "conv2_b": s * jax.random.normal(ks[3], (32,), jnp.float32),
        "fc_w": s * jax.random.normal(ks[4], (2592, 256), jnp.float32),
        "fc_b": s * jax.random.normal(ks[5], (256,), jnp.float32),
        "head_w": s * jax.random.normal(ks[6], (256, embedding_size), jnp.float32),
        "head_b": s * jax.random.normal(ks[7], (embedding_size,), jnp.float32),
    }


def prepare_params(params):
    """One-time weight re-formatting: flatten conv kernels, cast matmul
    operands to bf16, reshape biases for in-kernel broadcast."""
    E = params["head_w"].shape[1]
    return {
        "w1": params["conv1_w"].reshape(16, 4 * 8 * 8).astype(jnp.bfloat16),
        "b1": params["conv1_b"].reshape(16, 1).astype(jnp.float32),
        "w2": params["conv2_w"].reshape(32, 16 * 4 * 4).astype(jnp.bfloat16),
        "b2": params["conv2_b"].reshape(32, 1).astype(jnp.float32),
        "wfc": params["fc_w"].astype(jnp.bfloat16),
        "bfc": params["fc_b"].reshape(1, 256).astype(jnp.float32),
        "wh": params["head_w"].astype(jnp.bfloat16),
        "bh": params["head_b"].reshape(1, E).astype(jnp.float32),
    }


# ----------------------------------------------------------------------------
# DQN forward (3 pallas_call launches: conv1, conv2, fused fc+head)
# ----------------------------------------------------------------------------
def dqn_forward(prep, x):
    B = x.shape[0]
    x = jnp.transpose(x, (1, 0, 2, 3)).astype(jnp.bfloat16)    # (C, B, H, W)
    # conv1: 4 -> 16, k=8, s=4, ReLU   (lane-dense output (16, B*20*20))
    p1, ho1, wo1 = _im2col_T(x, 8, 8, 4)                       # (256, B*400)
    a1 = conv_mm_pallas(prep["w1"], p1, prep["b1"])            # (16, B*400)
    # conv2: 16 -> 32, k=4, s=2, ReLU
    a1 = a1.reshape(16, B, ho1, wo1)                           # (C, B, H, W)
    p2, ho2, wo2 = _im2col_T(a1, 4, 4, 2)                      # (256, B*81)
    a2 = conv_mm_pallas(prep["w2"], p2, prep["b2"])            # (32, B*81)
    # flatten to PyTorch's out.view(B, -1) order: (B, C*Ho*Wo)
    xf = a2.reshape(32, B, ho2 * wo2).transpose(1, 0, 2).reshape(B, -1)
    # fused fc(ReLU) + head; hidden activation never leaves VMEM
    return fc_head_pallas(xf, prep["wfc"], prep["bfc"], prep["wh"], prep["bh"])


# ----------------------------------------------------------------------------
# Pure-JAX f32 reference (sanity check)
# ----------------------------------------------------------------------------
def dqn_reference(params, x):
    hp = jax.lax.Precision.HIGHEST
    out = jax.lax.conv_general_dilated(
        x, params["conv1_w"], window_strides=(4, 4), padding="VALID",
        dimension_numbers=("NCHW", "OIHW", "NCHW"), precision=hp)
    out = jax.nn.relu(out + params["conv1_b"][None, :, None, None])
    out = jax.lax.conv_general_dilated(
        out, params["conv2_w"], window_strides=(2, 2), padding="VALID",
        dimension_numbers=("NCHW", "OIHW", "NCHW"), precision=hp)
    out = jax.nn.relu(out + params["conv2_b"][None, :, None, None])
    out = out.reshape(out.shape[0], -1)
    out = jax.nn.relu(jnp.dot(out, params["fc_w"], precision=hp) + params["fc_b"])
    out = jnp.dot(out, params["head_w"], precision=hp) + params["head_b"]
    return out


if __name__ == "__main__":
    key = jax.random.PRNGKey(0)
    k_in, k_par = jax.random.split(key)

    embedding_size = 64
    batch = 2
    # The fc layer's 2592 input features (32 * 9 * 9) force 84x84 inputs.
    x = jax.random.normal(k_in, (batch, 4, 84, 84), jnp.float32)
    params = init_params(embedding_size, k_par)

    prep = prepare_params(params)
    fwd = jax.jit(dqn_forward)
    y = jax.block_until_ready(fwd(prep, x))
    assert y.shape == (batch, embedding_size)

    y_ref = jax.block_until_ready(dqn_reference(params, x))
    max_diff = float(jnp.max(jnp.abs(y - y_ref)))
    # bf16 MXU inputs with f32 accumulation: expect <~1-2% relative error.
    assert jnp.allclose(y, y_ref, rtol=3e-2, atol=3e-2), (
        f"mismatch vs reference, max abs diff = {max_diff}")

    print("KERNEL_OK")
</pallas_src>

<mosaic_0001>
module attributes {stable_mosaic.version = 11 : i64} {
  func.func @_conv_mm_kernel(%arg0: i32, %arg1: memref<16x256xbf16, #tpu.memory_space<vmem>>, %arg2: memref<256x800xbf16, #tpu.memory_space<vmem>>, %arg3: memref<16x1xf32, #tpu.memory_space<vmem>>, %arg4: memref<16x800xbf16, #tpu.memory_space<vmem>>) attributes {dimension_semantics = [#tpu.dimension_semantics<arbitrary>], iteration_bounds = array<i64: 1>, scalar_prefetch = 0 : i64, scratch_operands = 0 : i64, tpu.core_type = #tpu.core_type<tc>, window_params = [{pipeline_mode = #tpu.pipeline_mode<synchronous>, transform_indices = @transform_0, window_bounds = array<i64: 16, 256>}, {pipeline_mode = #tpu.pipeline_mode<synchronous>, transform_indices = @transform_1, window_bounds = array<i64: 256, 800>}, {pipeline_mode = #tpu.pipeline_mode<synchronous>, transform_indices = @transform_2, window_bounds = array<i64: 16, 1>}, {pipeline_mode = #tpu.pipeline_mode<synchronous>, transform_indices = @transform_3, window_bounds = array<i64: 16, 800>}]} {
    %c0 = arith.constant 0 : index
    %c0_0 = arith.constant 0 : index
    %0 = vector.load %arg1[%c0, %c0_0] : memref<16x256xbf16, #tpu.memory_space<vmem>>, vector<16x256xbf16>
    %c0_1 = arith.constant 0 : index
    %c0_2 = arith.constant 0 : index
    %1 = vector.load %arg2[%c0_1, %c0_2] : memref<256x800xbf16, #tpu.memory_space<vmem>>, vector<256x800xbf16>
    %cst = arith.constant dense<0.000000e+00> : vector<16x800xf32>
    %2 = tpu.matmul %0, %1, %cst {dimension_numbers = #tpu.dot_dimension_numbers<[1], [0], [0], [1], [0, 0, 1, 1], [], []>} : vector<16x256xbf16>, vector<256x800xbf16>, vector<16x800xf32> -> vector<16x800xf32>
    %c0_3 = arith.constant 0 : index
    %c0_4 = arith.constant 0 : index
    %3 = vector.load %arg3[%c0_3, %c0_4] : memref<16x1xf32, #tpu.memory_space<vmem>>, vector<16x1xf32>
    %4 = vector.broadcast %3 : vector<16x1xf32> to vector<16x800xf32>
    %5 = arith.addf %2, %4 : vector<16x800xf32>
    %cst_5 = arith.constant 0.000000e+00 : f32
    %6 = vector.broadcast %cst_5 : f32 to vector<16x800xf32>
    %7 = arith.maximumf %5, %6 : vector<16x800xf32>
    %8 = arith.truncf %7 : vector<16x800xf32> to vector<16x800xbf16>
    %c0_6 = arith.constant 0 : index
    %c0_7 = arith.constant 0 : index
    %9 = vector.load %arg4[%c0_6, %c0_7] : memref<16x800xbf16, #tpu.memory_space<vmem>>, vector<16x800xbf16>
    tpu.vector_store %arg4[%c0_6, %c0_7], %8 {strides = array<i32>} : memref<16x800xbf16, #tpu.memory_space<vmem>>, vector<16x800xbf16>,
    return
  }
  func.func @transform_0(%arg0: i32) -> (i32, i32) {
    %c0_i32 = arith.constant 0 : i32
    %c0_i32_0 = arith.constant 0 : i32
    %c0_i32_1 = arith.constant 0 : i32
    return %c0_i32, %c0_i32_0 : i32, i32
  }
  func.func @transform_1(%arg0: i32) -> (i32, i32) {
    %c0_i32 = arith.constant 0 : i32
    %c0_i32_0 = arith.constant 0 : i32
    %c0_i32_1 = arith.constant 0 : i32
    return %c0_i32, %c0_i32_0 : i32, i32
  }
  func.func @transform_2(%arg0: i32) -> (i32, i32) {
    %c0_i32 = arith.constant 0 : i32
    %c0_i32_0 = arith.constant 0 : i32
    %c0_i32_1 = arith.constant 0 : i32
    return %c0_i32, %c0_i32_0 : i32, i32
  }
  func.func @transform_3(%arg0: i32) -> (i32, i32) {
    %c0_i32 = arith.constant 0 : i32
    %c0_i32_0 = arith.constant 0 : i32
    %c0_i32_1 = arith.constant 0 : i32
    return %c0_i32, %c0_i32_0 : i32, i32
  }
}

module attributes {stable_mosaic.version = 11 : i64} {
  func.func @_conv_mm_kernel(%arg0: i32, %arg1: memref<32x256xbf16, #tpu.memory_space<vmem>>, %arg2: memref<256x162xbf16, #tpu.memory_space<vmem>>, %arg3: memref<32x1xf32, #tpu.memory_space<vmem>>, %arg4: memref<32x162xbf16, #tpu.memory_space<vmem>>) attributes {dimension_semantics = [#tpu.dimension_semantics<arbitrary>], iteration_bounds = array<i64: 1>, scalar_prefetch = 0 : i64, scratch_operands = 0 : i64, tpu.core_type = #tpu.core_type<tc>, window_params = [{pipeline_mode = #tpu.pipeline_mode<synchronous>, transform_indices = @transform_0, window_bounds = array<i64: 32, 256>}, {pipeline_mode = #tpu.pipeline_mode<synchronous>, transform_indices = @transform_1, window_bounds = array<i64: 256, 162>}, {pipeline_mode = #tpu.pipeline_mode<synchronous>, transform_indices = @transform_2, window_bounds = array<i64: 32, 1>}, {pipeline_mode = #tpu.pipeline_mode<synchronous>, transform_indices = @transform_3, window_bounds = array<i64: 32, 162>}]} {
    %c0 = arith.constant 0 : index
    %c0_0 = arith.constant 0 : index
    %0 = vector.load %arg1[%c0, %c0_0] : memref<32x256xbf16, #tpu.memory_space<vmem>>, vector<32x256xbf16>
    %c0_1 = arith.constant 0 : index
    %c0_2 = arith.constant 0 : index
    %1 = vector.load %arg2[%c0_1, %c0_2] : memref<256x162xbf16, #tpu.memory_space<vmem>>, vector<256x162xbf16>
    %cst = arith.constant dense<0.000000e+00> : vector<32x162xf32>
    %2 = tpu.matmul %0, %1, %cst {dimension_numbers = #tpu.dot_dimension_numbers<[1], [0], [0], [1], [0, 0, 1, 1], [], []>} : vector<32x256xbf16>, vector<256x162xbf16>, vector<32x162xf32> -> vector<32x162xf32>
    %c0_3 = arith.constant 0 : index
    %c0_4 = arith.constant 0 : index
    %3 = vector.load %arg3[%c0_3, %c0_4] : memref<32x1xf32, #tpu.memory_space<vmem>>, vector<32x1xf32>
    %4 = vector.broadcast %3 : vector<32x1xf32> to vector<32x162xf32>
    %5 = arith.addf %2, %4 : vector<32x162xf32>
    %cst_5 = arith.constant 0.000000e+00 : f32
    %6 = vector.broadcast %cst_5 : f32 to vector<32x162xf32>
    %7 = arith.maximumf %5, %6 : vector<32x162xf32>
    %8 = arith.truncf %7 : vector<32x162xf32> to vector<32x162xbf16>
    %c0_6 = arith.constant 0 : index
    %c0_7 = arith.constant 0 : index
    %9 = vector.load %arg4[%c0_6, %c0_7] : memref<32x162xbf16, #tpu.memory_space<vmem>>, vector<32x162xbf16>
    tpu.vector_store %arg4[%c0_6, %c0_7], %8 {strides = array<i32>} : memref<32x162xbf16, #tpu.memory_space<vmem>>, vector<32x162xbf16>,
    return
  }
  func.func @transform_0(%arg0: i32) -> (i32, i32) {
    %c0_i32 = arith.constant 0 : i32
    %c0_i32_0 = arith.constant 0 : i32
    %c0_i32_1 = arith.constant 0 : i32
    return %c0_i32, %c0_i32_0 : i32, i32
  }
  func.func @transform_1(%arg0: i32) -> (i32, i32) {
    %c0_i32 = arith.constant 0 : i32
    %c0_i32_0 = arith.constant 0 : i32
    %c0_i32_1 = arith.constant 0 : i32
    return %c0_i32, %c0_i32_0 : i32, i32
  }
  func.func @transform_2(%arg0: i32) -> (i32, i32) {
    %c0_i32 = arith.constant 0 : i32
    %c0_i32_0 = arith.constant 0 : i32
    %c0_i32_1 = arith.constant 0 : i32
    return %c0_i32, %c0_i32_0 : i32, i32
  }
  func.func @transform_3(%arg0: i32) -> (i32, i32) {
    %c0_i32 = arith.constant 0 : i32
    %c0_i32_0 = arith.constant 0 : i32
    %c0_i32_1 = arith.constant 0 : i32
    return %c0_i32, %c0_i32_0 : i32, i32
  }
}

module attributes {stable_mosaic.version = 11 : i64} {
  func.func @_fc_head_kernel(%arg0: i32, %arg1: memref<2x2592xbf16, #tpu.memory_space<vmem>>, %arg2: memref<2592x256xbf16, #tpu.memory_space<vmem>>, %arg3: memref<1x256xf32, #tpu.memory_space<vmem>>, %arg4: memref<256x64xbf16, #tpu.memory_space<vmem>>, %arg5: memref<1x64xf32, #tpu.memory_space<vmem>>, %arg6: memref<2x64xf32, #tpu.memory_space<vmem>>) attributes {dimension_semantics = [#tpu.dimension_semantics<arbitrary>], iteration_bounds = array<i64: 1>, scalar_prefetch = 0 : i64, scratch_operands = 0 : i64, tpu.core_type = #tpu.core_type<tc>, window_params = [{pipeline_mode = #tpu.pipeline_mode<synchronous>, transform_indices = @transform_0, window_bounds = array<i64: 2, 2592>}, {pipeline_mode = #tpu.pipeline_mode<synchronous>, transform_indices = @transform_1, window_bounds = array<i64: 2592, 256>}, {pipeline_mode = #tpu.pipeline_mode<synchronous>, transform_indices = @transform_2, window_bounds = array<i64: 1, 256>}, {pipeline_mode = #tpu.pipeline_mode<synchronous>, transform_indices = @transform_3, window_bounds = array<i64: 256, 64>}, {pipeline_mode = #tpu.pipeline_mode<synchronous>, transform_indices = @transform_4, window_bounds = array<i64: 1, 64>}, {pipeline_mode = #tpu.pipeline_mode<synchronous>, transform_indices = @transform_5, window_bounds = array<i64: 2, 64>}]} {
    %c0 = arith.constant 0 : index
    %c0_0 = arith.constant 0 : index
    %0 = vector.load %arg1[%c0, %c0_0] : memref<2x2592xbf16, #tpu.memory_space<vmem>>, vector<2x2592xbf16>
    %c0_1 = arith.constant 0 : index
    %c0_2 = arith.constant 0 : index
    %1 = vector.load %arg2[%c0_1, %c0_2] : memref<2592x256xbf16, #tpu.memory_space<vmem>>, vector<2592x256xbf16>
    %cst = arith.constant dense<0.000000e+00> : vector<2x256xf32>
    %2 = tpu.matmul %0, %1, %cst {dimension_numbers = #tpu.dot_dimension_numbers<[1], [0], [0], [1], [0, 0, 1, 1], [], []>} : vector<2x2592xbf16>, vector<2592x256xbf16>, vector<2x256xf32> -> vector<2x256xf32>
    %c0_3 = arith.constant 0 : index
    %c0_4 = arith.constant 0 : index
    %3 = vector.load %arg3[%c0_3, %c0_4] : memref<1x256xf32, #tpu.memory_space<vmem>>, vector<1x256xf32>
    %4 = vector.broadcast %3 : vector<1x256xf32> to vector<2x256xf32>
    %5 = arith.addf %2, %4 : vector<2x256xf32>
    %cst_5 = arith.constant 0.000000e+00 : f32
    %6 = vector.broadcast %cst_5 : f32 to vector<2x256xf32>
    %7 = arith.maximumf %5, %6 : vector<2x256xf32>
    %8 = arith.truncf %7 : vector<2x256xf32> to vector<2x256xbf16>
    %c0_6 = arith.constant 0 : index
    %c0_7 = arith.constant 0 : index
    %9 = vector.load %arg4[%c0_6, %c0_7] : memref<256x64xbf16, #tpu.memory_space<vmem>>, vector<256x64xbf16>
    %cst_8 = arith.constant dense<0.000000e+00> : vector<2x64xf32>
    %10 = tpu.matmul %8, %9, %cst_8 {dimension_numbers = #tpu.dot_dimension_numbers<[1], [0], [0], [1], [0, 0, 1, 1], [], []>} : vector<2x256xbf16>, vector<256x64xbf16>, vector<2x64xf32> -> vector<2x64xf32>
    %c0_9 = arith.constant 0 : index
    %c0_10 = arith.constant 0 : index
    %11 = vector.load %arg5[%c0_9, %c0_10] : memref<1x64xf32, #tpu.memory_space<vmem>>, vector<1x64xf32>
    %12 = vector.broadcast %11 : vector<1x64xf32> to vector<2x64xf32>
    %13 = arith.addf %10, %12 : vector<2x64xf32>
    %c0_11 = arith.constant 0 : index
    %c0_12 = arith.constant 0 : index
    %14 = vector.load %arg6[%c0_11, %c0_12] : memref<2x64xf32, #tpu.memory_space<vmem>>, vector<2x64xf32>
    tpu.vector_store %arg6[%c0_11, %c0_12], %13 {strides = array<i32>} : memref<2x64xf32, #tpu.memory_space<vmem>>, vector<2x64xf32>,
    return
  }
  func.func @transform_0(%arg0: i32) -> (i32, i32) {
    %c0_i32 = arith.constant 0 : i32
    %c0_i32_0 = arith.constant 0 : i32
    %c0_i32_1 = arith.constant 0 : i32
    return %c0_i32, %c0_i32_0 : i32, i32
  }
  func.func @transform_1(%arg0: i32) -> (i32, i32) {
    %c0_i32 = arith.constant 0 : i32
    %c0_i32_0 = arith.constant 0 : i32
    %c0_i32_1 = arith.constant 0 : i32
    return %c0_i32, %c0_i32_0 : i32, i32
  }
  func.func @transform_2(%arg0: i32) -> (i32, i32) {
    %c0_i32 = arith.constant 0 : i32
    %c0_i32_0 = arith.constant 0 : i32
    %c0_i32_1 = arith.constant 0 : i32
    return %c0_i32, %c0_i32_0 : i32, i32
  }
  func.func @transform_3(%arg0: i32) -> (i32, i32) {
    %c0_i32 = arith.constant 0 : i32
    %c0_i32_0 = arith.constant 0 : i32
    %c0_i32_1 = arith.constant 0 : i32
    return %c0_i32, %c0_i32_0 : i32, i32
  }
  func.func @transform_4(%arg0: i32) -> (i32, i32) {
    %c0_i32 = arith.constant 0 : i32
    %c0_i32_0 = arith.constant 0 : i32
    %c0_i32_1 = arith.constant 0 : i32
    return %c0_i32, %c0_i32_0 : i32, i32
  }
  func.func @transform_5(%arg0: i32) -> (i32, i32) {
    %c0_i32 = arith.constant 0 : i32
    %c0_i32_0 = arith.constant 0 : i32
    %c0_i32_1 = arith.constant 0 : i32
    return %c0_i32, %c0_i32_0 : i32, i32
  }
}

</mosaic_0001>

<llo_original>
// kernel: dqn_forward.3
$region0: #{dqn_forward.3}
  #allocation0 [shape = 'u32[]', space=smem, size = 0x4, offset = 0x4, fixed_abs, tag = 'smem constant byte address 0x4 - core index']
  #allocation1 [shape = 'u32[72,128]{1,0:T(1,128)}', space=vmem, size = 0x9000, scoped, tag = 'internal scratch']
  %s0 = inlined_call_operand.vmem [shape: bf16[16,256], index: 0, kind: input, shape index: {}]
  %s1 = inlined_call_operand.vmem [shape: bf16[256,800], index: 1, kind: input, shape index: {}]
  %s2 = inlined_call_operand.vmem [shape: f32[16,1], index: 2, kind: input, shape index: {}]
  %s3 = inlined_call_operand.vmem [shape: bf16[16,800], index: 3, kind: output, shape index: {}]
  %s4 = sld [smem:[#allocation0]]
  $region22: #{dqn_forward.3} parent=0
    _
  %s6 = ssub.s32 1, %s4
  %s7 = scalar_select 0, %s6, %s4
  // Predicated region
  $region2: #{dqn_forward.3} parent=0 // pred_check
    _
  $region3: #{dqn_forward.3} parent=0 // pred_check_branch
    %9 = sbr.rel (0) target = $region5
  $region4: #{dqn_forward.3} parent=0 // pred_region
    _
  $region5: #{dqn_forward.3} parent=0 // pred_fallthru
    _
  // Predicated region
  $region6: #{dqn_forward.3} parent=0 // pred_check
    _
  $region7: #{dqn_forward.3} parent=0 // pred_check_branch
    %11 = sbr.rel (0) target = $region9
  $region8: #{dqn_forward.3} parent=0 // pred_region
    _
  $region9: #{dqn_forward.3} parent=0 // pred_fallthru
    _
  // Predicated region
  $region10: #{dqn_forward.3} parent=0 // pred_check
    _
  $region11: #{dqn_forward.3} parent=0 // pred_check_branch
    %13 = sbr.rel (0) target = $region13
  $region12: #{dqn_forward.3} parent=0 // pred_region
    _
  $region13: #{dqn_forward.3} parent=0 // pred_fallthru
    _
  %v14 = vld [vmem:[%s0] sm:$0xff]
  %v15 = vld [vmem:[%s0 + $0x8] sm:$0xff]
  %v16 = vld [vmem:[%s1] sm:$0xff]
  %v17 = vld [vmem:[%s1 + $0x8] sm:$0xff]
  %v18 = vld [vmem:[%s1 + $0x10] sm:$0xff]
  %v19 = vld [vmem:[%s1 + $0x18] sm:$0xf]
  %v20 = vld [vmem:[%s1 + $0x1c] sm:$0xff]
  %v21 = vld [vmem:[%s1 + $0x24] sm:$0xff]
  %v22 = vld [vmem:[%s1 + $0x2c] sm:$0xff]
  %v23 = vld [vmem:[%s1 + $0x34] sm:$0xf]
  %v24 = vld [vmem:[%s1 + $0x38] sm:$0xff]
  %v25 = vld [vmem:[%s1 + $0x40] sm:$0xff]
  %v26 = vld [vmem:[%s1 + $0x48] sm:$0xff]
  %v27 = vld [vmem:[%s1 + $0x50] sm:$0xf]
  %v28 = vld [vmem:[%s1 + $0x54] sm:$0xff]
  %v29 = vld [vmem:[%s1 + $0x5c] sm:$0xff]
  %v30 = vld [vmem:[%s1 + $0x64] sm:$0xff]
  %v31 = vld [vmem:[%s1 + $0x6c] sm:$0xf]
  %v32 = vld [vmem:[%s1 + $0x70] sm:$0xff]
  %v33 = vld [vmem:[%s1 + $0x78] sm:$0xff]
  %v34 = vld [vmem:[%s1 + $0x80] sm:$0xff]
  %v35 = vld [vmem:[%s1 + $0x88] sm:$0xf]
  %v36 = vld [vmem:[%s1 + $0x8c] sm:$0xff]
  %v37 = vld [vmem:[%s1 + $0x94] sm:$0xff]
  %v38 = vld [vmem:[%s1 + $0x9c] sm:$0xff]
  %v39 = vld [vmem:[%s1 + $0xa4] sm:$0xf]
  %v40 = vld [vmem:[%s1 + $0xa8] sm:$0xff]
  %v41 = vld [vmem:[%s1 + $0xb0] sm:$0xff]
  %v42 = vld [vmem:[%s1 + $0xb8] sm:$0xff]
  %v43 = vld [vmem:[%s1 + $0xc0] sm:$0xf]
  %v44 = vld [vmem:[%s1 + $0xc4] sm:$0xff]
  %v45 = vld [vmem:[%s1 + $0xcc] sm:$0xff]
  %v46 = vld [vmem:[%s1 + $0xd4] sm:$0xff]
  %v47 = vld [vmem:[%s1 + $0xdc] sm:$0xf]
  %v48 = vld [vmem:[%s1 + $0xe0] sm:$0xff]
  %v49 = vld [vmem:[%s1 + $0xe8] sm:$0xff]
  %v50 = vld [vmem:[%s1 + $0xf0] sm:$0xff]
  %v51 = vld [vmem:[%s1 + $0xf8] sm:$0xf]
  %v52 = vld [vmem:[%s1 + $0xfc] sm:$0xff]
  %v53 = vld [vmem:[%s1 + $0x104] sm:$0xff]
  %v54 = vld [vmem:[%s1 + $0x10c] sm:$0xff]
  %v55 = vld [vmem:[%s1 + $0x114] sm:$0xf]
  %v56 = vld [vmem:[%s1 + $0x118] sm:$0xff]
  %v57 = vld [vmem:[%s1 + $0x120] sm:$0xff]
  %v58 = vld [vmem:[%s1 + $0x128] sm:$0xff]
  %v59 = vld [vmem:[%s1 + $0x130] sm:$0xf]
  %v60 = vld [vmem:[%s1 + $0x134] sm:$0xff]
  %v61 = vld [vmem:[%s1 + $0x13c] sm:$0xff]
  %v62 = vld [vmem:[%s1 + $0x144] sm:$0xff]
  %v63 = vld [vmem:[%s1 + $0x14c] sm:$0xf]
  %v64 = vld [vmem:[%s1 + $0x150] sm:$0xff]
  %v65 = vld [vmem:[%s1 + $0x158] sm:$0xff]
  %v66 = vld [vmem:[%s1 + $0x160] sm:$0xff]
  %v67 = vld [vmem:[%s1 + $0x168] sm:$0xf]
  %v68 = vld [vmem:[%s1 + $0x16c] sm:$0xff]
  %v69 = vld [vmem:[%s1 + $0x174] sm:$0xff]
  %v70 = vld [vmem:[%s1 + $0x17c] sm:$0xff]
  %v71 = vld [vmem:[%s1 + $0x184] sm:$0xf]
  %v72 = vld [vmem:[%s1 + $0x188] sm:$0xff]
  %v73 = vld [vmem:[%s1 + $0x190] sm:$0xff]
  %v74 = vld [vmem:[%s1 + $0x198] sm:$0xff]
  %v75 = vld [vmem:[%s1 + $0x1a0] sm:$0xf]
  %v76 = vld [vmem:[%s1 + $0x1a4] sm:$0xff]
  %v77 = vld [vmem:[%s1 + $0x1ac] sm:$0xff]
  %v78 = vld [vmem:[%s1 + $0x1b4] sm:$0xff]
  %v79 = vld [vmem:[%s1 + $0x1bc] sm:$0xf]
  %v80 = vld [vmem:[%s1 + $0x1c0] sm:$0xff]
  %v81 = vld [vmem:[%s1 + $0x1c8] sm:$0xff]
  %v82 = vld [vmem:[%s1 + $0x1d0] sm:$0xff]
  %v83 = vld [vmem:[%s1 + $0x1d8] sm:$0xf]
  %v84 = vld [vmem:[%s1 + $0x1dc] sm:$0xff]
  %v85 = vld [vmem:[%s1 + $0x1e4] sm:$0xff]
  %v86 = vld [vmem:[%s1 + $0x1ec] sm:$0xff]
  %v87 = vld [vmem:[%s1 + $0x1f4] sm:$0xf]
  %v88 = vld [vmem:[%s1 + $0x1f8] sm:$0xff]
  %v89 = vld [vmem:[%s1 + $0x200] sm:$0xff]
  %v90 = vld [vmem:[%s1 + $0x208] sm:$0xff]
  %v91 = vld [vmem:[%s1 + $0x210] sm:$0xf]
  %v92 = vld [vmem:[%s1 + $0x214] sm:$0xff]
  %v93 = vld [vmem:[%s1 + $0x21c] sm:$0xff]
  %v94 = vld [vmem:[%s1 + $0x224] sm:$0xff]
  %v95 = vld [vmem:[%s1 + $0x22c] sm:$0xf]
  %v96 = vld [vmem:[%s1 + $0x230] sm:$0xff]
  %v97 = vld [vmem:[%s1 + $0x238] sm:$0xff]
  %v98 = vld [vmem:[%s1 + $0x240] sm:$0xff]
  %v99 = vld [vmem:[%s1 + $0x248] sm:$0xf]
  %v100 = vld [vmem:[%s1 + $0x24c] sm:$0xff]
  %v101 = vld [vmem:[%s1 + $0x254] sm:$0xff]
  %v102 = vld [vmem:[%s1 + $0x25c] sm:$0xff]
  %v103 = vld [vmem:[%s1 + $0x264] sm:$0xf]
  %v104 = vld [vmem:[%s1 + $0x268] sm:$0xff]
  %v105 = vld [vmem:[%s1 + $0x270] sm:$0xff]
  %v106 = vld [vmem:[%s1 + $0x278] sm:$0xff]
  %v107 = vld [vmem:[%s1 + $0x280] sm:$0xf]
  %v108 = vld [vmem:[%s1 + $0x284] sm:$0xff]
  %v109 = vld [vmem:[%s1 + $0x28c] sm:$0xff]
  %v110 = vld [vmem:[%s1 + $0x294] sm:$0xff]
  %v111 = vld [vmem:[%s1 + $0x29c] sm:$0xf]
  %v112 = vld [vmem:[%s1 + $0x2a0] sm:$0xff]
  %v113 = vld [vmem:[%s1 + $0x2a8] sm:$0xff]
  %v114 = vld [vmem:[%s1 + $0x2b0] sm:$0xff]
  %v115 = vld [vmem:[%s1 + $0x2b8] sm:$0xf]
  %v116 = vld [vmem:[%s1 + $0x2bc] sm:$0xff]
  %v117 = vld [vmem:[%s1 + $0x2c4] sm:$0xff]
  %v118 = vld [vmem:[%s1 + $0x2cc] sm:$0xff]
  %v119 = vld [vmem:[%s1 + $0x2d4] sm:$0xf]
  %v120 = vld [vmem:[%s1 + $0x2d8] sm:$0xff]
  %v121 = vld [vmem:[%s1 + $0x2e0] sm:$0xff]
  %v122 = vld [vmem:[%s1 + $0x2e8] sm:$0xff]
  %v123 = vld [vmem:[%s1 + $0x2f0] sm:$0xf]
  %v124 = vld [vmem:[%s1 + $0x2f4] sm:$0xff]
  %v125 = vld [vmem:[%s1 + $0x2fc] sm:$0xff]
  %v126 = vld [vmem:[%s1 + $0x304] sm:$0xff]
  %v127 = vld [vmem:[%s1 + $0x30c] sm:$0xf]
  %v128 = vld [vmem:[%s1 + $0x310] sm:$0xff]
  %v129 = vld [vmem:[%s1 + $0x318] sm:$0xff]
  %v130 = vld [vmem:[%s1 + $0x320] sm:$0xff]
  %v131 = vld [vmem:[%s1 + $0x328] sm:$0xf]
  %v132 = vld [vmem:[%s1 + $0x32c] sm:$0xff]
  %v133 = vld [vmem:[%s1 + $0x334] sm:$0xff]
  %v134 = vld [vmem:[%s1 + $0x33c] sm:$0xff]
  %v135 = vld [vmem:[%s1 + $0x344] sm:$0xf]
  %v136 = vld [vmem:[%s1 + $0x348] sm:$0xff]
  %v137 = vld [vmem:[%s1 + $0x350] sm:$0xff]
  %v138 = vld [vmem:[%s1 + $0x358] sm:$0xff]
  %v139 = vld [vmem:[%s1 + $0x360] sm:$0xf]
  %v140 = vld [vmem:[%s1 + $0x364] sm:$0xff]
  %v141 = vld [vmem:[%s1 + $0x36c] sm:$0xff]
  %v142 = vld [vmem:[%s1 + $0x374] sm:$0xff]
  %v143 = vld [vmem:[%s1 + $0x37c] sm:$0xf]
  %v144 = vld [vmem:[%s2] sm:$0xff]
  %v145 = vld [vmem:[%s2 + $0x8] sm:$0xff]
  %147 = vset.pattern.permute.xlu0 0
  %148 = vperm.xlu0 %147, %v144
  %v149 = vpop.permute.xlu0 %148
  %152 = vset.pattern.permute.xlu0 0
  %153 = vperm.xlu0 %152, %v145
  %v154 = vpop.permute.xlu0 %153
  %v158 = vunpack.c.l.b16 %v14
  %v159 = vunpack.c.h.b16 %v14
  %v160 = vunpack.c.l.b16 %v15
  %v161 = vunpack.c.h.b16 %v15
  %v162 = vpack.c.b16 %v160, %v158
  %v163 = vpack.c.b16 %v161, %v159
  %v294 = vunpack.c.l.b16 %v16
  %v295 = vunpack.c.h.b16 %v16
  %v296 = vunpack.c.l.b16 %v17
  %v297 = vunpack.c.h.b16 %v17
  %v298 = vunpack.c.l.b16 %v18
  %v299 = vunpack.c.h.b16 %v18
  %v300 = vunpack.c.l.b16 %v19
  %v301 = vunpack.c.l.b16 %v20
  %v302 = vunpack.c.h.b16 %v20
  %v303 = vunpack.c.l.b16 %v21
  %v304 = vunpack.c.h.b16 %v21
  %v305 = vunpack.c.l.b16 %v22
  %v306 = vunpack.c.h.b16 %v22
  %v307 = vunpack.c.l.b16 %v23
  %v308 = vunpack.c.l.b16 %v24
  %v309 = vunpack.c.h.b16 %v24
  %v310 = vunpack.c.l.b16 %v25
  %v311 = vunpack.c.h.b16 %v25
  %v312 = vunpack.c.l.b16 %v26
  %v313 = vunpack.c.h.b16 %v26
  %v314 = vunpack.c.l.b16 %v27
  %v315 = vunpack.c.l.b16 %v28
  %v316 = vunpack.c.h.b16 %v28
  %v317 = vunpack.c.l.b16 %v29
  %v318 = vunpack.c.h.b16 %v29
  %v319 = vunpack.c.l.b16 %v30
  %v320 = vunpack.c.h.b16 %v30
  %v321 = vunpack.c.l.b16 %v31
  %v322 = vunpack.c.l.b16 %v32
  %v323 = vunpack.c.h.b16 %v32
  %v324 = vunpack.c.l.b16 %v33
  %v325 = vunpack.c.h.b16 %v33
  %v326 = vunpack.c.l.b16 %v34
  %v327 = vunpack.c.h.b16 %v34
  %v328 = vunpack.c.l.b16 %v35
  %v329 = vunpack.c.l.b16 %v36
  %v330 = vunpack.c.h.b16 %v36
  %v331 = vunpack.c.l.b16 %v37
  %v332 = vunpack.c.h.b16 %v37
  %v333 = vunpack.c.l.b16 %v38
  %v334 = vunpack.c.h.b16 %v38
  %v335 = vunpack.c.l.b16 %v39
  %v336 = vunpack.c.l.b16 %v40
  %v337 = vunpack.c.h.b16 %v40
  %v338 = vunpack.c.l.b16 %v41
  %v339 = vunpack.c.h.b16 %v41
  %v340 = vunpack.c.l.b16 %v42
  %v341 = vunpack.c.h.b16 %v42
  %v342 = vunpack.c.l.b16 %v43
  %v343 = vunpack.c.l.b16 %v44
  %v344 = vunpack.c.h.b16 %v44
  %v345 = vunpack.c.l.b16 %v45
  %v346 = vunpack.c.h.b16 %v45
  %v347 = vunpack.c.l.b16 %v46
  %v348 = vunpack.c.h.b16 %v46
  %v349 = vunpack.c.l.b16 %v47
  %v350 = vunpack.c.l.b16 %v48
  %v351 = vunpack.c.h.b16 %v48
  %v352 = vunpack.c.l.b16 %v49
  %v353 = vunpack.c.h.b16 %v49
  %v354 = vunpack.c.l.b16 %v50
  %v355 = vunpack.c.h.b16 %v50
  %v356 = vunpack.c.l.b16 %v51
  %v357 = vunpack.c.l.b16 %v52
  %v358 = vunpack.c.h.b16 %v52
  %v359 = vunpack.c.l.b16 %v53
  %v360 = vunpack.c.h.b16 %v53
  %v361 = vunpack.c.l.b16 %v54
  %v362 = vunpack.c.h.b16 %v54
  %v363 = vunpack.c.l.b16 %v55
  %v364 = vunpack.c.l.b16 %v56
  %v365 = vunpack.c.h.b16 %v56
  %v366 = vunpack.c.l.b16 %v57
  %v367 = vunpack.c.h.b16 %v57
  %v368 = vunpack.c.l.b16 %v58
  %v369 = vunpack.c.h.b16 %v58
  %v370 = vunpack.c.l.b16 %v59
  %v371 = vunpack.c.l.b16 %v60
  %v372 = vunpack.c.h.b16 %v60
  %v373 = vunpack.c.l.b16 %v61
  %v374 = vunpack.c.h.b16 %v61
  %v375 = vunpack.c.l.b16 %v62
  %v376 = vunpack.c.h.b16 %v62
  %v377 = vunpack.c.l.b16 %v63
  %v378 = vunpack.c.l.b16 %v64
  %v379 = vunpack.c.h.b16 %v64
  %v380 = vunpack.c.l.b16 %v65
  %v381 = vunpack.c.h.b16 %v65
  %v382 = vunpack.c.l.b16 %v66
  %v383 = vunpack.c.h.b16 %v66
  %v384 = vunpack.c.l.b16 %v67
  %v385 = vunpack.c.l.b16 %v68
  %v386 = vunpack.c.h.b16 %v68
  %v387 = vunpack.c.l.b16 %v69
  %v388 = vunpack.c.h.b16 %v69
  %v389 = vunpack.c.l.b16 %v70
  %v390 = vunpack.c.h.b16 %v70
  %v391 = vunpack.c.l.b16 %v71
  %v392 = vunpack.c.l.b16 %v72
  %v393 = vunpack.c.h.b16 %v72
  %v394 = vunpack.c.l.b16 %v73
  %v395 = vunpack.c.h.b16 %v73
  %v396 = vunpack.c.l.b16 %v74
  %v397 = vunpack.c.h.b16 %v74
  %v398 = vunpack.c.l.b16 %v75
  %v399 = vunpack.c.l.b16 %v76
  %v400 = vunpack.c.h.b16 %v76
  %v401 = vunpack.c.l.b16 %v77
  %v402 = vunpack.c.h.b16 %v77
  %v403 = vunpack.c.l.b16 %v78
  %v404 = vunpack.c.h.b16 %v78
  %v405 = vunpack.c.l.b16 %v79
  %v406 = vunpack.c.l.b16 %v80
  %v407 = vunpack.c.h.b16 %v80
  %v408 = vunpack.c.l.b16 %v81
  %v409 = vunpack.c.h.b16 %v81
  %v410 = vunpack.c.l.b16 %v82
  %v411 = vunpack.c.h.b16 %v82
  %v412 = vunpack.c.l.b16 %v83
  %v413 = vunpack.c.l.b16 %v84
  %v414 = vunpack.c.h.b16 %v84
  %v415 = vunpack.c.l.b16 %v85
  %v416 = vunpack.c.h.b16 %v85
  %v417 = vunpack.c.l.b16 %v86
  %v418 = vunpack.c.h.b16 %v86
  %v419 = vunpack.c.l.b16 %v87
  %v420 = vunpack.c.l.b16 %v88
  %v421 = vunpack.c.h.b16 %v88
  %v422 = vunpack.c.l.b16 %v89
  %v423 = vunpack.c.h.b16 %v89
  %v424 = vunpack.c.l.b16 %v90
  %v425 = vunpack.c.h.b16 %v90
  %v426 = vunpack.c.l.b16 %v91
  %v427 = vunpack.c.l.b16 %v92
  %v428 = vunpack.c.h.b16 %v92
  %v429 = vunpack.c.l.b16 %v93
  %v430 = vunpack.c.h.b16 %v93
  %v431 = vunpack.c.l.b16 %v94
  %v432 = vunpack.c.h.b16 %v94
  %v433 = vunpack.c.l.b16 %v95
  %v434 = vunpack.c.l.b16 %v96
  %v435 = vunpack.c.h.b16 %v96
  %v436 = vunpack.c.l.b16 %v97
  %v437 = vunpack.c.h.b16 %v97
  %v438 = vunpack.c.l.b16 %v98
  %v439 = vunpack.c.h.b16 %v98
  %v440 = vunpack.c.l.b16 %v99
  %v441 = vunpack.c.l.b16 %v100
  %v442 = vunpack.c.h.b16 %v100
  %v443 = vunpack.c.l.b16 %v101
  %v444 = vunpack.c.h.b16 %v101
  %v445 = vunpack.c.l.b16 %v102
  %v446 = vunpack.c.h.b16 %v102
  %v447 = vunpack.c.l.b16 %v103
  %v448 = vunpack.c.l.b16 %v104
  %v449 = vunpack.c.h.b16 %v104
  %v450 = vunpack.c.l.b16 %v105
  %v451 = vunpack.c.h.b16 %v105
  %v452 = vunpack.c.l.b16 %v106
  %v453 = vunpack.c.h.b16 %v106
  %v454 = vunpack.c.l.b16 %v107
  %v455 = vunpack.c.l.b16 %v108
  %v456 = vunpack.c.h.b16 %v108
  %v457 = vunpack.c.l.b16 %v109
  %v458 = vunpack.c.h.b16 %v109
  %v459 = vunpack.c.l.b16 %v110
  %v460 = vunpack.c.h.b16 %v110
  %v461 = vunpack.c.l.b16 %v111
  %v462 = vunpack.c.l.b16 %v112
  %v463 = vunpack.c.h.b16 %v112
  %v464 = vunpack.c.l.b16 %v113
  %v465 = vunpack.c.h.b16 %v113
  %v466 = vunpack.c.l.b16 %v114
  %v467 = vunpack.c.h.b16 %v114
  %v468 = vunpack.c.l.b16 %v115
  %v469 = vunpack.c.l.b16 %v116
  %v470 = vunpack.c.h.b16 %v116
  %v471 = vunpack.c.l.b16 %v117
  %v472 = vunpack.c.h.b16 %v117
  %v473 = vunpack.c.l.b16 %v118
  %v474 = vunpack.c.h.b16 %v118
  %v475 = vunpack.c.l.b16 %v119
  %v476 = vunpack.c.l.b16 %v120
  %v477 = vunpack.c.h.b16 %v120
  %v478 = vunpack.c.l.b16 %v121
  %v479 = vunpack.c.h.b16 %v121
  %v480 = vunpack.c.l.b16 %v122
  %v481 = vunpack.c.h.b16 %v122
  %v482 = vunpack.c.l.b16 %v123
  %v483 = vunpack.c.l.b16 %v124
  %v484 = vunpack.c.h.b16 %v124
  %v485 = vunpack.c.l.b16 %v125
  %v486 = vunpack.c.h.b16 %v125
  %v487 = vunpack.c.l.b16 %v126
  %v488 = vunpack.c.h.b16 %v126
  %v489 = vunpack.c.l.b16 %v127
  %v490 = vunpack.c.l.b16 %v128
  %v491 = vunpack.c.h.b16 %v128
  %v492 = vunpack.c.l.b16 %v129
  %v493 = vunpack.c.h.b16 %v129
  %v494 = vunpack.c.l.b16 %v130
  %v495 = vunpack.c.h.b16 %v130
  %v496 = vunpack.c.l.b16 %v131
  %v497 = vunpack.c.l.b16 %v132
  %v498 = vunpack.c.h.b16 %v132
  %v499 = vunpack.c.l.b16 %v133
  %v500 = vunpack.c.h.b16 %v133
  %v501 = vunpack.c.l.b16 %v134
  %v502 = vunpack.c.h.b16 %v134
  %v503 = vunpack.c.l.b16 %v135
  %v504 = vunpack.c.l.b16 %v136
  %v505 = vunpack.c.h.b16 %v136
  %v506 = vunpack.c.l.b16 %v137
  %v507 = vunpack.c.h.b16 %v137
  %v508 = vunpack.c.l.b16 %v138
  %v509 = vunpack.c.h.b16 %v138
  %v510 = vunpack.c.l.b16 %v139
  %v511 = vunpack.c.l.b16 %v140
  %v512 = vunpack.c.h.b16 %v140
  %v513 = vunpack.c.l.b16 %v141
  %v514 = vunpack.c.h.b16 %v141
  %v515 = vunpack.c.l.b16 %v142
  %v516 = vunpack.c.h.b16 %v142
  %v517 = vunpack.c.l.b16 %v143
  %v518 = vpack.c.b16 %v301, %v294
  %v519 = vpack.c.b16 %v302, %v295
  %v520 = vpack.c.b16 %v303, %v296
  %v521 = vpack.c.b16 %v304, %v297
  %v522 = vpack.c.b16 %v305, %v298
  %v523 = vpack.c.b16 %v306, %v299
  %v524 = vpack.c.b16 %v307, %v300
  %v525 = vpack.c.b16 %v315, %v308
  %v526 = vpack.c.b16 %v316, %v309
  %v527 = vpack.c.b16 %v317, %v310
  %v528 = vpack.c.b16 %v318, %v311
  %v529 = vpack.c.b16 %v319, %v312
  %v530 = vpack.c.b16 %v320, %v313
  %v531 = vpack.c.b16 %v321, %v314
  %v532 = vpack.c.b16 %v329, %v322
  %v533 = vpack.c.b16 %v330, %v323
  %v534 = vpack.c.b16 %v331, %v324
  %v535 = vpack.c.b16 %v332, %v325
  %v536 = vpack.c.b16 %v333, %v326
  %v537 = vpack.c.b16 %v334, %v327
  %v538 = vpack.c.b16 %v335, %v328
  %v539 = vpack.c.b16 %v343, %v336
  %v540 = vpack.c.b16 %v344, %v337
  %v541 = vpack.c.b16 %v345, %v338
  %v542 = vpack.c.b16 %v346, %v339
  %v543 = vpack.c.b16 %v347, %v340
  %v544 = vpack.c.b16 %v348, %v341
  %v545 = vpack.c.b16 %v349, %v342
  %v546 = vpack.c.b16 %v357, %v350
  %v547 = vpack.c.b16 %v358, %v351
  %v548 = vpack.c.b16 %v359, %v352
  %v549 = vpack.c.b16 %v360, %v353
  %v550 = vpack.c.b16 %v361, %v354
  %v551 = vpack.c.b16 %v362, %v355
  %v552 = vpack.c.b16 %v363, %v356
  %v553 = vpack.c.b16 %v371, %v364
  %v554 = vpack.c.b16 %v372, %v365
  %v555 = vpack.c.b16 %v373, %v366
  %v556 = vpack.c.b16 %v374, %v367
  %v557 = vpack.c.b16 %v375, %v368
  %v558 = vpack.c.b16 %v376, %v369
  %v559 = vpack.c.b16 %v377, %v370
  %v560 = vpack.c.b16 %v385, %v378
  %v561 = vpack.c.b16 %v386, %v379
  %v562 = vpack.c.b16 %v387, %v380
  %v563 = vpack.c.b16 %v388, %v381
  %v564 = vpack.c.b16 %v389, %v382
  %v565 = vpack.c.b16 %v390, %v383
  %v566 = vpack.c.b16 %v391, %v384
  %v567 = vpack.c.b16 %v399, %v392
  %v568 = vpack.c.b16 %v400, %v393
  %v569 = vpack.c.b16 %v401, %v394
  %v570 = vpack.c.b16 %v402, %v395
  %v571 = vpack.c.b16 %v403, %v396
  %v572 = vpack.c.b16 %v404, %v397
  %v573 = vpack.c.b16 %v405, %v398
  %v574 = vpack.c.b16 %v413, %v406
  %v575 = vpack.c.b16 %v414, %v407
  %v576 = vpack.c.b16 %v415, %v408
  %v577 = vpack.c.b16 %v416, %v409
  %v578 = vpack.c.b16 %v417, %v410
  %v579 = vpack.c.b16 %v418, %v411
  %v580 = vpack.c.b16 %v419, %v412
  %v581 = vpack.c.b16 %v427, %v420
  %v582 = vpack.c.b16 %v428, %v421
  %v583 = vpack.c.b16 %v429, %v422
  %v584 = vpack.c.b16 %v430, %v423
  %v585 = vpack.c.b16 %v431, %v424
  %v586 = vpack.c.b16 %v432, %v425
  %v587 = vpack.c.b16 %v433, %v426
  %v588 = vpack.c.b16 %v441, %v434
  %v589 = vpack.c.b16 %v442, %v435
  %v590 = vpack.c.b16 %v443, %v436
  %v591 = vpack.c.b16 %v444, %v437
  %v592 = vpack.c.b16 %v445, %v438
  %v593 = vpack.c.b16 %v446, %v439
  %v594 = vpack.c.b16 %v447, %v440
  %v595 = vpack.c.b16 %v455, %v448
  %v596 = vpack.c.b16 %v456, %v449
  %v597 = vpack.c.b16 %v457, %v450
  %v598 = vpack.c.b16 %v458, %v451
  %v599 = vpack.c.b16 %v459, %v452
  %v600 = vpack.c.b16 %v460, %v453
  %v601 = vpack.c.b16 %v461, %v454
  %v602 = vpack.c.b16 %v469, %v462
  %v603 = vpack.c.b16 %v470, %v463
  %v604 = vpack.c.b16 %v471, %v464
  %v605 = vpack.c.b16 %v472, %v465
  %v606 = vpack.c.b16 %v473, %v466
  %v607 = vpack.c.b16 %v474, %v467
  %v608 = vpack.c.b16 %v475, %v468
  %v609 = vpack.c.b16 %v483, %v476
  %v610 = vpack.c.b16 %v484, %v477
  %v611 = vpack.c.b16 %v485, %v478
  %v612 = vpack.c.b16 %v486, %v479
  %v613 = vpack.c.b16 %v487, %v480
  %v614 = vpack.c.b16 %v488, %v481
  %v615 = vpack.c.b16 %v489, %v482
  %v616 = vpack.c.b16 %v497, %v490
  %v617 = vpack.c.b16 %v498, %v491
  %v618 = vpack.c.b16 %v499, %v492
  %v619 = vpack.c.b16 %v500, %v493
  %v620 = vpack.c.b16 %v501, %v494
  %v621 = vpack.c.b16 %v502, %v495
  %v622 = vpack.c.b16 %v503, %v496
  %v623 = vpack.c.b16 %v511, %v504
  %v624 = vpack.c.b16 %v512, %v505
  %v625 = vpack.c.b16 %v513, %v506
  %v626 = vpack.c.b16 %v514, %v507
  %v627 = vpack.c.b16 %v515, %v508
  %v628 = vpack.c.b16 %v516, %v509
  %v629 = vpack.c.b16 %v517, %v510
  %742 = vmatpush.bf16.msra.mxu0 %v567
  %743 = vmatpush.bf16.msra.mxu0 %v560
  %744 = vmatpush.bf16.msra.mxu0 %v553
  %745 = vmatpush.bf16.msra.mxu0 %v546
  %746 = vmatpush.bf16.msra.mxu0 %v539
  %747 = vmatpush.bf16.msra.mxu0 %v532
  %748 = vmatpush.bf16.msra.mxu0 %v525
  %749 = vmatpush.bf16.msra.mxu0 %v518
  %750 = vmatmul.bf16.gmra.mxu0 %v162
  %v751 = vpop.f32.mrf.mxu0
  %v752 = vadd.f32 %v149, %v751
  %v753 = vpop.f32.mrf.mxu0
  %v754 = vadd.f32 %v154, %v753
  %755 = vdwg.mxu0
  %756 = vmatpush.bf16.msra.mxu0 %v623
  %757 = vmatpush.bf16.msra.mxu0 %v616
  %758 = vmatpush.bf16.msra.mxu0 %v609
  %759 = vmatpush.bf16.msra.mxu0 %v602
  %760 = vmatpush.bf16.msra.mxu0 %v595
  %761 = vmatpush.bf16.msra.mxu0 %v588
  %762 = vmatpush.bf16.msra.mxu0 %v581
  %763 = vmatpush.bf16.msra.mxu0 %v574
  %764 = vmatmul.bf16.gmra.mxu0 %v163
  %v765 = vpop.f32.mrf.mxu0
  %v766 = vadd.f32 %v752, %v765
  %v767 = vpop.f32.mrf.mxu0
  %v768 = vadd.f32 %v754, %v767
  %769 = vdwg.mxu0
  %770 = vmatpush.bf16.msra.mxu0 %v568
  %771 = vmatpush.bf16.msra.mxu0 %v561
  %772 = vmatpush.bf16.msra.mxu0 %v554
  %773 = vmatpush.bf16.msra.mxu0 %v547
  %774 = vmatpush.bf16.msra.mxu0 %v540
  %775 = vmatpush.bf16.msra.mxu0 %v533
  %776 = vmatpush.bf16.msra.mxu0 %v526
  %777 = vmatpush.bf16.msra.mxu0 %v519
  %778 = vmatmul.bf16.gmra.mxu0 %v162
  %v779 = vpop.f32.mrf.mxu0
  %v780 = vadd.f32 %v149, %v779
  %v781 = vpop.f32.mrf.mxu0
  %v782 = vadd.f32 %v154, %v781
  %783 = vdwg.mxu0
  %784 = vmatpush.bf16.msra.mxu0 %v624
  %785 = vmatpush.bf16.msra.mxu0 %v617
  %786 = vmatpush.bf16.msra.mxu0 %v610
  %787 = vmatpush.bf16.msra.mxu0 %v603
  %788 = vmatpush.bf16.msra.mxu0 %v596
  %789 = vmatpush.bf16.msra.mxu0 %v589
  %790 = vmatpush.bf16.msra.mxu0 %v582
  %791 = vmatpush.bf16.msra.mxu0 %v575
  %792 = vmatmul.bf16.gmra.mxu0 %v163
  %v793 = vpop.f32.mrf.mxu0
  %v794 = vadd.f32 %v780, %v793
  %v795 = vpop.f32.mrf.mxu0
  %v796 = vadd.f32 %v782, %v795
  %797 = vdwg.mxu0
  %798 = vmatpush.bf16.msra.mxu0 %v569
  %799 = vmatpush.bf16.msra.mxu0 %v562
  %800 = vmatpush.bf16.msra.mxu0 %v555
  %801 = vmatpush.bf16.msra.mxu0 %v548
  %802 = vmatpush.bf16.msra.mxu0 %v541
  %803 = vmatpush.bf16.msra.mxu0 %v534
  %804 = vmatpush.bf16.msra.mxu0 %v527
  %805 = vmatpush.bf16.msra.mxu0 %v520
  %806 = vmatmul.bf16.gmra.mxu0 %v162
  %v807 = vpop.f32.mrf.mxu0
  %v808 = vadd.f32 %v149, %v807
  %v809 = vpop.f32.mrf.mxu0
  %v810 = vadd.f32 %v154, %v809
  %811 = vdwg.mxu0
  %812 = vmatpush.bf16.msra.mxu0 %v625
  %813 = vmatpush.bf16.msra.mxu0 %v618
  %814 = vmatpush.bf16.msra.mxu0 %v611
  %815 = vmatpush.bf16.msra.mxu0 %v604
  %816 = vmatpush.bf16.msra.mxu0 %v597
  %817 = vmatpush.bf16.msra.mxu0 %v590
  %818 = vmatpush.bf16.msra.mxu0 %v583
  %819 = vmatpush.bf16.msra.mxu0 %v576
  %820 = vmatmul.bf16.gmra.mxu0 %v163
  %v821 = vpop.f32.mrf.mxu0
  %v822 = vadd.f32 %v808, %v821
  %v823 = vpop.f32.mrf.mxu0
  %v824 = vadd.f32 %v810, %v823
  %825 = vdwg.mxu0
  %826 = vmatpush.bf16.msra.mxu0 %v570
  %827 = vmatpush.bf16.msra.mxu0 %v563
  %828 = vmatpush.bf16.msra.mxu0 %v556
  %829 = vmatpush.bf16.msra.mxu0 %v549
  %830 = vmatpush.bf16.msra.mxu0 %v542
  %831 = vmatpush.bf16.msra.mxu0 %v535
  %832 = vmatpush.bf16.msra.mxu0 %v528
  %833 = vmatpush.bf16.msra.mxu0 %v521
  %834 = vmatmul.bf16.gmra.mxu0 %v162
  %v835 = vpop.f32.mrf.mxu0
  %v836 = vadd.f32 %v149, %v835
  %v837 = vpop.f32.mrf.mxu0
  %v838 = vadd.f32 %v154, %v837
  %839 = vdwg.mxu0
  %840 = vmatpush.bf16.msra.mxu0 %v626
  %841 = vmatpush.bf16.msra.mxu0 %v619
  %842 = vmatpush.bf16.msra.mxu0 %v612
  %843 = vmatpush.bf16.msra.mxu0 %v605
  %844 = vmatpush.bf16.msra.mxu0 %v598
  %845 = vmatpush.bf16.msra.mxu0 %v591
  %846 = vmatpush.bf16.msra.mxu0 %v584
  %847 = vmatpush.bf16.msra.mxu0 %v577
  %848 = vmatmul.bf16.gmra.mxu0 %v163
  %v849 = vpop.f32.mrf.mxu0
  %v850 = vadd.f32 %v836, %v849
  %v851 = vpop.f32.mrf.mxu0
  %v852 = vadd.f32 %v838, %v851
  %853 = vdwg.mxu0
  %854 = vmatpush.bf16.msra.mxu0 %v571
  %855 = vmatpush.bf16.msra.mxu0 %v564
  %856 = vmatpush.bf16.msra.mxu0 %v557
  %857 = vmatpush.bf16.msra.mxu0 %v550
  %858 = vmatpush.bf16.msra.mxu0 %v543
  %859 = vmatpush.bf16.msra.mxu0 %v536
  %860 = vmatpush.bf16.msra.mxu0 %v529
  %861 = vmatpush.bf16.msra.mxu0 %v522
  %862 = vmatmul.bf16.gmra.mxu0 %v162
  %v863 = vpop.f32.mrf.mxu0
  %v864 = vadd.f32 %v149, %v863
  %v865 = vpop.f32.mrf.mxu0
  %v866 = vadd.f32 %v154, %v865
  %867 = vdwg.mxu0
  %868 = vmatpush.bf16.msra.mxu0 %v627
  %869 = vmatpush.bf16.msra.mxu0 %v620
  %870 = vmatpush.bf16.msra.mxu0 %v613
  %871 = vmatpush.bf16.msra.mxu0 %v606
  %872 = vmatpush.bf16.msra.mxu0 %v599
  %873 = vmatpush.bf16.msra.mxu0 %v592
  %874 = vmatpush.bf16.msra.mxu0 %v585
  %875 = vmatpush.bf16.msra.mxu0 %v578
  %876 = vmatmul.bf16.gmra.mxu0 %v163
  %v877 = vpop.f32.mrf.mxu0
  %v878 = vadd.f32 %v864, %v877
  %v879 = vpop.f32.mrf.mxu0
  %v880 = vadd.f32 %v866, %v879
  %881 = vdwg.mxu0
  %882 = vmatpush.bf16.msra.mxu0 %v572
  %883 = vmatpush.bf16.msra.mxu0 %v565
  %884 = vmatpush.bf16.msra.mxu0 %v558
  %885 = vmatpush.bf16.msra.mxu0 %v551
  %886 = vmatpush.bf16.msra.mxu0 %v544
  %887 = vmatpush.bf16.msra.mxu0 %v537
  %888 = vmatpush.bf16.msra.mxu0 %v530
  %889 = vmatpush.bf16.msra.mxu0 %v523
  %890 = vmatmul.bf16.gmra.mxu0 %v162
  %v891 = vpop.f32.mrf.mxu0
  %v892 = vadd.f32 %v149, %v891
  %v893 = vpop.f32.mrf.mxu0
  %v894 = vadd.f32 %v154, %v893
  %895 = vdwg.mxu0
  %896 = vmatpush.bf16.msra.mxu0 %v628
  %897 = vmatpush.bf16.msra.mxu0 %v621
  %898 = vmatpush.bf16.msra.mxu0 %v614
  %899 = vmatpush.bf16.msra.mxu0 %v607
  %900 = vmatpush.bf16.msra.mxu0 %v600
  %901 = vmatpush.bf16.msra.mxu0 %v593
  %902 = vmatpush.bf16.msra.mxu0 %v586
  %903 = vmatpush.bf16.msra.mxu0 %v579
  %904 = vmatmul.bf16.gmra.mxu0 %v163
  %v905 = vpop.f32.mrf.mxu0
  %v906 = vadd.f32 %v892, %v905
  %v907 = vpop.f32.mrf.mxu0
  %v908 = vadd.f32 %v894, %v907
  %909 = vdwg.mxu0
  %910 = vmatpush.bf16.msra.mxu0 %v573
  %911 = vmatpush.bf16.msra.mxu0 %v566
  %912 = vmatpush.bf16.msra.mxu0 %v559
  %913 = vmatpush.bf16.msra.mxu0 %v552
  %914 = vmatpush.bf16.msra.mxu0 %v545
  %915 = vmatpush.bf16.msra.mxu0 %v538
  %916 = vmatpush.bf16.msra.mxu0 %v531
  %917 = vmatpush.bf16.msra.mxu0 %v524
  %918 = vmatmul.bf16.gmra.mxu0 %v162
  %v919 = vpop.f32.mrf.mxu0
  %v920 = vadd.f32 %v149, %v919
  %v921 = vpop.f32.mrf.mxu0
  %v922 = vadd.f32 %v154, %v921
  %923 = vdwg.mxu0
  %924 = vmatpush.bf16.msra.mxu0 %v629
  %925 = vmatpush.bf16.msra.mxu0 %v622
  %926 = vmatpush.bf16.msra.mxu0 %v615
  %927 = vmatpush.bf16.msra.mxu0 %v608
  %928 = vmatpush.bf16.msra.mxu0 %v601
  %929 = vmatpush.bf16.msra.mxu0 %v594
  %930 = vmatpush.bf16.msra.mxu0 %v587
  %931 = vmatpush.bf16.msra.mxu0 %v580
  %932 = vmatmul.bf16.gmra.mxu0 %v163
  %v933 = vpop.f32.mrf.mxu0
  %v934 = vadd.f32 %v920, %v933
  %v935 = vpop.f32.mrf.mxu0
  %v936 = vadd.f32 %v922, %v935
  %937 = vdwg.mxu0
  %v938 = vmax.f32 %v766, 0.0
  %v939 = vmax.f32 %v794, 0.0
  %v940 = vmax.f32 %v822, 0.0
  %v941 = vmax.f32 %v850, 0.0
  %v942 = vmax.f32 %v878, 0.0
  %v943 = vmax.f32 %v906, 0.0
  %v944 = vmax.f32 %v934, 0.0
  %v945 = vmax.f32 %v768, 0.0
  %v946 = vmax.f32 %v796, 0.0
  %v947 = vmax.f32 %v824, 0.0
  %v948 = vmax.f32 %v852, 0.0
  %v949 = vmax.f32 %v880, 0.0
  %v950 = vmax.f32 %v908, 0.0
  %v951 = vmax.f32 %v936, 0.0
  %v952 = vpack.c.bf16 %v939, %v938
  %v953 = vpack.c.bf16 %v941, %v940
  %v954 = vpack.c.bf16 %v943, %v942
  %v955 = vpack.c.bf16 %v944, %v944
  %v956 = vpack.c.bf16 %v946, %v945
  %v957 = vpack.c.bf16 %v948, %v947
  %v958 = vpack.c.bf16 %v950, %v949
  %v959 = vpack.c.bf16 %v951, %v951
  %960 = vst [vmem:[%s3] sm:$0xff] %v952
  %961 = vst [vmem:[%s3 + $0x8] sm:$0xff] %v953
  %962 = vst [vmem:[%s3 + $0x10] sm:$0xff] %v954
  %vm963 = vcmask 257024
  %964 = vst.msk [vmem:[%s3 + $0x18] sm:$0xf] %vm963, %v955
  %965 = vst [vmem:[%s3 + $0x1c] sm:$0xff] %v956
  %966 = vst [vmem:[%s3 + $0x24] sm:$0xff] %v957
  %967 = vst [vmem:[%s3 + $0x2c] sm:$0xff] %v958
  %968 = vst.msk [vmem:[%s3 + $0x34] sm:$0xf] %vm963, %v959
  // Predicated region
  $region14: #{dqn_forward.3} parent=0 // pred_check
    _
  $region15: #{dqn_forward.3} parent=0 // pred_check_branch
    %970 = sbr.rel (0) target = $region17
  $region16: #{dqn_forward.3} parent=0 // pred_region
    _
  $region17: #{dqn_forward.3} parent=0 // pred_fallthru
    _
  // Predicated region
  $region18: #{dqn_forward.3} parent=0 // pred_check
    _
  $region19: #{dqn_forward.3} parent=0 // pred_check_branch
    %972 = sbr.rel (0) target = $region21
  $region20: #{dqn_forward.3} parent=0 // pred_region
    _
  $region21: #{dqn_forward.3} parent=0 // pred_fallthru
    _

// kernel: dqn_forward.4
$region0: #{dqn_forward.4}
  #allocation0 [shape = 'u32[]', space=smem, size = 0x4, offset = 0x4, fixed_abs, tag = 'smem constant byte address 0x4 - core index']
  #allocation1 [shape = 'u32[72,128]{1,0:T(1,128)}', space=vmem, size = 0x9000, scoped, tag = 'internal scratch']
  %s0 = inlined_call_operand.vmem [shape: bf16[32,256], index: 0, kind: input, shape index: {}]
  %s1 = inlined_call_operand.vmem [shape: bf16[256,162], index: 1, kind: input, shape index: {}]
  %s2 = inlined_call_operand.vmem [shape: f32[32,1], index: 2, kind: input, shape index: {}]
  %s3 = inlined_call_operand.vmem [shape: bf16[32,162], index: 3, kind: output, shape index: {}]
  %s4 = sld [smem:[#allocation0]]
  $region22: #{dqn_forward.4} parent=0
    _
  %s6 = ssub.s32 1, %s4
  %s7 = scalar_select 0, %s6, %s4
  // Predicated region
  $region2: #{dqn_forward.4} parent=0 // pred_check
    _
  $region3: #{dqn_forward.4} parent=0 // pred_check_branch
    %9 = sbr.rel (0) target = $region5
  $region4: #{dqn_forward.4} parent=0 // pred_region
    _
  $region5: #{dqn_forward.4} parent=0 // pred_fallthru
    _
  // Predicated region
  $region6: #{dqn_forward.4} parent=0 // pred_check
    _
  $region7: #{dqn_forward.4} parent=0 // pred_check_branch
    %11 = sbr.rel (0) target = $region9
  $region8: #{dqn_forward.4} parent=0 // pred_region
    _
  $region9: #{dqn_forward.4} parent=0 // pred_fallthru
    _
  // Predicated region
  $region10: #{dqn_forward.4} parent=0 // pred_check
    _
  $region11: #{dqn_forward.4} parent=0 // pred_check_branch
    %13 = sbr.rel (0) target = $region13
  $region12: #{dqn_forward.4} parent=0 // pred_region
    _
  $region13: #{dqn_forward.4} parent=0 // pred_fallthru
    _
  %v14 = vld [vmem:[%s0] sm:$0xff]
  %v15 = vld [vmem:[%s0 + $0x8] sm:$0xff]
  %v16 = vld [vmem:[%s0 + $0x10] sm:$0xff]
  %v17 = vld [vmem:[%s0 + $0x18] sm:$0xff]
  %v18 = vld [vmem:[%s1] sm:$0xff]
  %v19 = vld [vmem:[%s1 + $0x8] sm:$0xff]
  %v20 = vld [vmem:[%s1 + $0x10] sm:$0xff]
  %v21 = vld [vmem:[%s1 + $0x18] sm:$0xff]
  %v22 = vld [vmem:[%s1 + $0x20] sm:$0xff]
  %v23 = vld [vmem:[%s1 + $0x28] sm:$0xff]
  %v24 = vld [vmem:[%s1 + $0x30] sm:$0xff]
  %v25 = vld [vmem:[%s1 + $0x38] sm:$0xff]
  %v26 = vld [vmem:[%s1 + $0x40] sm:$0xff]
  %v27 = vld [vmem:[%s1 + $0x48] sm:$0xff]
  %v28 = vld [vmem:[%s1 + $0x50] sm:$0xff]
  %v29 = vld [vmem:[%s1 + $0x58] sm:$0xff]
  %v30 = vld [vmem:[%s1 + $0x60] sm:$0xff]
  %v31 = vld [vmem:[%s1 + $0x68] sm:$0xff]
  %v32 = vld [vmem:[%s1 + $0x70] sm:$0xff]
  %v33 = vld [vmem:[%s1 + $0x78] sm:$0xff]
  %v34 = vld [vmem:[%s1 + $0x80] sm:$0xff]
  %v35 = vld [vmem:[%s1 + $0x88] sm:$0xff]
  %v36 = vld [vmem:[%s1 + $0x90] sm:$0xff]
  %v37 = vld [vmem:[%s1 + $0x98] sm:$0xff]
  %v38 = vld [vmem:[%s1 + $0xa0] sm:$0xff]
  %v39 = vld [vmem:[%s1 + $0xa8] sm:$0xff]
  %v40 = vld [vmem:[%s1 + $0xb0] sm:$0xff]
  %v41 = vld [vmem:[%s1 + $0xb8] sm:$0xff]
  %v42 = vld [vmem:[%s1 + $0xc0] sm:$0xff]
  %v43 = vld [vmem:[%s1 + $0xc8] sm:$0xff]
  %v44 = vld [vmem:[%s1 + $0xd0] sm:$0xff]
  %v45 = vld [vmem:[%s1 + $0xd8] sm:$0xff]
  %v46 = vld [vmem:[%s1 + $0xe0] sm:$0xff]
  %v47 = vld [vmem:[%s1 + $0xe8] sm:$0xff]
  %v48 = vld [vmem:[%s1 + $0xf0] sm:$0xff]
  %v49 = vld [vmem:[%s1 + $0xf8] sm:$0xff]
  %v50 = vld [vmem:[%s2] sm:$0xff]
  %v51 = vld [vmem:[%s2 + $0x8] sm:$0xff]
  %v52 = vld [vmem:[%s2 + $0x10] sm:$0xff]
  %v53 = vld [vmem:[%s2 + $0x18] sm:$0xff]
  %55 = vset.pattern.permute.xlu0 0
  %56 = vperm.xlu0 %55, %v50
  %v57 = vpop.permute.xlu0 %56
  %60 = vset.pattern.permute.xlu0 0
  %61 = vperm.xlu0 %60, %v51
  %v62 = vpop.permute.xlu0 %61
  %65 = vset.pattern.permute.xlu0 0
  %66 = vperm.xlu0 %65, %v52
  %v67 = vpop.permute.xlu0 %66
  %70 = vset.pattern.permute.xlu0 0
  %71 = vperm.xlu0 %70, %v53
  %v72 = vpop.permute.xlu0 %71
  %v78 = vunpack.c.l.b16 %v14
  %v79 = vunpack.c.h.b16 %v14
  %v80 = vunpack.c.l.b16 %v15
  %v81 = vunpack.c.h.b16 %v15
  %v82 = vunpack.c.l.b16 %v16
  %v83 = vunpack.c.h.b16 %v16
  %v84 = vunpack.c.l.b16 %v17
  %v85 = vunpack.c.h.b16 %v17
  %v86 = vpack.c.b16 %v80, %v78
  %v87 = vpack.c.b16 %v81, %v79
  %v88 = vpack.c.b16 %v84, %v82
  %v89 = vpack.c.b16 %v85, %v83
  %v126 = vunpack.c.l.b16 %v18
  %v127 = vunpack.c.h.b16 %v18
  %v128 = vunpack.c.l.b16 %v19
  %v129 = vunpack.c.h.b16 %v19
  %v130 = vunpack.c.l.b16 %v20
  %v131 = vunpack.c.h.b16 %v20
  %v132 = vunpack.c.l.b16 %v21
  %v133 = vunpack.c.h.b16 %v21
  %v134 = vunpack.c.l.b16 %v22
  %v135 = vunpack.c.h.b16 %v22
  %v136 = vunpack.c.l.b16 %v23
  %v137 = vunpack.c.h.b16 %v23
  %v138 = vunpack.c.l.b16 %v24
  %v139 = vunpack.c.h.b16 %v24
  %v140 = vunpack.c.l.b16 %v25
  %v141 = vunpack.c.h.b16 %v25
  %v142 = vunpack.c.l.b16 %v26
  %v143 = vunpack.c.h.b16 %v26
  %v144 = vunpack.c.l.b16 %v27
  %v145 = vunpack.c.h.b16 %v27
  %v146 = vunpack.c.l.b16 %v28
  %v147 = vunpack.c.h.b16 %v28
  %v148 = vunpack.c.l.b16 %v29
  %v149 = vunpack.c.h.b16 %v29
  %v150 = vunpack.c.l.b16 %v30
  %v151 = vunpack.c.h.b16 %v30
  %v152 = vunpack.c.l.b16 %v31
  %v153 = vunpack.c.h.b16 %v31
  %v154 = vunpack.c.l.b16 %v32
  %v155 = vunpack.c.h.b16 %v32
  %v156 = vunpack.c.l.b16 %v33
  %v157 = vunpack.c.h.b16 %v33
  %v158 = vunpack.c.l.b16 %v34
  %v159 = vunpack.c.h.b16 %v34
  %v160 = vunpack.c.l.b16 %v35
  %v161 = vunpack.c.h.b16 %v35
  %v162 = vunpack.c.l.b16 %v36
  %v163 = vunpack.c.h.b16 %v36
  %v164 = vunpack.c.l.b16 %v37
  %v165 = vunpack.c.h.b16 %v37
  %v166 = vunpack.c.l.b16 %v38
  %v167 = vunpack.c.h.b16 %v38
  %v168 = vunpack.c.l.b16 %v39
  %v169 = vunpack.c.h.b16 %v39
  %v170 = vunpack.c.l.b16 %v40
  %v171 = vunpack.c.h.b16 %v40
  %v172 = vunpack.c.l.b16 %v41
  %v173 = vunpack.c.h.b16 %v41
  %v174 = vunpack.c.l.b16 %v42
  %v175 = vunpack.c.h.b16 %v42
  %v176 = vunpack.c.l.b16 %v43
  %v177 = vunpack.c.h.b16 %v43
  %v178 = vunpack.c.l.b16 %v44
  %v179 = vunpack.c.h.b16 %v44
  %v180 = vunpack.c.l.b16 %v45
  %v181 = vunpack.c.h.b16 %v45
  %v182 = vunpack.c.l.b16 %v46
  %v183 = vunpack.c.h.b16 %v46
  %v184 = vunpack.c.l.b16 %v47
  %v185 = vunpack.c.h.b16 %v47
  %v186 = vunpack.c.l.b16 %v48
  %v187 = vunpack.c.h.b16 %v48
  %v188 = vunpack.c.l.b16 %v49
  %v189 = vunpack.c.h.b16 %v49
  %v190 = vpack.c.b16 %v128, %v126
  %v191 = vpack.c.b16 %v129, %v127
  %v192 = vpack.c.b16 %v132, %v130
  %v193 = vpack.c.b16 %v133, %v131
  %v194 = vpack.c.b16 %v136, %v134
  %v195 = vpack.c.b16 %v137, %v135
  %v196 = vpack.c.b16 %v140, %v138
  %v197 = vpack.c.b16 %v141, %v139
  %v198 = vpack.c.b16 %v144, %v142
  %v199 = vpack.c.b16 %v145, %v143
  %v200 = vpack.c.b16 %v148, %v146
  %v201 = vpack.c.b16 %v149, %v147
  %v202 = vpack.c.b16 %v152, %v150
  %v203 = vpack.c.b16 %v153, %v151
  %v204 = vpack.c.b16 %v156, %v154
  %v205 = vpack.c.b16 %v157, %v155
  %v206 = vpack.c.b16 %v160, %v158
  %v207 = vpack.c.b16 %v161, %v159
  %v208 = vpack.c.b16 %v164, %v162
  %v209 = vpack.c.b16 %v165, %v163
  %v210 = vpack.c.b16 %v168, %v166
  %v211 = vpack.c.b16 %v169, %v167
  %v212 = vpack.c.b16 %v172, %v170
  %v213 = vpack.c.b16 %v173, %v171
  %v214 = vpack.c.b16 %v176, %v174
  %v215 = vpack.c.b16 %v177, %v175
  %v216 = vpack.c.b16 %v180, %v178
  %v217 = vpack.c.b16 %v181, %v179
  %v218 = vpack.c.b16 %v184, %v182
  %v219 = vpack.c.b16 %v185, %v183
  %v220 = vpack.c.b16 %v188, %v186
  %v221 = vpack.c.b16 %v189, %v187
  %254 = vmatpush.bf16.msra.mxu0 %v204
  %255 = vmatpush.bf16.msra.mxu0 %v202
  %256 = vmatpush.bf16.msra.mxu0 %v200
  %257 = vmatpush.bf16.msra.mxu0 %v198
  %258 = vmatpush.bf16.msra.mxu0 %v196
  %259 = vmatpush.bf16.msra.mxu0 %v194
  %260 = vmatpush.bf16.msra.mxu0 %v192
  %261 = vmatpush.bf16.msra.mxu0 %v190
  %262 = vmatmul.bf16.gmra.mxu0 %v86
  %v263 = vpop.f32.mrf.mxu0
  %v264 = vadd.f32 %v57, %v263
  %v265 = vpop.f32.mrf.mxu0
  %v266 = vadd.f32 %v62, %v265
  %267 = vmatmul.bf16.gmra.mxu0 %v88
  %v268 = vpop.f32.mrf.mxu0
  %v269 = vadd.f32 %v67, %v268
  %v270 = vpop.f32.mrf.mxu0
  %v271 = vadd.f32 %v72, %v270
  %272 = vdwg.mxu0
  %273 = vmatpush.bf16.msra.mxu0 %v220
  %274 = vmatpush.bf16.msra.mxu0 %v218
  %275 = vmatpush.bf16.msra.mxu0 %v216
  %276 = vmatpush.bf16.msra.mxu0 %v214
  %277 = vmatpush.bf16.msra.mxu0 %v212
  %278 = vmatpush.bf16.msra.mxu0 %v210
  %279 = vmatpush.bf16.msra.mxu0 %v208
  %280 = vmatpush.bf16.msra.mxu0 %v206
  %281 = vmatmul.bf16.gmra.mxu0 %v87
  %v282 = vpop.f32.mrf.mxu0
  %v283 = vadd.f32 %v264, %v282
  %v284 = vpop.f32.mrf.mxu0
  %v285 = vadd.f32 %v266, %v284
  %286 = vmatmul.bf16.gmra.mxu0 %v89
  %v287 = vpop.f32.mrf.mxu0
  %v288 = vadd.f32 %v269, %v287
  %v289 = vpop.f32.mrf.mxu0
  %v290 = vadd.f32 %v271, %v289
  %291 = vdwg.mxu0
  %292 = vmatpush.bf16.msra.mxu0 %v205
  %293 = vmatpush.bf16.msra.mxu0 %v203
  %294 = vmatpush.bf16.msra.mxu0 %v201
  %295 = vmatpush.bf16.msra.mxu0 %v199
  %296 = vmatpush.bf16.msra.mxu0 %v197
  %297 = vmatpush.bf16.msra.mxu0 %v195
  %298 = vmatpush.bf16.msra.mxu0 %v193
  %299 = vmatpush.bf16.msra.mxu0 %v191
  %300 = vmatmul.bf16.gmra.mxu0 %v86
  %v301 = vpop.f32.mrf.mxu0
  %v302 = vadd.f32 %v57, %v301
  %v303 = vpop.f32.mrf.mxu0
  %v304 = vadd.f32 %v62, %v303
  %305 = vmatmul.bf16.gmra.mxu0 %v88
  %v306 = vpop.f32.mrf.mxu0
  %v307 = vadd.f32 %v67, %v306
  %v308 = vpop.f32.mrf.mxu0
  %v309 = vadd.f32 %v72, %v308
  %310 = vdwg.mxu0
  %311 = vmatpush.bf16.msra.mxu0 %v221
  %312 = vmatpush.bf16.msra.mxu0 %v219
  %313 = vmatpush.bf16.msra.mxu0 %v217
  %314 = vmatpush.bf16.msra.mxu0 %v215
  %315 = vmatpush.bf16.msra.mxu0 %v213
  %316 = vmatpush.bf16.msra.mxu0 %v211
  %317 = vmatpush.bf16.msra.mxu0 %v209
  %318 = vmatpush.bf16.msra.mxu0 %v207
  %319 = vmatmul.bf16.gmra.mxu0 %v87
  %v320 = vpop.f32.mrf.mxu0
  %v321 = vadd.f32 %v302, %v320
  %v322 = vpop.f32.mrf.mxu0
  %v323 = vadd.f32 %v304, %v322
  %324 = vmatmul.bf16.gmra.mxu0 %v89
  %v325 = vpop.f32.mrf.mxu0
  %v326 = vadd.f32 %v307, %v325
  %v327 = vpop.f32.mrf.mxu0
  %v328 = vadd.f32 %v309, %v327
  %329 = vdwg.mxu0
  %v330 = vmax.f32 %v283, 0.0
  %v331 = vmax.f32 %v321, 0.0
  %v332 = vmax.f32 %v285, 0.0
  %v333 = vmax.f32 %v323, 0.0
  %v334 = vmax.f32 %v288, 0.0
  %v335 = vmax.f32 %v326, 0.0
  %v336 = vmax.f32 %v290, 0.0
  %v337 = vmax.f32 %v328, 0.0
  %v338 = vpack.c.bf16 %v331, %v330
  %v339 = vpack.c.bf16 %v333, %v332
  %v340 = vpack.c.bf16 %v335, %v334
  %v341 = vpack.c.bf16 %v337, %v336
  %vm342 = vcmask 1043456
  %vm343 = vcmask 277508
  %vm344 = vmor %vm343, %vm342
  %345 = vst.msk [vmem:[%s3] sm:$0xff] %vm344, %v338
  %346 = vst.msk [vmem:[%s3 + $0x8] sm:$0xff] %vm344, %v339
  %347 = vst.msk [vmem:[%s3 + $0x10] sm:$0xff] %vm344, %v340
  %348 = vst.msk [vmem:[%s3 + $0x18] sm:$0xff] %vm344, %v341
  // Predicated region
  $region14: #{dqn_forward.4} parent=0 // pred_check
    _
  $region15: #{dqn_forward.4} parent=0 // pred_check_branch
    %350 = sbr.rel (0) target = $region17
  $region16: #{dqn_forward.4} parent=0 // pred_region
    _
  $region17: #{dqn_forward.4} parent=0 // pred_fallthru
    _
  // Predicated region
  $region18: #{dqn_forward.4} parent=0 // pred_check
    _
  $region19: #{dqn_forward.4} parent=0 // pred_check_branch
    %352 = sbr.rel (0) target = $region21
  $region20: #{dqn_forward.4} parent=0 // pred_region
    _
  $region21: #{dqn_forward.4} parent=0 // pred_fallthru
    _

// kernel: dqn_forward.5
$region0: #{dqn_forward.5}
  #allocation0 [shape = 'u32[]', space=smem, size = 0x4, offset = 0x4, fixed_abs, tag = 'smem constant byte address 0x4 - core index']
  #allocation1 [shape = 'u32[72,128]{1,0:T(1,128)}', space=vmem, size = 0x9000, scoped, tag = 'internal scratch']
  %s0 = inlined_call_operand.vmem [shape: bf16[2,2592], index: 0, kind: input, shape index: {}]
  %s1 = inlined_call_operand.vmem [shape: bf16[2592,256], index: 1, kind: input, shape index: {}]
  %s2 = inlined_call_operand.vmem [shape: f32[1,256], index: 2, kind: input, shape index: {}]
  %s3 = inlined_call_operand.vmem [shape: bf16[256,64], index: 3, kind: input, shape index: {}]
  %s4 = inlined_call_operand.vmem [shape: f32[1,64], index: 4, kind: input, shape index: {}]
  %s5 = inlined_call_operand.hbm [shape: f32[2,64], index: 5, kind: output, shape index: {}]
  %s6 = sld [smem:[#allocation0]]
  $region30: #{dqn_forward.5} parent=0
    _
  %s8 = ssub.s32 1, %s6
  %s9 = scalar_select 0, %s8, %s6
  $region1: #{dqn_forward.5} parent=0
    #allocation2 [shape = 'u8[1024]{0}', space=vmem, size = 0x400, scoped, tag = 'output window, operand 0, single buffered']
    #allocation3 [shape = 's32[1]{0}', space=sflag, size = 0x4, scoped, tag = 'scoped memory for dqn_forward.5']
    %10 = vsyncpa [#allocation3], 0
    // Predicated region
    $region2: #{dqn_forward.5} parent=1 // pred_check
      _
    $region3: #{dqn_forward.5} parent=1 // pred_check_branch
      %12 = sbr.rel (0) target = $region5
    $region4: #{dqn_forward.5} parent=1 // pred_region
      _
    $region5: #{dqn_forward.5} parent=1 // pred_fallthru
      _
    // Predicated region
    $region6: #{dqn_forward.5} parent=1 // pred_check
      _
    $region7: #{dqn_forward.5} parent=1 // pred_check_branch
      %14 = sbr.rel (0) target = $region9
    $region8: #{dqn_forward.5} parent=1 // pred_region
      _
    $region9: #{dqn_forward.5} parent=1 // pred_fallthru
      _
    // Predicated region
    $region10: #{dqn_forward.5} parent=1 // pred_check
      _
    $region11: #{dqn_forward.5} parent=1 // pred_check_branch
      %16 = sbr.rel (0) target = $region13
    $region12: #{dqn_forward.5} parent=1 // pred_region
      _
    $region13: #{dqn_forward.5} parent=1 // pred_fallthru
      _
    // Predicated region
    $region14: #{dqn_forward.5} parent=1 // pred_check
      _
    $region15: #{dqn_forward.5} parent=1 // pred_check_branch
      %18 = sbr.rel (0) target = $region17
    $region16: #{dqn_forward.5} parent=1 // pred_region
      _
    $region17: #{dqn_forward.5} parent=1 // pred_fallthru
      _
    // Predicated region
    $region18: #{dqn_forward.5} parent=1 // pred_check
      _
    $region19: #{dqn_forward.5} parent=1 // pred_check_branch
      %20 = sbr.rel (0) target = $region21
    $region20: #{dqn_forward.5} parent=1 // pred_region
      _
    $region21: #{dqn_forward.5} parent=1 // pred_fallthru
      _
    %v22 = vld [vmem:[%s0] sm:$0xff]
    %v23 = vld [vmem:[%s0 + $0x8] sm:$0xff]
    %v24 = vld [vmem:[%s0 + $0x10] sm:$0x1f]
    %v25 = vld [vmem:[%s1] sm:$0xff]
    %v26 = vld [vmem:[%s1 + $0x8] sm:$0xff]
    %v27 = vld [vmem:[%s1 + $0x10] sm:$0xff]
    %v28 = vld [vmem:[%s1 + $0x18] sm:$0xff]
    %v29 = vld [vmem:[%s1 + $0x20] sm:$0xff]
    %v30 = vld [vmem:[%s1 + $0x28] sm:$0xff]
    %v31 = vld [vmem:[%s1 + $0x30] sm:$0xff]
    %v32 = vld [vmem:[%s1 + $0x38] sm:$0xff]
    %v33 = vld [vmem:[%s1 + $0x40] sm:$0xff]
    %v34 = vld [vmem:[%s1 + $0x48] sm:$0xff]
    %v35 = vld [vmem:[%s1 + $0x50] sm:$0xff]
    %v36 = vld [vmem:[%s1 + $0x58] sm:$0xff]
    %v37 = vld [vmem:[%s1 + $0x60] sm:$0xff]
    %v38 = vld [vmem:[%s1 + $0x68] sm:$0xff]
    %v39 = vld [vmem:[%s1 + $0x70] sm:$0xff]
    %v40 = vld [vmem:[%s1 + $0x78] sm:$0xff]
    %v41 = vld [vmem:[%s1 + $0x80] sm:$0xff]
    %v42 = vld [vmem:[%s1 + $0x88] sm:$0xff]
    %v43 = vld [vmem:[%s1 + $0x90] sm:$0xff]
    %v44 = vld [vmem:[%s1 + $0x98] sm:$0xff]
    %v45 = vld [vmem:[%s1 + $0xa0] sm:$0xff]
    %v46 = vld [vmem:[%s1 + $0xa8] sm:$0xff]
    %v47 = vld [vmem:[%s1 + $0xb0] sm:$0xff]
    %v48 = vld [vmem:[%s1 + $0xb8] sm:$0xff]
    %v49 = vld [vmem:[%s1 + $0xc0] sm:$0xff]
    %v50 = vld [vmem:[%s1 + $0xc8] sm:$0xff]
    %v51 = vld [vmem:[%s1 + $0xd0] sm:$0xff]
    %v52 = vld [vmem:[%s1 + $0xd8] sm:$0xff]
    %v53 = vld [vmem:[%s1 + $0xe0] sm:$0xff]
    %v54 = vld [vmem:[%s1 + $0xe8] sm:$0xff]
    %v55 = vld [vmem:[%s1 + $0xf0] sm:$0xff]
    %v56 = vld [vmem:[%s1 + $0xf8] sm:$0xff]
    %v57 = vld [vmem:[%s1 + $0x100] sm:$0xff]
    %v58 = vld [vmem:[%s1 + $0x108] sm:$0xff]
    %v59 = vld [vmem:[%s1 + $0x110] sm:$0xff]
    %v60 = vld [vmem:[%s1 + $0x118] sm:$0xff]
    %v61 = vld [vmem:[%s1 + $0x120] sm:$0xff]
    %v62 = vld [vmem:[%s1 + $0x128] sm:$0xff]
    %v63 = vld [vmem:[%s1 + $0x130] sm:$0xff]
    %v64 = vld [vmem:[%s1 + $0x138] sm:$0xff]
    %v65 = vld [vmem:[%s1 + $0x140] sm:$0xff]
    %v66 = vld [vmem:[%s1 + $0x148] sm:$0xff]
    %v67 = vld [vmem:[%s1 + $0x150] sm:$0xff]
    %v68 = vld [vmem:[%s1 + $0x158] sm:$0xff]
    %v69 = vld [vmem:[%s1 + $0x160] sm:$0xff]
    %v70 = vld [vmem:[%s1 + $0x168] sm:$0xff]
    %v71 = vld [vmem:[%s1 + $0x170] sm:$0xff]
    %v72 = vld [vmem:[%s1 + $0x178] sm:$0xff]
    %v73 = vld [vmem:[%s1 + $0x180] sm:$0xff]
    %v74 = vld [vmem:[%s1 + $0x188] sm:$0xff]
    %v75 = vld [vmem:[%s1 + $0x190] sm:$0xff]
    %v76 = vld [vmem:[%s1 + $0x198] sm:$0xff]
    %v77 = vld [vmem:[%s1 + $0x1a0] sm:$0xff]
    %v78 = vld [vmem:[%s1 + $0x1a8] sm:$0xff]
    %v79 = vld [vmem:[%s1 + $0x1b0] sm:$0xff]
    %v80 = vld [vmem:[%s1 + $0x1b8] sm:$0xff]
    %v81 = vld [vmem:[%s1 + $0x1c0] sm:$0xff]
    %v82 = vld [vmem:[%s1 + $0x1c8] sm:$0xff]
    %v83 = vld [vmem:[%s1 + $0x1d0] sm:$0xff]
    %v84 = vld [vmem:[%s1 + $0x1d8] sm:$0xff]
    %v85 = vld [vmem:[%s1 + $0x1e0] sm:$0xff]
    %v86 = vld [vmem:[%s1 + $0x1e8] sm:$0xff]
    %v87 = vld [vmem:[%s1 + $0x1f0] sm:$0xff]
    %v88 = vld [vmem:[%s1 + $0x1f8] sm:$0xff]
    %v89 = vld [vmem:[%s1 + $0x200] sm:$0xff]
    %v90 = vld [vmem:[%s1 + $0x208] sm:$0xff]
    %v91 = vld [vmem:[%s1 + $0x210] sm:$0xff]
    %v92 = vld [vmem:[%s1 + $0x218] sm:$0xff]
    %v93 = vld [vmem:[%s1 + $0x220] sm:$0xff]
    %v94 = vld [vmem:[%s1 + $0x228] sm:$0xff]
    %v95 = vld [vmem:[%s1 + $0x230] sm:$0xff]
    %v96 = vld [vmem:[%s1 + $0x238] sm:$0xff]
    %v97 = vld [vmem:[%s1 + $0x240] sm:$0xff]
    %v98 = vld [vmem:[%s1 + $0x248] sm:$0xff]
    %v99 = vld [vmem:[%s1 + $0x250] sm:$0xff]
    %v100 = vld [vmem:[%s1 + $0x258] sm:$0xff]
    %v101 = vld [vmem:[%s1 + $0x260] sm:$0xff]
    %v102 = vld [vmem:[%s1 + $0x268] sm:$0xff]
    %v103 = vld [vmem:[%s1 + $0x270] sm:$0xff]
    %v104 = vld [vmem:[%s1 + $0x278] sm:$0xff]
    %v105 = vld [vmem:[%s1 + $0x280] sm:$0xff]
    %v106 = vld [vmem:[%s1 + $0x288] sm:$0xff]
    %v107 = vld [vmem:[%s1 + $0x290] sm:$0xff]
    %v108 = vld [vmem:[%s1 + $0x298] sm:$0xff]
    %v109 = vld [vmem:[%s1 + $0x2a0] sm:$0xff]
    %v110 = vld [vmem:[%s1 + $0x2a8] sm:$0xff]
    %v111 = vld [vmem:[%s1 + $0x2b0] sm:$0xff]
    %v112 = vld [vmem:[%s1 + $0x2b8] sm:$0xff]
    %v113 = vld [vmem:[%s1 + $0x2c0] sm:$0xff]
    %v114 = vld [vmem:[%s1 + $0x2c8] sm:$0xff]
    %v115 = vld [vmem:[%s1 + $0x2d0] sm:$0xff]
    %v116 = vld [vmem:[%s1 + $0x2d8] sm:$0xff]
    %v117 = vld [vmem:[%s1 + $0x2e0] sm:$0xff]
    %v118 = vld [vmem:[%s1 + $0x2e8] sm:$0xff]
    %v119 = vld [vmem:[%s1 + $0x2f0] sm:$0xff]
    %v120 = vld [vmem:[%s1 + $0x2f8] sm:$0xff]
    %v121 = vld [vmem:[%s1 + $0x300] sm:$0xff]
    %v122 = vld [vmem:[%s1 + $0x308] sm:$0xff]
    %v123 = vld [vmem:[%s1 + $0x310] sm:$0xff]
    %v124 = vld [vmem:[%s1 + $0x318] sm:$0xff]
    %v125 = vld [vmem:[%s1 + $0x320] sm:$0xff]
    %v126 = vld [vmem:[%s1 + $0x328] sm:$0xff]
    %v127 = vld [vmem:[%s1 + $0x330] sm:$0xff]
    %v128 = vld [vmem:[%s1 + $0x338] sm:$0xff]
    %v129 = vld [vmem:[%s1 + $0x340] sm:$0xff]
    %v130 = vld [vmem:[%s1 + $0x348] sm:$0xff]
    %v131 = vld [vmem:[%s1 + $0x350] sm:$0xff]
    %v132 = vld [vmem:[%s1 + $0x358] sm:$0xff]
    %v133 = vld [vmem:[%s1 + $0x360] sm:$0xff]
    %v134 = vld [vmem:[%s1 + $0x368] sm:$0xff]
    %v135 = vld [vmem:[%s1 + $0x370] sm:$0xff]
    %v136 = vld [vmem:[%s1 + $0x378] sm:$0xff]
    %v137 = vld [vmem:[%s1 + $0x380] sm:$0xff]
    %v138 = vld [vmem:[%s1 + $0x388] sm:$0xff]
    %v139 = vld [vmem:[%s1 + $0x390] sm:$0xff]
    %v140 = vld [vmem:[%s1 + $0x398] sm:$0xff]
    %v141 = vld [vmem:[%s1 + $0x3a0] sm:$0xff]
    %v142 = vld [vmem:[%s1 + $0x3a8] sm:$0xff]
    %v143 = vld [vmem:[%s1 + $0x3b0] sm:$0xff]
    %v144 = vld [vmem:[%s1 + $0x3b8] sm:$0xff]
    %v145 = vld [vmem:[%s1 + $0x3c0] sm:$0xff]
    %v146 = vld [vmem:[%s1 + $0x3c8] sm:$0xff]
    %v147 = vld [vmem:[%s1 + $0x3d0] sm:$0xff]
    %v148 = vld [vmem:[%s1 + $0x3d8] sm:$0xff]
    %v149 = vld [vmem:[%s1 + $0x3e0] sm:$0xff]
    %v150 = vld [vmem:[%s1 + $0x3e8] sm:$0xff]
    %v151 = vld [vmem:[%s1 + $0x3f0] sm:$0xff]
    %v152 = vld [vmem:[%s1 + $0x3f8] sm:$0xff]
    %v153 = vld [vmem:[%s1 + $0x400] sm:$0xff]
    %v154 = vld [vmem:[%s1 + $0x408] sm:$0xff]
    %v155 = vld [vmem:[%s1 + $0x410] sm:$0xff]
    %v156 = vld [vmem:[%s1 + $0x418] sm:$0xff]
    %v157 = vld [vmem:[%s1 + $0x420] sm:$0xff]
    %v158 = vld [vmem:[%s1 + $0x428] sm:$0xff]
    %v159 = vld [vmem:[%s1 + $0x430] sm:$0xff]
    %v160 = vld [vmem:[%s1 + $0x438] sm:$0xff]
    %v161 = vld [vmem:[%s1 + $0x440] sm:$0xff]
    %v162 = vld [vmem:[%s1 + $0x448] sm:$0xff]
    %v163 = vld [vmem:[%s1 + $0x450] sm:$0xff]
    %v164 = vld [vmem:[%s1 + $0x458] sm:$0xff]
    %v165 = vld [vmem:[%s1 + $0x460] sm:$0xff]
    %v166 = vld [vmem:[%s1 + $0x468] sm:$0xff]
    %v167 = vld [vmem:[%s1 + $0x470] sm:$0xff]
    %v168 = vld [vmem:[%s1 + $0x478] sm:$0xff]
    %v169 = vld [vmem:[%s1 + $0x480] sm:$0xff]
    %v170 = vld [vmem:[%s1 + $0x488] sm:$0xff]
    %v171 = vld [vmem:[%s1 + $0x490] sm:$0xff]
    %v172 = vld [vmem:[%s1 + $0x498] sm:$0xff]
    %v173 = vld [vmem:[%s1 + $0x4a0] sm:$0xff]
    %v174 = vld [vmem:[%s1 + $0x4a8] sm:$0xff]
    %v175 = vld [vmem:[%s1 + $0x4b0] sm:$0xff]
    %v176 = vld [vmem:[%s1 + $0x4b8] sm:$0xff]
    %v177 = vld [vmem:[%s1 + $0x4c0] sm:$0xff]
    %v178 = vld [vmem:[%s1 + $0x4c8] sm:$0xff]
    %v179 = vld [vmem:[%s1 + $0x4d0] sm:$0xff]
    %v180 = vld [vmem:[%s1 + $0x4d8] sm:$0xff]
    %v181 = vld [vmem:[%s1 + $0x4e0] sm:$0xff]
    %v182 = vld [vmem:[%s1 + $0x4e8] sm:$0xff]
    %v183 = vld [vmem:[%s1 + $0x4f0] sm:$0xff]
    %v184 = vld [vmem:[%s1 + $0x4f8] sm:$0xff]
    %v185 = vld [vmem:[%s1 + $0x500] sm:$0xff]
    %v186 = vld [vmem:[%s1 + $0x508] sm:$0xff]
    %v187 = vld [vmem:[%s1 + $0x510] sm:$0xff]
    %v188 = vld [vmem:[%s1 + $0x518] sm:$0xff]
    %v189 = vld [vmem:[%s1 + $0x520] sm:$0xff]
    %v190 = vld [vmem:[%s1 + $0x528] sm:$0xff]
    %v191 = vld [vmem:[%s1 + $0x530] sm:$0xff]
    %v192 = vld [vmem:[%s1 + $0x538] sm:$0xff]
    %v193 = vld [vmem:[%s1 + $0x540] sm:$0xff]
    %v194 = vld [vmem:[%s1 + $0x548] sm:$0xff]
    %v195 = vld [vmem:[%s1 + $0x550] sm:$0xff]
    %v196 = vld [vmem:[%s1 + $0x558] sm:$0xff]
    %v197 = vld [vmem:[%s1 + $0x560] sm:$0xff]
    %v198 = vld [vmem:[%s1 + $0x568] sm:$0xff]
    %v199 = vld [vmem:[%s1 + $0x570] sm:$0xff]
    %v200 = vld [vmem:[%s1 + $0x578] sm:$0xff]
    %v201 = vld [vmem:[%s1 + $0x580] sm:$0xff]
    %v202 = vld [vmem:[%s1 + $0x588] sm:$0xff]
    %v203 = vld [vmem:[%s1 + $0x590] sm:$0xff]
    %v204 = vld [vmem:[%s1 + $0x598] sm:$0xff]
    %v205 = vld [vmem:[%s1 + $0x5a0] sm:$0xff]
    %v206 = vld [vmem:[%s1 + $0x5a8] sm:$0xff]
    %v207 = vld [vmem:[%s1 + $0x5b0] sm:$0xff]
    %v208 = vld [vmem:[%s1 + $0x5b8] sm:$0xff]
    %v209 = vld [vmem:[%s1 + $0x5c0] sm:$0xff]
    %v210 = vld [vmem:[%s1 + $0x5c8] sm:$0xff]
    %v211 = vld [vmem:[%s1 + $0x5d0] sm:$0xff]
    %v212 = vld [vmem:[%s1 + $0x5d8] sm:$0xff]
    %v213 = vld [vmem:[%s1 + $0x5e0] sm:$0xff]
    %v214 = vld [vmem:[%s1 + $0x5e8] sm:$0xff]
    %v215 = vld [vmem:[%s1 + $0x5f0] sm:$0xff]
    %v216 = vld [vmem:[%s1 + $0x5f8] sm:$0xff]
    %v217 = vld [vmem:[%s1 + $0x600] sm:$0xff]
    %v218 = vld [vmem:[%s1 + $0x608] sm:$0xff]
    %v219 = vld [vmem:[%s1 + $0x610] sm:$0xff]
    %v220 = vld [vmem:[%s1 + $0x618] sm:$0xff]
    %v221 = vld [vmem:[%s1 + $0x620] sm:$0xff]
    %v222 = vld [vmem:[%s1 + $0x628] sm:$0xff]
    %v223 = vld [vmem:[%s1 + $0x630] sm:$0xff]
    %v224 = vld [vmem:[%s1 + $0x638] sm:$0xff]
    %v225 = vld [vmem:[%s1 + $0x640] sm:$0xff]
    %v226 = vld [vmem:[%s1 + $0x648] sm:$0xff]
    %v227 = vld [vmem:[%s1 + $0x650] sm:$0xff]
    %v228 = vld [vmem:[%s1 + $0x658] sm:$0xff]
    %v229 = vld [vmem:[%s1 + $0x660] sm:$0xff]
    %v230 = vld [vmem:[%s1 + $0x668] sm:$0xff]
    %v231 = vld [vmem:[%s1 + $0x670] sm:$0xff]
    %v232 = vld [vmem:[%s1 + $0x678] sm:$0xff]
    %v233 = vld [vmem:[%s1 + $0x680] sm:$0xff]
    %v234 = vld [vmem:[%s1 + $0x688] sm:$0xff]
    %v235 = vld [vmem:[%s1 + $0x690] sm:$0xff]
    %v236 = vld [vmem:[%s1 + $0x698] sm:$0xff]
    %v237 = vld [vmem:[%s1 + $0x6a0] sm:$0xff]
    %v238 = vld [vmem:[%s1 + $0x6a8] sm:$0xff]
    %v239 = vld [vmem:[%s1 + $0x6b0] sm:$0xff]
    %v240 = vld [vmem:[%s1 + $0x6b8] sm:$0xff]
    %v241 = vld [vmem:[%s1 + $0x6c0] sm:$0xff]
    %v242 = vld [vmem:[%s1 + $0x6c8] sm:$0xff]
    %v243 = vld [vmem:[%s1 + $0x6d0] sm:$0xff]
    %v244 = vld [vmem:[%s1 + $0x6d8] sm:$0xff]
    %v245 = vld [vmem:[%s1 + $0x6e0] sm:$0xff]
    %v246 = vld [vmem:[%s1 + $0x6e8] sm:$0xff]
    %v247 = vld [vmem:[%s1 + $0x6f0] sm:$0xff]
    %v248 = vld [vmem:[%s1 + $0x6f8] sm:$0xff]
    %v249 = vld [vmem:[%s1 + $0x700] sm:$0xff]
    %v250 = vld [vmem:[%s1 + $0x708] sm:$0xff]
    %v251 = vld [vmem:[%s1 + $0x710] sm:$0xff]
    %v252 = vld [vmem:[%s1 + $0x718] sm:$0xff]
    %v253 = vld [vmem:[%s1 + $0x720] sm:$0xff]
    %v254 = vld [vmem:[%s1 + $0x728] sm:$0xff]
    %v255 = vld [vmem:[%s1 + $0x730] sm:$0xff]
    %v256 = vld [vmem:[%s1 + $0x738] sm:$0xff]
    %v257 = vld [vmem:[%s1 + $0x740] sm:$0xff]
    %v258 = vld [vmem:[%s1 + $0x748] sm:$0xff]
    %v259 = vld [vmem:[%s1 + $0x750] sm:$0xff]
    %v260 = vld [vmem:[%s1 + $0x758] sm:$0xff]
    %v261 = vld [vmem:[%s1 + $0x760] sm:$0xff]
    %v262 = vld [vmem:[%s1 + $0x768] sm:$0xff]
    %v263 = vld [vmem:[%s1 + $0x770] sm:$0xff]
    %v264 = vld [vmem:[%s1 + $0x778] sm:$0xff]
    %v265 = vld [vmem:[%s1 + $0x780] sm:$0xff]
    %v266 = vld [vmem:[%s1 + $0x788] sm:$0xff]
    %v267 = vld [vmem:[%s1 + $0x790] sm:$0xff]
    %v268 = vld [vmem:[%s1 + $0x798] sm:$0xff]
    %v269 = vld [vmem:[%s1 + $0x7a0] sm:$0xff]
    %v270 = vld [vmem:[%s1 + $0x7a8] sm:$0xff]
    %v271 = vld [vmem:[%s1 + $0x7b0] sm:$0xff]
    %v272 = vld [vmem:[%s1 + $0x7b8] sm:$0xff]
    %v273 = vld [vmem:[%s1 + $0x7c0] sm:$0xff]
    %v274 = vld [vmem:[%s1 + $0x7c8] sm:$0xff]
    %v275 = vld [vmem:[%s1 + $0x7d0] sm:$0xff]
    %v276 = vld [vmem:[%s1 + $0x7d8] sm:$0xff]
    %v277 = vld [vmem:[%s1 + $0x7e0] sm:$0xff]
    %v278 = vld [vmem:[%s1 + $0x7e8] sm:$0xff]
    %v279 = vld [vmem:[%s1 + $0x7f0] sm:$0xff]
    %v280 = vld [vmem:[%s1 + $0x7f8] sm:$0xff]
    %v281 = vld [vmem:[%s1 + $0x800] sm:$0xff]
    %v282 = vld [vmem:[%s1 + $0x808] sm:$0xff]
    %v283 = vld [vmem:[%s1 + $0x810] sm:$0xff]
    %v284 = vld [vmem:[%s1 + $0x818] sm:$0xff]
    %v285 = vld [vmem:[%s1 + $0x820] sm:$0xff]
    %v286 = vld [vmem:[%s1 + $0x828] sm:$0xff]
    %v287 = vld [vmem:[%s1 + $0x830] sm:$0xff]
    %v288 = vld [vmem:[%s1 + $0x838] sm:$0xff]
    %v289 = vld [vmem:[%s1 + $0x840] sm:$0xff]
    %v290 = vld [vmem:[%s1 + $0x848] sm:$0xff]
    %v291 = vld [vmem:[%s1 + $0x850] sm:$0xff]
    %v292 = vld [vmem:[%s1 + $0x858] sm:$0xff]
    %v293 = vld [vmem:[%s1 + $0x860] sm:$0xff]
    %v294 = vld [vmem:[%s1 + $0x868] sm:$0xff]
    %v295 = vld [vmem:[%s1 + $0x870] sm:$0xff]
    %v296 = vld [vmem:[%s1 + $0x878] sm:$0xff]
    %v297 = vld [vmem:[%s1 + $0x880] sm:$0xff]
    %v298 = vld [vmem:[%s1 + $0x888] sm:$0xff]
    %v299 = vld [vmem:[%s1 + $0x890] sm:$0xff]
    %v300 = vld [vmem:[%s1 + $0x898] sm:$0xff]
    %v301 = vld [vmem:[%s1 + $0x8a0] sm:$0xff]
    %v302 = vld [vmem:[%s1 + $0x8a8] sm:$0xff]
    %v303 = vld [vmem:[%s1 + $0x8b0] sm:$0xff]
    %v304 = vld [vmem:[%s1 + $0x8b8] sm:$0xff]
    %v305 = vld [vmem:[%s1 + $0x8c0] sm:$0xff]
    %v306 = vld [vmem:[%s1 + $0x8c8] sm:$0xff]
    %v307 = vld [vmem:[%s1 + $0x8d0] sm:$0xff]
    %v308 = vld [vmem:[%s1 + $0x8d8] sm:$0xff]
    %v309 = vld [vmem:[%s1 + $0x8e0] sm:$0xff]
    %v310 = vld [vmem:[%s1 + $0x8e8] sm:$0xff]
    %v311 = vld [vmem:[%s1 + $0x8f0] sm:$0xff]
    %v312 = vld [vmem:[%s1 + $0x8f8] sm:$0xff]
    %v313 = vld [vmem:[%s1 + $0x900] sm:$0xff]
    %v314 = vld [vmem:[%s1 + $0x908] sm:$0xff]
    %v315 = vld [vmem:[%s1 + $0x910] sm:$0xff]
    %v316 = vld [vmem:[%s1 + $0x918] sm:$0xff]
    %v317 = vld [vmem:[%s1 + $0x920] sm:$0xff]
    %v318 = vld [vmem:[%s1 + $0x928] sm:$0xff]
    %v319 = vld [vmem:[%s1 + $0x930] sm:$0xff]
    %v320 = vld [vmem:[%s1 + $0x938] sm:$0xff]
    %v321 = vld [vmem:[%s1 + $0x940] sm:$0xff]
    %v322 = vld [vmem:[%s1 + $0x948] sm:$0xff]
    %v323 = vld [vmem:[%s1 + $0x950] sm:$0xff]
    %v324 = vld [vmem:[%s1 + $0x958] sm:$0xff]
    %v325 = vld [vmem:[%s1 + $0x960] sm:$0xff]
    %v326 = vld [vmem:[%s1 + $0x968] sm:$0xff]
    %v327 = vld [vmem:[%s1 + $0x970] sm:$0xff]
    %v328 = vld [vmem:[%s1 + $0x978] sm:$0xff]
    %v329 = vld [vmem:[%s1 + $0x980] sm:$0xff]
    %v330 = vld [vmem:[%s1 + $0x988] sm:$0xff]
    %v331 = vld [vmem:[%s1 + $0x990] sm:$0xff]
    %v332 = vld [vmem:[%s1 + $0x998] sm:$0xff]
    %v333 = vld [vmem:[%s1 + $0x9a0] sm:$0xff]
    %v334 = vld [vmem:[%s1 + $0x9a8] sm:$0xff]
    %v335 = vld [vmem:[%s1 + $0x9b0] sm:$0xff]
    %v336 = vld [vmem:[%s1 + $0x9b8] sm:$0xff]
    %v337 = vld [vmem:[%s1 + $0x9c0] sm:$0xff]
    %v338 = vld [vmem:[%s1 + $0x9c8] sm:$0xff]
    %v339 = vld [vmem:[%s1 + $0x9d0] sm:$0xff]
    %v340 = vld [vmem:[%s1 + $0x9d8] sm:$0xff]
    %v341 = vld [vmem:[%s1 + $0x9e0] sm:$0xff]
    %v342 = vld [vmem:[%s1 + $0x9e8] sm:$0xff]
    %v343 = vld [vmem:[%s1 + $0x9f0] sm:$0xff]
    %v344 = vld [vmem:[%s1 + $0x9f8] sm:$0xff]
    %v345 = vld [vmem:[%s1 + $0xa00] sm:$0xff]
    %v346 = vld [vmem:[%s1 + $0xa08] sm:$0xff]
    %v347 = vld [vmem:[%s1 + $0xa10] sm:$0xff]
    %v348 = vld [vmem:[%s1 + $0xa18] sm:$0xff]
    %v349 = vld [vmem:[%s2] sm:$0x3]
    %v351 = vperm.slane %v349, 0
    %v352 = vperm.slane %v349, 1
    %356 = vst [vmem:[#allocation1] ss:$9 sm:$0xff] %v22
    %v357 = vld [vmem:[#allocation1] sm:$0xff]
    %v358 = vld [vmem:[#allocation1 + $0x9] sm:$0xff]
    %v359 = vld [vmem:[#allocation1 + $0x12] sm:$0xff]
    %v360 = vld [vmem:[#allocation1 + $0x1b] sm:$0xff]
    %v361 = vld [vmem:[#allocation1 + $0x24] sm:$0xff]
    %v362 = vld [vmem:[#allocation1 + $0x2d] sm:$0xff]
    %v363 = vld [vmem:[#allocation1 + $0x36] sm:$0xff]
    %v364 = vld [vmem:[#allocation1 + $0x3f] sm:$0xff]
    %366 = vst [vmem:[#allocation1] ss:$9 sm:$0xff] %v23
    %v367 = vld [vmem:[#allocation1] sm:$0xff]
    %v368 = vld [vmem:[#allocation1 + $0x9] sm:$0xff]
    %v369 = vld [vmem:[#allocation1 + $0x12] sm:$0xff]
    %v370 = vld [vmem:[#allocation1 + $0x1b] sm:$0xff]
    %v371 = vld [vmem:[#allocation1 + $0x24] sm:$0xff]
    %v372 = vld [vmem:[#allocation1 + $0x2d] sm:$0xff]
    %v373 = vld [vmem:[#allocation1 + $0x36] sm:$0xff]
    %v374 = vld [vmem:[#allocation1 + $0x3f] sm:$0xff]
    %376 = vst [vmem:[#allocation1] ss:$9 sm:$0xff] %v24
    %v377 = vld [vmem:[#allocation1] sm:$0xff]
    %v378 = vld [vmem:[#allocation1 + $0x9] sm:$0xff]
    %v379 = vld [vmem:[#allocation1 + $0x12] sm:$0xff]
    %v380 = vld [vmem:[#allocation1 + $0x1b] sm:$0xff]
    %v381 = vld [vmem:[#allocation1 + $0x24] sm:$0xff]
    %v726 = vunpack.c.l.b16 %v25
    %v727 = vunpack.c.h.b16 %v25
    %v728 = vunpack.c.l.b16 %v26
    %v729 = vunpack.c.h.b16 %v26
    %v730 = vunpack.c.l.b16 %v27
    %v731 = vunpack.c.h.b16 %v27
    %v732 = vunpack.c.l.b16 %v28
    %v733 = vunpack.c.h.b16 %v28
    %v734 = vunpack.c.l.b16 %v29
    %v735 = vunpack.c.h.b16 %v29
    %v736 = vunpack.c.l.b16 %v30
    %v737 = vunpack.c.h.b16 %v30
    %v738 = vunpack.c.l.b16 %v31
    %v739 = vunpack.c.h.b16 %v31
    %v740 = vunpack.c.l.b16 %v32
    %v741 = vunpack.c.h.b16 %v32
    %v742 = vunpack.c.l.b16 %v33
    %v743 = vunpack.c.h.b16 %v33
    %v744 = vunpack.c.l.b16 %v34
    %v745 = vunpack.c.h.b16 %v34
    %v746 = vunpack.c.l.b16 %v35
    %v747 = vunpack.c.h.b16 %v35
    %v748 = vunpack.c.l.b16 %v36
    %v749 = vunpack.c.h.b16 %v36
    %v750 = vunpack.c.l.b16 %v37
    %v751 = vunpack.c.h.b16 %v37
    %v752 = vunpack.c.l.b16 %v38
    %v753 = vunpack.c.h.b16 %v38
    %v754 = vunpack.c.l.b16 %v39
    %v755 = vunpack.c.h.b16 %v39
    %v756 = vunpack.c.l.b16 %v40
    %v757 = vunpack.c.h.b16 %v40
    %v758 = vunpack.c.l.b16 %v41
    %v759 = vunpack.c.h.b16 %v41
    %v760 = vunpack.c.l.b16 %v42
    %v761 = vunpack.c.h.b16 %v42
    %v762 = vunpack.c.l.b16 %v43
    %v763 = vunpack.c.h.b16 %v43
    %v764 = vunpack.c.l.b16 %v44
    %v765 = vunpack.c.h.b16 %v44
    %v766 = vunpack.c.l.b16 %v45
    %v767 = vunpack.c.h.b16 %v45
    %v768 = vunpack.c.l.b16 %v46
    %v769 = vunpack.c.h.b16 %v46
    %v770 = vunpack.c.l.b16 %v47
    %v771 = vunpack.c.h.b16 %v47
    %v772 = vunpack.c.l.b16 %v48
    %v773 = vunpack.c.h.b16 %v48
    %v774 = vunpack.c.l.b16 %v49
    %v775 = vunpack.c.h.b16 %v49
    %v776 = vunpack.c.l.b16 %v50
    %v777 = vunpack.c.h.b16 %v50
    %v778 = vunpack.c.l.b16 %v51
    %v779 = vunpack.c.h.b16 %v51
    %v780 = vunpack.c.l.b16 %v52
    %v781 = vunpack.c.h.b16 %v52
    %v782 = vunpack.c.l.b16 %v53
    %v783 = vunpack.c.h.b16 %v53
    %v784 = vunpack.c.l.b16 %v54
    %v785 = vunpack.c.h.b16 %v54
    %v786 = vunpack.c.l.b16 %v55
    %v787 = vunpack.c.h.b16 %v55
    %v788 = vunpack.c.l.b16 %v56
    %v789 = vunpack.c.h.b16 %v56
    %v790 = vunpack.c.l.b16 %v57
    %v791 = vunpack.c.h.b16 %v57
    %v792 = vunpack.c.l.b16 %v58
    %v793 = vunpack.c.h.b16 %v58
    %v794 = vunpack.c.l.b16 %v59
    %v795 = vunpack.c.h.b16 %v59
    %v796 = vunpack.c.l.b16 %v60
    %v797 = vunpack.c.h.b16 %v60
    %v798 = vunpack.c.l.b16 %v61
    %v799 = vunpack.c.h.b16 %v61
    %v800 = vunpack.c.l.b16 %v62
    %v801 = vunpack.c.h.b16 %v62
    %v802 = vunpack.c.l.b16 %v63
    %v803 = vunpack.c.h.b16 %v63
    %v804 = vunpack.c.l.b16 %v64
    %v805 = vunpack.c.h.b16 %v64
    %v806 = vunpack.c.l.b16 %v65
    %v807 = vunpack.c.h.b16 %v65
    %v808 = vunpack.c.l.b16 %v66
    %v809 = vunpack.c.h.b16 %v66
    %v810 = vunpack.c.l.b16 %v67
    %v811 = vunpack.c.h.b16 %v67
    %v812 = vunpack.c.l.b16 %v68
    %v813 = vunpack.c.h.b16 %v68
    %v814 = vunpack.c.l.b16 %v69
    %v815 = vunpack.c.h.b16 %v69
    %v816 = vunpack.c.l.b16 %v70
    %v817 = vunpack.c.h.b16 %v70
    %v818 = vunpack.c.l.b16 %v71
    %v819 = vunpack.c.h.b16 %v71
    %v820 = vunpack.c.l.b16 %v72
    %v821 = vunpack.c.h.b16 %v72
    %v822 = vunpack.c.l.b16 %v73
    %v823 = vunpack.c.h.b16 %v73
    %v824 = vunpack.c.l.b16 %v74
    %v825 = vunpack.c.h.b16 %v74
    %v826 = vunpack.c.l.b16 %v75
    %v827 = vunpack.c.h.b16 %v75
    %v828 = vunpack.c.l.b16 %v76
    %v829 = vunpack.c.h.b16 %v76
    %v830 = vunpack.c.l.b16 %v77
    %v831 = vunpack.c.h.b16 %v77
    %v832 = vunpack.c.l.b16 %v78
    %v833 = vunpack.c.h.b16 %v78
    %v834 = vunpack.c.l.b16 %v79
    %v835 = vunpack.c.h.b16 %v79
    %v836 = vunpack.c.l.b16 %v80
    %v837 = vunpack.c.h.b16 %v80
    %v838 = vunpack.c.l.b16 %v81
    %v839 = vunpack.c.h.b16 %v81
    %v840 = vunpack.c.l.b16 %v82
    %v841 = vunpack.c.h.b16 %v82
    %v842 = vunpack.c.l.b16 %v83
    %v843 = vunpack.c.h.b16 %v83
    %v844 = vunpack.c.l.b16 %v84
    %v845 = vunpack.c.h.b16 %v84
    %v846 = vunpack.c.l.b16 %v85
    %v847 = vunpack.c.h.b16 %v85
    %v848 = vunpack.c.l.b16 %v86
    %v849 = vunpack.c.h.b16 %v86
    %v850 = vunpack.c.l.b16 %v87
    %v851 = vunpack.c.h.b16 %v87
    %v852 = vunpack.c.l.b16 %v88
    %v853 = vunpack.c.h.b16 %v88
    %v854 = vunpack.c.l.b16 %v89
    %v855 = vunpack.c.h.b16 %v89
    %v856 = vunpack.c.l.b16 %v90
    %v857 = vunpack.c.h.b16 %v90
    %v858 = vunpack.c.l.b16 %v91
    %v859 = vunpack.c.h.b16 %v91
    %v860 = vunpack.c.l.b16 %v92
    %v861 = vunpack.c.h.b16 %v92
    %v862 = vunpack.c.l.b16 %v93
    %v863 = vunpack.c.h.b16 %v93
    %v864 = vunpack.c.l.b16 %v94
    %v865 = vunpack.c.h.b16 %v94
    %v866 = vunpack.c.l.b16 %v95
    %v867 = vunpack.c.h.b16 %v95
    %v868 = vunpack.c.l.b16 %v96
    %v869 = vunpack.c.h.b16 %v96
    %v870 = vunpack.c.l.b16 %v97
    %v871 = vunpack.c.h.b16 %v97
    %v872 = vunpack.c.l.b16 %v98
    %v873 = vunpack.c.h.b16 %v98
    %v874 = vunpack.c.l.b16 %v99
    %v875 = vunpack.c.h.b16 %v99
    %v876 = vunpack.c.l.b16 %v100
    %v877 = vunpack.c.h.b16 %v100
    %v878 = vunpack.c.l.b16 %v101
    %v879 = vunpack.c.h.b16 %v101
    %v880 = vunpack.c.l.b16 %v102
    %v881 = vunpack.c.h.b16 %v102
    %v882 = vunpack.c.l.b16 %v103
    %v883 = vunpack.c.h.b16 %v103
    %v884 = vunpack.c.l.b16 %v104
    %v885 = vunpack.c.h.b16 %v104
    %v886 = vunpack.c.l.b16 %v105
    %v887 = vunpack.c.h.b16 %v105
    %v888 = vunpack.c.l.b16 %v106
    %v889 = vunpack.c.h.b16 %v106
    %v890 = vunpack.c.l.b16 %v107
    %v891 = vunpack.c.h.b16 %v107
    %v892 = vunpack.c.l.b16 %v108
    %v893 = vunpack.c.h.b16 %v108
    %v894 = vunpack.c.l.b16 %v109
    %v895 = vunpack.c.h.b16 %v109
    %v896 = vunpack.c.l.b16 %v110
    %v897 = vunpack.c.h.b16 %v110
    %v898 = vunpack.c.l.b16 %v111
    %v899 = vunpack.c.h.b16 %v111
    %v900 = vunpack.c.l.b16 %v112
    %v901 = vunpack.c.h.b16 %v112
    %v902 = vunpack.c.l.b16 %v113
    %v903 = vunpack.c.h.b16 %v113
    %v904 = vunpack.c.l.b16 %v114
    %v905 = vunpack.c.h.b16 %v114
    %v906 = vunpack.c.l.b16 %v115
    %v907 = vunpack.c.h.b16 %v115
    %v908 = vunpack.c.l.b16 %v116
    %v909 = vunpack.c.h.b16 %v116
    %v910 = vunpack.c.l.b16 %v117
    %v911 = vunpack.c.h.b16 %v117
    %v912 = vunpack.c.l.b16 %v118
    %v913 = vunpack.c.h.b16 %v118
    %v914 = vunpack.c.l.b16 %v119
    %v915 = vunpack.c.h.b16 %v119
    %v916 = vunpack.c.l.b16 %v120
    %v917 = vunpack.c.h.b16 %v120
    %v918 = vunpack.c.l.b16 %v121
    %v919 = vunpack.c.h.b16 %v121
    %v920 = vunpack.c.l.b16 %v122
    %v921 = vunpack.c.h.b16 %v122
    %v922 = vunpack.c.l.b16 %v123
    %v923 = vunpack.c.h.b16 %v123
    %v924 = vunpack.c.l.b16 %v124
    %v925 = vunpack.c.h.b16 %v124
    %v926 = vunpack.c.l.b16 %v125
    %v927 = vunpack.c.h.b16 %v125
    %v928 = vunpack.c.l.b16 %v126
    %v929 = vunpack.c.h.b16 %v126
    %v930 = vunpack.c.l.b16 %v127
    %v931 = vunpack.c.h.b16 %v127
    %v932 = vunpack.c.l.b16 %v128
    %v933 = vunpack.c.h.b16 %v128
    %v934 = vunpack.c.l.b16 %v129
    %v935 = vunpack.c.h.b16 %v129
    %v936 = vunpack.c.l.b16 %v130
    %v937 = vunpack.c.h.b16 %v130
    %v938 = vunpack.c.l.b16 %v131
    %v939 = vunpack.c.h.b16 %v131
    %v940 = vunpack.c.l.b16 %v132
    %v941 = vunpack.c.h.b16 %v132
    %v942 = vunpack.c.l.b16 %v133
    %v943 = vunpack.c.h.b16 %v133
    %v944 = vunpack.c.l.b16 %v134
    %v945 = vunpack.c.h.b16 %v134
    %v946 = vunpack.c.l.b16 %v135
    %v947 = vunpack.c.h.b16 %v135
    %v948 = vunpack.c.l.b16 %v136
    %v949 = vunpack.c.h.b16 %v136
    %v950 = vunpack.c.l.b16 %v137
    %v951 = vunpack.c.h.b16 %v137
    %v952 = vunpack.c.l.b16 %v138
    %v953 = vunpack.c.h.b16 %v138
    %v954 = vunpack.c.l.b16 %v139
    %v955 = vunpack.c.h.b16 %v139
    %v956 = vunpack.c.l.b16 %v140
    %v957 = vunpack.c.h.b16 %v140
    %v958 = vunpack.c.l.b16 %v141
    %v959 = vunpack.c.h.b16 %v141
    %v960 = vunpack.c.l.b16 %v142
    %v961 = vunpack.c.h.b16 %v142
    %v962 = vunpack.c.l.b16 %v143
    %v963 = vunpack.c.h.b16 %v143
    %v964 = vunpack.c.l.b16 %v144
    %v965 = vunpack.c.h.b16 %v144
    %v966 = vunpack.c.l.b16 %v145
    %v967 = vunpack.c.h.b16 %v145
    %v968 = vunpack.c.l.b16 %v146
    %v969 = vunpack.c.h.b16 %v146
    %v970 = vunpack.c.l.b16 %v147
    %v971 = vunpack.c.h.b16 %v147
    %v972 = vunpack.c.l.b16 %v148
    %v973 = vunpack.c.h.b16 %v148
    %v974 = vunpack.c.l.b16 %v149
    %v975 = vunpack.c.h.b16 %v149
    %v976 = vunpack.c.l.b16 %v150
    %v977 = vunpack.c.h.b16 %v150
    %v978 = vunpack.c.l.b16 %v151
    %v979 = vunpack.c.h.b16 %v151
    %v980 = vunpack.c.l.b16 %v152
    %v981 = vunpack.c.h.b16 %v152
    %v982 = vunpack.c.l.b16 %v153
    %v983 = vunpack.c.h.b16 %v153
    %v984 = vunpack.c.l.b16 %v154
    %v985 = vunpack.c.h.b16 %v154
    %v986 = vunpack.c.l.b16 %v155
    %v987 = vunpack.c.h.b16 %v155
    %v988 = vunpack.c.l.b16 %v156
    %v989 = vunpack.c.h.b16 %v156
    %v990 = vunpack.c.l.b16 %v157
    %v991 = vunpack.c.h.b16 %v157
    %v992 = vunpack.c.l.b16 %v158
    %v993 = vunpack.c.h.b16 %v158
    %v994 = vunpack.c.l.b16 %v159
    %v995 = vunpack.c.h.b16 %v159
    %v996 = vunpack.c.l.b16 %v160
    %v997 = vunpack.c.h.b16 %v160
    %v998 = vunpack.c.l.b16 %v161
    %v999 = vunpack.c.h.b16 %v161
    %v1000 = vunpack.c.l.b16 %v162
    %v1001 = vunpack.c.h.b16 %v162
    %v1002 = vunpack.c.l.b16 %v163
    %v1003 = vunpack.c.h.b16 %v163
    %v1004 = vunpack.c.l.b16 %v164
    %v1005 = vunpack.c.h.b16 %v164
    %v1006 = vunpack.c.l.b16 %v165
    %v1007 = vunpack.c.h.b16 %v165
    %v1008 = vunpack.c.l.b16 %v166
    %v1009 = vunpack.c.h.b16 %v166
    %v1010 = vunpack.c.l.b16 %v167
    %v1011 = vunpack.c.h.b16 %v167
    %v1012 = vunpack.c.l.b16 %v168
    %v1013 = vunpack.c.h.b16 %v168
    %v1014 = vunpack.c.l.b16 %v169
    %v1015 = vunpack.c.h.b16 %v169
    %v1016 = vunpack.c.l.b16 %v170
    %v1017 = vunpack.c.h.b16 %v170
    %v1018 = vunpack.c.l.b16 %v171
    %v1019 = vunpack.c.h.b16 %v171
    %v1020 = vunpack.c.l.b16 %v172
    %v1021 = vunpack.c.h.b16 %v172
    %v1022 = vunpack.c.l.b16 %v173
    %v1023 = vunpack.c.h.b16 %v173
    %v1024 = vunpack.c.l.b16 %v174
    %v1025 = vunpack.c.h.b16 %v174
    %v1026 = vunpack.c.l.b16 %v175
    %v1027 = vunpack.c.h.b16 %v175
    %v1028 = vunpack.c.l.b16 %v176
    %v1029 = vunpack.c.h.b16 %v176
    %v1030 = vunpack.c.l.b16 %v177
    %v1031 = vunpack.c.h.b16 %v177
    %v1032 = vunpack.c.l.b16 %v178
    %v1033 = vunpack.c.h.b16 %v178
    %v1034 = vunpack.c.l.b16 %v179
    %v1035 = vunpack.c.h.b16 %v179
    %v1036 = vunpack.c.l.b16 %v180
    %v1037 = vunpack.c.h.b16 %v180
    %v1038 = vunpack.c.l.b16 %v181
    %v1039 = vunpack.c.h.b16 %v181
    %v1040 = vunpack.c.l.b16 %v182
    %v1041 = vunpack.c.h.b16 %v182
    %v1042 = vunpack.c.l.b16 %v183
    %v1043 = vunpack.c.h.b16 %v183
    %v1044 = vunpack.c.l.b16 %v184
    %v1045 = vunpack.c.h.b16 %v184
    %v1046 = vunpack.c.l.b16 %v185
    %v1047 = vunpack.c.h.b16 %v185
    %v1048 = vunpack.c.l.b16 %v186
    %v1049 = vunpack.c.h.b16 %v186
    %v1050 = vunpack.c.l.b16 %v187
    %v1051 = vunpack.c.h.b16 %v187
    %v1052 = vunpack.c.l.b16 %v188
    %v1053 = vunpack.c.h.b16 %v188
    %v1054 = vunpack.c.l.b16 %v189
    %v1055 = vunpack.c.h.b16 %v189
    %v1056 = vunpack.c.l.b16 %v190
    %v1057 = vunpack.c.h.b16 %v190
    %v1058 = vunpack.c.l.b16 %v191
    %v1059 = vunpack.c.h.b16 %v191
    %v1060 = vunpack.c.l.b16 %v192
    %v1061 = vunpack.c.h.b16 %v192
    %v1062 = vunpack.c.l.b16 %v193
    %v1063 = vunpack.c.h.b16 %v193
    %v1064 = vunpack.c.l.b16 %v194
    %v1065 = vunpack.c.h.b16 %v194
    %v1066 = vunpack.c.l.b16 %v195
    %v1067 = vunpack.c.h.b16 %v195
    %v1068 = vunpack.c.l.b16 %v196
    %v1069 = vunpack.c.h.b16 %v196
    %v1070 = vunpack.c.l.b16 %v197
    %v1071 = vunpack.c.h.b16 %v197
    %v1072 = vunpack.c.l.b16 %v198
    %v1073 = vunpack.c.h.b16 %v198
    %v1074 = vunpack.c.l.b16 %v199
    %v1075 = vunpack.c.h.b16 %v199
    %v1076 = vunpack.c.l.b16 %v200
    %v1077 = vunpack.c.h.b16 %v200
    %v1078 = vunpack.c.l.b16 %v201
    %v1079 = vunpack.c.h.b16 %v201
    %v1080 = vunpack.c.l.b16 %v202
    %v1081 = vunpack.c.h.b16 %v202
    %v1082 = vunpack.c.l.b16 %v203
    %v1083 = vunpack.c.h.b16 %v203
    %v1084 = vunpack.c.l.b16 %v204
    %v1085 = vunpack.c.h.b16 %v204
    %v1086 = vunpack.c.l.b16 %v205
    %v1087 = vunpack.c.h.b16 %v205
    %v1088 = vunpack.c.l.b16 %v206
    %v1089 = vunpack.c.h.b16 %v206
    %v1090 = vunpack.c.l.b16 %v207
    %v1091 = vunpack.c.h.b16 %v207
    %v1092 = vunpack.c.l.b16 %v208
    %v1093 = vunpack.c.h.b16 %v208
    %v1094 = vunpack.c.l.b16 %v209
    %v1095 = vunpack.c.h.b16 %v209
    %v1096 = vunpack.c.l.b16 %v210
    %v1097 = vunpack.c.h.b16 %v210
    %v1098 = vunpack.c.l.b16 %v211
    %v1099 = vunpack.c.h.b16 %v211
    %v1100 = vunpack.c.l.b16 %v212
    %v1101 = vunpack.c.h.b16 %v212
    %v1102 = vunpack.c.l.b16 %v213
    %v1103 = vunpack.c.h.b16 %v213
    %v1104 = vunpack.c.l.b16 %v214
    %v1105 = vunpack.c.h.b16 %v214
    %v1106 = vunpack.c.l.b16 %v215
    %v1107 = vunpack.c.h.b16 %v215
    %v1108 = vunpack.c.l.b16 %v216
    %v1109 = vunpack.c.h.b16 %v216
    %v1110 = vunpack.c.l.b16 %v217
    %v1111 = vunpack.c.h.b16 %v217
    %v1112 = vunpack.c.l.b16 %v218
    %v1113 = vunpack.c.h.b16 %v218
    %v1114 = vunpack.c.l.b16 %v219
    %v1115 = vunpack.c.h.b16 %v219
    %v1116 = vunpack.c.l.b16 %v220
    %v1117 = vunpack.c.h.b16 %v220
    %v1118 = vunpack.c.l.b16 %v221
    %v1119 = vunpack.c.h.b16 %v221
    %v1120 = vunpack.c.l.b16 %v222
    %v1121 = vunpack.c.h.b16 %v222
    %v1122 = vunpack.c.l.b16 %v223
    %v1123 = vunpack.c.h.b16 %v223
    %v1124 = vunpack.c.l.b16 %v224
    %v1125 = vunpack.c.h.b16 %v224
    %v1126 = vunpack.c.l.b16 %v225
    %v1127 = vunpack.c.h.b16 %v225
    %v1128 = vunpack.c.l.b16 %v226
    %v1129 = vunpack.c.h.b16 %v226
    %v1130 = vunpack.c.l.b16 %v227
    %v1131 = vunpack.c.h.b16 %v227
    %v1132 = vunpack.c.l.b16 %v228
    %v1133 = vunpack.c.h.b16 %v228
    %v1134 = vunpack.c.l.b16 %v229
    %v1135 = vunpack.c.h.b16 %v229
    %v1136 = vunpack.c.l.b16 %v230
    %v1137 = vunpack.c.h.b16 %v230
    %v1138 = vunpack.c.l.b16 %v231
    %v1139 = vunpack.c.h.b16 %v231
    %v1140 = vunpack.c.l.b16 %v232
    %v1141 = vunpack.c.h.b16 %v232
    %v1142 = vunpack.c.l.b16 %v233
    %v1143 = vunpack.c.h.b16 %v233
    %v1144 = vunpack.c.l.b16 %v234
    %v1145 = vunpack.c.h.b16 %v234
    %v1146 = vunpack.c.l.b16 %v235
    %v1147 = vunpack.c.h.b16 %v235
    %v1148 = vunpack.c.l.b16 %v236
    %v1149 = vunpack.c.h.b16 %v236
    %v1150 = vunpack.c.l.b16 %v237
    %v1151 = vunpack.c.h.b16 %v237
    %v1152 = vunpack.c.l.b16 %v238
    %v1153 = vunpack.c.h.b16 %v238
    %v1154 = vunpack.c.l.b16 %v239
    %v1155 = vunpack.c.h.b16 %v239
    %v1156 = vunpack.c.l.b16 %v240
    %v1157 = vunpack.c.h.b16 %v240
    %v1158 = vunpack.c.l.b16 %v241
    %v1159 = vunpack.c.h.b16 %v241
    %v1160 = vunpack.c.l.b16 %v242
    %v1161 = vunpack.c.h.b16 %v242
    %v1162 = vunpack.c.l.b16 %v243
    %v1163 = vunpack.c.h.b16 %v243
    %v1164 = vunpack.c.l.b16 %v244
    %v1165 = vunpack.c.h.b16 %v244
    %v1166 = vunpack.c.l.b16 %v245
    %v1167 = vunpack.c.h.b16 %v245
    %v1168 = vunpack.c.l.b16 %v246
    %v1169 = vunpack.c.h.b16 %v246
    %v1170 = vunpack.c.l.b16 %v247
    %v1171 = vunpack.c.h.b16 %v247
    %v1172 = vunpack.c.l.b16 %v248
    %v1173 = vunpack.c.h.b16 %v248
    %v1174 = vunpack.c.l.b16 %v249
    %v1175 = vunpack.c.h.b16 %v249
    %v1176 = vunpack.c.l.b16 %v250
    %v1177 = vunpack.c.h.b16 %v250
    %v1178 = vunpack.c.l.b16 %v251
    %v1179 = vunpack.c.h.b16 %v251
    %v1180 = vunpack.c.l.b16 %v252
    %v1181 = vunpack.c.h.b16 %v252
    %v1182 = vunpack.c.l.b16 %v253
    %v1183 = vunpack.c.h.b16 %v253
    %v1184 = vunpack.c.l.b16 %v254
    %v1185 = vunpack.c.h.b16 %v254
    %v1186 = vunpack.c.l.b16 %v255
    %v1187 = vunpack.c.h.b16 %v255
    %v1188 = vunpack.c.l.b16 %v256
    %v1189 = vunpack.c.h.b16 %v256
    %v1190 = vunpack.c.l.b16 %v257
    %v1191 = vunpack.c.h.b16 %v257
    %v1192 = vunpack.c.l.b16 %v258
    %v1193 = vunpack.c.h.b16 %v258
    %v1194 = vunpack.c.l.b16 %v259
    %v1195 = vunpack.c.h.b16 %v259
    %v1196 = vunpack.c.l.b16 %v260
    %v1197 = vunpack.c.h.b16 %v260
    %v1198 = vunpack.c.l.b16 %v261
    %v1199 = vunpack.c.h.b16 %v261
    %v1200 = vunpack.c.l.b16 %v262
    %v1201 = vunpack.c.h.b16 %v262
    %v1202 = vunpack.c.l.b16 %v263
    %v1203 = vunpack.c.h.b16 %v263
    %v1204 = vunpack.c.l.b16 %v264
    %v1205 = vunpack.c.h.b16 %v264
    %v1206 = vunpack.c.l.b16 %v265
    %v1207 = vunpack.c.h.b16 %v265
    %v1208 = vunpack.c.l.b16 %v266
    %v1209 = vunpack.c.h.b16 %v266
    %v1210 = vunpack.c.l.b16 %v267
    %v1211 = vunpack.c.h.b16 %v267
    %v1212 = vunpack.c.l.b16 %v268
    %v1213 = vunpack.c.h.b16 %v268
    %v1214 = vunpack.c.l.b16 %v269
    %v1215 = vunpack.c.h.b16 %v269
    %v1216 = vunpack.c.l.b16 %v270
    %v1217 = vunpack.c.h.b16 %v270
    %v1218 = vunpack.c.l.b16 %v271
    %v1219 = vunpack.c.h.b16 %v271
    %v1220 = vunpack.c.l.b16 %v272
    %v1221 = vunpack.c.h.b16 %v272
    %v1222 = vunpack.c.l.b16 %v273
    %v1223 = vunpack.c.h.b16 %v273
    %v1224 = vunpack.c.l.b16 %v274
    %v1225 = vunpack.c.h.b16 %v274
    %v1226 = vunpack.c.l.b16 %v275
    %v1227 = vunpack.c.h.b16 %v275
    %v1228 = vunpack.c.l.b16 %v276
    %v1229 = vunpack.c.h.b16 %v276
    %v1230 = vunpack.c.l.b16 %v277
    %v1231 = vunpack.c.h.b16 %v277
    %v1232 = vunpack.c.l.b16 %v278
    %v1233 = vunpack.c.h.b16 %v278
    %v1234 = vunpack.c.l.b16 %v279
    %v1235 = vunpack.c.h.b16 %v279
    %v1236 = vunpack.c.l.b16 %v280
    %v1237 = vunpack.c.h.b16 %v280
    %v1238 = vunpack.c.l.b16 %v281
    %v1239 = vunpack.c.h.b16 %v281
    %v1240 = vunpack.c.l.b16 %v282
    %v1241 = vunpack.c.h.b16 %v282
    %v1242 = vunpack.c.l.b16 %v283
    %v1243 = vunpack.c.h.b16 %v283
    %v1244 = vunpack.c.l.b16 %v284
    %v1245 = vunpack.c.h.b16 %v284
    %v1246 = vunpack.c.l.b16 %v285
    %v1247 = vunpack.c.h.b16 %v285
    %v1248 = vunpack.c.l.b16 %v286
    %v1249 = vunpack.c.h.b16 %v286
    %v1250 = vunpack.c.l.b16 %v287
    %v1251 = vunpack.c.h.b16 %v287
    %v1252 = vunpack.c.l.b16 %v288
    %v1253 = vunpack.c.h.b16 %v288
    %v1254 = vunpack.c.l.b16 %v289
    %v1255 = vunpack.c.h.b16 %v289
    %v1256 = vunpack.c.l.b16 %v290
    %v1257 = vunpack.c.h.b16 %v290
    %v1258 = vunpack.c.l.b16 %v291
    %v1259 = vunpack.c.h.b16 %v291
    %v1260 = vunpack.c.l.b16 %v292
    %v1261 = vunpack.c.h.b16 %v292
    %v1262 = vunpack.c.l.b16 %v293
    %v1263 = vunpack.c.h.b16 %v293
    %v1264 = vunpack.c.l.b16 %v294
    %v1265 = vunpack.c.h.b16 %v294
    %v1266 = vunpack.c.l.b16 %v295
    %v1267 = vunpack.c.h.b16 %v295
    %v1268 = vunpack.c.l.b16 %v296
    %v1269 = vunpack.c.h.b16 %v296
    %v1270 = vunpack.c.l.b16 %v297
    %v1271 = vunpack.c.h.b16 %v297
    %v1272 = vunpack.c.l.b16 %v298
    %v1273 = vunpack.c.h.b16 %v298
    %v1274 = vunpack.c.l.b16 %v299
    %v1275 = vunpack.c.h.b16 %v299
    %v1276 = vunpack.c.l.b16 %v300
    %v1277 = vunpack.c.h.b16 %v300
    %v1278 = vunpack.c.l.b16 %v301
    %v1279 = vunpack.c.h.b16 %v301
    %v1280 = vunpack.c.l.b16 %v302
    %v1281 = vunpack.c.h.b16 %v302
    %v1282 = vunpack.c.l.b16 %v303
    %v1283 = vunpack.c.h.b16 %v303
    %v1284 = vunpack.c.l.b16 %v304
    %v1285 = vunpack.c.h.b16 %v304
    %v1286 = vunpack.c.l.b16 %v305
    %v1287 = vunpack.c.h.b16 %v305
    %v1288 = vunpack.c.l.b16 %v306
    %v1289 = vunpack.c.h.b16 %v306
    %v1290 = vunpack.c.l.b16 %v307
    %v1291 = vunpack.c.h.b16 %v307
    %v1292 = vunpack.c.l.b16 %v308
    %v1293 = vunpack.c.h.b16 %v308
    %v1294 = vunpack.c.l.b16 %v309
    %v1295 = vunpack.c.h.b16 %v309
    %v1296 = vunpack.c.l.b16 %v310
    %v1297 = vunpack.c.h.b16 %v310
    %v1298 = vunpack.c.l.b16 %v311
    %v1299 = vunpack.c.h.b16 %v311
    %v1300 = vunpack.c.l.b16 %v312
    %v1301 = vunpack.c.h.b16 %v312
    %v1302 = vunpack.c.l.b16 %v313
    %v1303 = vunpack.c.h.b16 %v313
    %v1304 = vunpack.c.l.b16 %v314
    %v1305 = vunpack.c.h.b16 %v314
    %v1306 = vunpack.c.l.b16 %v315
    %v1307 = vunpack.c.h.b16 %v315
    %v1308 = vunpack.c.l.b16 %v316
    %v1309 = vunpack.c.h.b16 %v316
    %v1310 = vunpack.c.l.b16 %v317
    %v1311 = vunpack.c.h.b16 %v317
    %v1312 = vunpack.c.l.b16 %v318
    %v1313 = vunpack.c.h.b16 %v318
    %v1314 = vunpack.c.l.b16 %v319
    %v1315 = vunpack.c.h.b16 %v319
    %v1316 = vunpack.c.l.b16 %v320
    %v1317 = vunpack.c.h.b16 %v320
    %v1318 = vunpack.c.l.b16 %v321
    %v1319 = vunpack.c.h.b16 %v321
    %v1320 = vunpack.c.l.b16 %v322
    %v1321 = vunpack.c.h.b16 %v322
    %v1322 = vunpack.c.l.b16 %v323
    %v1323 = vunpack.c.h.b16 %v323
    %v1324 = vunpack.c.l.b16 %v324
    %v1325 = vunpack.c.h.b16 %v324
    %v1326 = vunpack.c.l.b16 %v325
    %v1327 = vunpack.c.h.b16 %v325
    %v1328 = vunpack.c.l.b16 %v326
    %v1329 = vunpack.c.h.b16 %v326
    %v1330 = vunpack.c.l.b16 %v327
    %v1331 = vunpack.c.h.b16 %v327
    %v1332 = vunpack.c.l.b16 %v328
    %v1333 = vunpack.c.h.b16 %v328
    %v1334 = vunpack.c.l.b16 %v329
    %v1335 = vunpack.c.h.b16 %v329
    %v1336 = vunpack.c.l.b16 %v330
    %v1337 = vunpack.c.h.b16 %v330
    %v1338 = vunpack.c.l.b16 %v331
    %v1339 = vunpack.c.h.b16 %v331
    %v1340 = vunpack.c.l.b16 %v332
    %v1341 = vunpack.c.h.b16 %v332
    %v1342 = vunpack.c.l.b16 %v333
    %v1343 = vunpack.c.h.b16 %v333
    %v1344 = vunpack.c.l.b16 %v334
    %v1345 = vunpack.c.h.b16 %v334
    %v1346 = vunpack.c.l.b16 %v335
    %v1347 = vunpack.c.h.b16 %v335
    %v1348 = vunpack.c.l.b16 %v336
    %v1349 = vunpack.c.h.b16 %v336
    %v1350 = vunpack.c.l.b16 %v337
    %v1351 = vunpack.c.h.b16 %v337
    %v1352 = vunpack.c.l.b16 %v338
    %v1353 = vunpack.c.h.b16 %v338
    %v1354 = vunpack.c.l.b16 %v339
    %v1355 = vunpack.c.h.b16 %v339
    %v1356 = vunpack.c.l.b16 %v340
    %v1357 = vunpack.c.h.b16 %v340
    %v1358 = vunpack.c.l.b16 %v341
    %v1359 = vunpack.c.h.b16 %v341
    %v1360 = vunpack.c.l.b16 %v342
    %v1361 = vunpack.c.h.b16 %v342
    %v1362 = vunpack.c.l.b16 %v343
    %v1363 = vunpack.c.h.b16 %v343
    %v1364 = vunpack.c.l.b16 %v344
    %v1365 = vunpack.c.h.b16 %v344
    %v1366 = vunpack.c.l.b16 %v345
    %v1367 = vunpack.c.h.b16 %v345
    %v1368 = vunpack.c.l.b16 %v346
    %v1369 = vunpack.c.h.b16 %v346
    %v1370 = vunpack.c.l.b16 %v347
    %v1371 = vunpack.c.h.b16 %v347
    %v1372 = vunpack.c.l.b16 %v348
    %v1373 = vunpack.c.h.b16 %v348
    %v1374 = vpack.c.b16 %v728, %v726
    %v1375 = vpack.c.b16 %v729, %v727
    %v1376 = vpack.c.b16 %v732, %v730
    %v1377 = vpack.c.b16 %v733, %v731
    %v1378 = vpack.c.b16 %v736, %v734
    %v1379 = vpack.c.b16 %v737, %v735
    %v1380 = vpack.c.b16 %v740, %v738
    %v1381 = vpack.c.b16 %v741, %v739
    %v1382 = vpack.c.b16 %v744, %v742
    %v1383 = vpack.c.b16 %v745, %v743
    %v1384 = vpack.c.b16 %v748, %v746
    %v1385 = vpack.c.b16 %v749, %v747
    %v1386 = vpack.c.b16 %v752, %v750
    %v1387 = vpack.c.b16 %v753, %v751
    %v1388 = vpack.c.b16 %v756, %v754
    %v1389 = vpack.c.b16 %v757, %v755
    %v1390 = vpack.c.b16 %v760, %v758
    %v1391 = vpack.c.b16 %v761, %v759
    %v1392 = vpack.c.b16 %v764, %v762
    %v1393 = vpack.c.b16 %v765, %v763
    %v1394 = vpack.c.b16 %v768, %v766
    %v1395 = vpack.c.b16 %v769, %v767
    %v1396 = vpack.c.b16 %v772, %v770
    %v1397 = vpack.c.b16 %v773, %v771
    %v1398 = vpack.c.b16 %v776, %v774
    %v1399 = vpack.c.b16 %v777, %v775
    %v1400 = vpack.c.b16 %v780, %v778
    %v1401 = vpack.c.b16 %v781, %v779
    %v1402 = vpack.c.b16 %v784, %v782
    %v1403 = vpack.c.b16 %v785, %v783
    %v1404 = vpack.c.b16 %v788, %v786
    %v1405 = vpack.c.b16 %v789, %v787
    %v1406 = vpack.c.b16 %v792, %v790
    %v1407 = vpack.c.b16 %v793, %v791
    %v1408 = vpack.c.b16 %v796, %v794
    %v1409 = vpack.c.b16 %v797, %v795
    %v1410 = vpack.c.b16 %v800, %v798
    %v1411 = vpack.c.b16 %v801, %v799
    %v1412 = vpack.c.b16 %v804, %v802
    %v1413 = vpack.c.b16 %v805, %v803
    %v1414 = vpack.c.b16 %v808, %v806
    %v1415 = vpack.c.b16 %v809, %v807
    %v1416 = vpack.c.b16 %v812, %v810
    %v1417 = vpack.c.b16 %v813, %v811
    %v1418 = vpack.c.b16 %v816, %v814
    %v1419 = vpack.c.b16 %v817, %v815
    %v1420 = vpack.c.b16 %v820, %v818
    %v1421 = vpack.c.b16 %v821, %v819
    %v1422 = vpack.c.b16 %v824, %v822
    %v1423 = vpack.c.b16 %v825, %v823
    %v1424 = vpack.c.b16 %v828, %v826
    %v1425 = vpack.c.b16 %v829, %v827
    %v1426 = vpack.c.b16 %v832, %v830
    %v1427 = vpack.c.b16 %v833, %v831
    %v1428 = vpack.c.b16 %v836, %v834
    %v1429 = vpack.c.b16 %v837, %v835
    %v1430 = vpack.c.b16 %v840, %v838
    %v1431 = vpack.c.b16 %v841, %v839
    %v1432 = vpack.c.b16 %v844, %v842
    %v1433 = vpack.c.b16 %v845, %v843
    %v1434 = vpack.c.b16 %v848, %v846
    %v1435 = vpack.c.b16 %v849, %v847
    %v1436 = vpack.c.b16 %v852, %v850
    %v1437 = vpack.c.b16 %v853, %v851
    %v1438 = vpack.c.b16 %v856, %v854
    %v1439 = vpack.c.b16 %v857, %v855
    %v1440 = vpack.c.b16 %v860, %v858
    %v1441 = vpack.c.b16 %v861, %v859
    %v1442 = vpack.c.b16 %v864, %v862
    %v1443 = vpack.c.b16 %v865, %v863
    %v1444 = vpack.c.b16 %v868, %v866
    %v1445 = vpack.c.b16 %v869, %v867
    %v1446 = vpack.c.b16 %v872, %v870
    %v1447 = vpack.c.b16 %v873, %v871
    %v1448 = vpack.c.b16 %v876, %v874
    %v1449 = vpack.c.b16 %v877, %v875
    %v1450 = vpack.c.b16 %v880, %v878
    %v1451 = vpack.c.b16 %v881, %v879
    %v1452 = vpack.c.b16 %v884, %v882
    %v1453 = vpack.c.b16 %v885, %v883
    %v1454 = vpack.c.b16 %v888, %v886
    %v1455 = vpack.c.b16 %v889, %v887
    %v1456 = vpack.c.b16 %v892, %v890
    %v1457 = vpack.c.b16 %v893, %v891
    %v1458 = vpack.c.b16 %v896, %v894
    %v1459 = vpack.c.b16 %v897, %v895
    %v1460 = vpack.c.b16 %v900, %v898
    %v1461 = vpack.c.b16 %v901, %v899
    %v1462 = vpack.c.b16 %v904, %v902
    %v1463 = vpack.c.b16 %v905, %v903
    %v1464 = vpack.c.b16 %v908, %v906
    %v1465 = vpack.c.b16 %v909, %v907
    %v1466 = vpack.c.b16 %v912, %v910
    %v1467 = vpack.c.b16 %v913, %v911
    %v1468 = vpack.c.b16 %v916, %v914
    %v1469 = vpack.c.b16 %v917, %v915
    %v1470 = vpack.c.b16 %v920, %v918
    %v1471 = vpack.c.b16 %v921, %v919
    %v1472 = vpack.c.b16 %v924, %v922
    %v1473 = vpack.c.b16 %v925, %v923
    %v1474 = vpack.c.b16 %v928, %v926
    %v1475 = vpack.c.b16 %v929, %v927
    %v1476 = vpack.c.b16 %v932, %v930
    %v1477 = vpack.c.b16 %v933, %v931
    %v1478 = vpack.c.b16 %v936, %v934
    %v1479 = vpack.c.b16 %v937, %v935
    %v1480 = vpack.c.b16 %v940, %v938
    %v1481 = vpack.c.b16 %v941, %v939
    %v1482 = vpack.c.b16 %v944, %v942
    %v1483 = vpack.c.b16 %v945, %v943
    %v1484 = vpack.c.b16 %v948, %v946
    %v1485 = vpack.c.b16 %v949, %v947
    %v1486 = vpack.c.b16 %v952, %v950
    %v1487 = vpack.c.b16 %v953, %v951
    %v1488 = vpack.c.b16 %v956, %v954
    %v1489 = vpack.c.b16 %v957, %v955
    %v1490 = vpack.c.b16 %v960, %v958
    %v1491 = vpack.c.b16 %v961, %v959
    %v1492 = vpack.c.b16 %v964, %v962
    %v1493 = vpack.c.b16 %v965, %v963
    %v1494 = vpack.c.b16 %v968, %v966
    %v1495 = vpack.c.b16 %v969, %v967
    %v1496 = vpack.c.b16 %v972, %v970
    %v1497 = vpack.c.b16 %v973, %v971
    %v1498 = vpack.c.b16 %v976, %v974
    %v1499 = vpack.c.b16 %v977, %v975
    %v1500 = vpack.c.b16 %v980, %v978
    %v1501 = vpack.c.b16 %v981, %v979
    %v1502 = vpack.c.b16 %v984, %v982
    %v1503 = vpack.c.b16 %v985, %v983
    %v1504 = vpack.c.b16 %v988, %v986
    %v1505 = vpack.c.b16 %v989, %v987
    %v1506 = vpack.c.b16 %v992, %v990
    %v1507 = vpack.c.b16 %v993, %v991
    %v1508 = vpack.c.b16 %v996, %v994
    %v1509 = vpack.c.b16 %v997, %v995
    %v1510 = vpack.c.b16 %v1000, %v998
    %v1511 = vpack.c.b16 %v1001, %v999
    %v1512 = vpack.c.b16 %v1004, %v1002
    %v1513 = vpack.c.b16 %v1005, %v1003
    %v1514 = vpack.c.b16 %v1008, %v1006
    %v1515 = vpack.c.b16 %v1009, %v1007
    %v1516 = vpack.c.b16 %v1012, %v1010
    %v1517 = vpack.c.b16 %v1013, %v1011
    %v1518 = vpack.c.b16 %v1016, %v1014
    %v1519 = vpack.c.b16 %v1017, %v1015
    %v1520 = vpack.c.b16 %v1020, %v1018
    %v1521 = vpack.c.b16 %v1021, %v1019
    %v1522 = vpack.c.b16 %v1024, %v1022
    %v1523 = vpack.c.b16 %v1025, %v1023
    %v1524 = vpack.c.b16 %v1028, %v1026
    %v1525 = vpack.c.b16 %v1029, %v1027
    %v1526 = vpack.c.b16 %v1032, %v1030
    %v1527 = vpack.c.b16 %v1033, %v1031
    %v1528 = vpack.c.b16 %v1036, %v1034
    %v1529 = vpack.c.b16 %v1037, %v1035
    %v1530 = vpack.c.b16 %v1040, %v1038
    %v1531 = vpack.c.b16 %v1041, %v1039
    %v1532 = vpack.c.b16 %v1044, %v1042
    %v1533 = vpack.c.b16 %v1045, %v1043
    %v1534 = vpack.c.b16 %v1048, %v1046
    %v1535 = vpack.c.b16 %v1049, %v1047
    %v1536 = vpack.c.b16 %v1052, %v1050
    %v1537 = vpack.c.b16 %v1053, %v1051
    %v1538 = vpack.c.b16 %v1056, %v1054
    %v1539 = vpack.c.b16 %v1057, %v1055
    %v1540 = vpack.c.b16 %v1060, %v1058
    %v1541 = vpack.c.b16 %v1061, %v1059
    %v1542 = vpack.c.b16 %v1064, %v1062
    %v1543 = vpack.c.b16 %v1065, %v1063
    %v1544 = vpack.c.b16 %v1068, %v1066
    %v1545 = vpack.c.b16 %v1069, %v1067
    %v1546 = vpack.c.b16 %v1072, %v1070
    %v1547 = vpack.c.b16 %v1073, %v1071
    %v1548 = vpack.c.b16 %v1076, %v1074
    %v1549 = vpack.c.b16 %v1077, %v1075
    %v1550 = vpack.c.b16 %v1080, %v1078
    %v1551 = vpack.c.b16 %v1081, %v1079
    %v1552 = vpack.c.b16 %v1084, %v1082
    %v1553 = vpack.c.b16 %v1085, %v1083
    %v1554 = vpack.c.b16 %v1088, %v1086
    %v1555 = vpack.c.b16 %v1089, %v1087
    %v1556 = vpack.c.b16 %v1092, %v1090
    %v1557 = vpack.c.b16 %v1093, %v1091
    %v1558 = vpack.c.b16 %v1096, %v1094
    %v1559 = vpack.c.b16 %v1097, %v1095
    %v1560 = vpack.c.b16 %v1100, %v1098
    %v1561 = vpack.c.b16 %v1101, %v1099
    %v1562 = vpack.c.b16 %v1104, %v1102
    %v1563 = vpack.c.b16 %v1105, %v1103
    %v1564 = vpack.c.b16 %v1108, %v1106
    %v1565 = vpack.c.b16 %v1109, %v1107
    %v1566 = vpack.c.b16 %v1112, %v1110
    %v1567 = vpack.c.b16 %v1113, %v1111
    %v1568 = vpack.c.b16 %v1116, %v1114
    %v1569 = vpack.c.b16 %v1117, %v1115
    %v1570 = vpack.c.b16 %v1120, %v1118
    %v1571 = vpack.c.b16 %v1121, %v1119
    %v1572 = vpack.c.b16 %v1124, %v1122
    %v1573 = vpack.c.b16 %v1125, %v1123
    %v1574 = vpack.c.b16 %v1128, %v1126
    %v1575 = vpack.c.b16 %v1129, %v1127
    %v1576 = vpack.c.b16 %v1132, %v1130
    %v1577 = vpack.c.b16 %v1133, %v1131
    %v1578 = vpack.c.b16 %v1136, %v1134
    %v1579 = vpack.c.b16 %v1137, %v1135
    %v1580 = vpack.c.b16 %v1140, %v1138
    %v1581 = vpack.c.b16 %v1141, %v1139
    %v1582 = vpack.c.b16 %v1144, %v1142
    %v1583 = vpack.c.b16 %v1145, %v1143
    %v1584 = vpack.c.b16 %v1148, %v1146
    %v1585 = vpack.c.b16 %v1149, %v1147
    %v1586 = vpack.c.b16 %v1152, %v1150
    %v1587 = vpack.c.b16 %v1153, %v1151
    %v1588 = vpack.c.b16 %v1156, %v1154
    %v1589 = vpack.c.b16 %v1157, %v1155
    %v1590 = vpack.c.b16 %v1160, %v1158
    %v1591 = vpack.c.b16 %v1161, %v1159
    %v1592 = vpack.c.b16 %v1164, %v1162
    %v1593 = vpack.c.b16 %v1165, %v1163
    %v1594 = vpack.c.b16 %v1168, %v1166
    %v1595 = vpack.c.b16 %v1169, %v1167
    %v1596 = vpack.c.b16 %v1172, %v1170
    %v1597 = vpack.c.b16 %v1173, %v1171
    %v1598 = vpack.c.b16 %v1176, %v1174
    %v1599 = vpack.c.b16 %v1177, %v1175
    %v1600 = vpack.c.b16 %v1180, %v1178
    %v1601 = vpack.c.b16 %v1181, %v1179
    %v1602 = vpack.c.b16 %v1184, %v1182
    %v1603 = vpack.c.b16 %v1185, %v1183
    %v1604 = vpack.c.b16 %v1188, %v1186
    %v1605 = vpack.c.b16 %v1189, %v1187
    %v1606 = vpack.c.b16 %v1192, %v1190
    %v1607 = vpack.c.b16 %v1193, %v1191
    %v1608 = vpack.c.b16 %v1196, %v1194
    %v1609 = vpack.c.b16 %v1197, %v1195
    %v1610 = vpack.c.b16 %v1200, %v1198
    %v1611 = vpack.c.b16 %v1201, %v1199
    %v1612 = vpack.c.b16 %v1204, %v1202
    %v1613 = vpack.c.b16 %v1205, %v1203
    %v1614 = vpack.c.b16 %v1208, %v1206
    %v1615 = vpack.c.b16 %v1209, %v1207
    %v1616 = vpack.c.b16 %v1212, %v1210
    %v1617 = vpack.c.b16 %v1213, %v1211
    %v1618 = vpack.c.b16 %v1216, %v1214
    %v1619 = vpack.c.b16 %v1217, %v1215
    %v1620 = vpack.c.b16 %v1220, %v1218
    %v1621 = vpack.c.b16 %v1221, %v1219
    %v1622 = vpack.c.b16 %v1224, %v1222
    %v1623 = vpack.c.b16 %v1225, %v1223
    %v1624 = vpack.c.b16 %v1228, %v1226
    %v1625 = vpack.c.b16 %v1229, %v1227
    %v1626 = vpack.c.b16 %v1232, %v1230
    %v1627 = vpack.c.b16 %v1233, %v1231
    %v1628 = vpack.c.b16 %v1236, %v1234
    %v1629 = vpack.c.b16 %v1237, %v1235
    %v1630 = vpack.c.b16 %v1240, %v1238
    %v1631 = vpack.c.b16 %v1241, %v1239
    %v1632 = vpack.c.b16 %v1244, %v1242
    %v1633 = vpack.c.b16 %v1245, %v1243
    %v1634 = vpack.c.b16 %v1248, %v1246
    %v1635 = vpack.c.b16 %v1249, %v1247
    %v1636 = vpack.c.b16 %v1252, %v1250
    %v1637 = vpack.c.b16 %v1253, %v1251
    %v1638 = vpack.c.b16 %v1256, %v1254
    %v1639 = vpack.c.b16 %v1257, %v1255
    %v1640 = vpack.c.b16 %v1260, %v1258
    %v1641 = vpack.c.b16 %v1261, %v1259
    %v1642 = vpack.c.b16 %v1264, %v1262
    %v1643 = vpack.c.b16 %v1265, %v1263
    %v1644 = vpack.c.b16 %v1268, %v1266
    %v1645 = vpack.c.b16 %v1269, %v1267
    %v1646 = vpack.c.b16 %v1272, %v1270
    %v1647 = vpack.c.b16 %v1273, %v1271
    %v1648 = vpack.c.b16 %v1276, %v1274
    %v1649 = vpack.c.b16 %v1277, %v1275
    %v1650 = vpack.c.b16 %v1280, %v1278
    %v1651 = vpack.c.b16 %v1281, %v1279
    %v1652 = vpack.c.b16 %v1284, %v1282
    %v1653 = vpack.c.b16 %v1285, %v1283
    %v1654 = vpack.c.b16 %v1288, %v1286
    %v1655 = vpack.c.b16 %v1289, %v1287
    %v1656 = vpack.c.b16 %v1292, %v1290
    %v1657 = vpack.c.b16 %v1293, %v1291
    %v1658 = vpack.c.b16 %v1296, %v1294
    %v1659 = vpack.c.b16 %v1297, %v1295
    %v1660 = vpack.c.b16 %v1300, %v1298
    %v1661 = vpack.c.b16 %v1301, %v1299
    %v1662 = vpack.c.b16 %v1304, %v1302
    %v1663 = vpack.c.b16 %v1305, %v1303
    %v1664 = vpack.c.b16 %v1308, %v1306
    %v1665 = vpack.c.b16 %v1309, %v1307
    %v1666 = vpack.c.b16 %v1312, %v1310
    %v1667 = vpack.c.b16 %v1313, %v1311
    %v1668 = vpack.c.b16 %v1316, %v1314
    %v1669 = vpack.c.b16 %v1317, %v1315
    %v1670 = vpack.c.b16 %v1320, %v1318
    %v1671 = vpack.c.b16 %v1321, %v1319
    %v1672 = vpack.c.b16 %v1324, %v1322
    %v1673 = vpack.c.b16 %v1325, %v1323
    %v1674 = vpack.c.b16 %v1328, %v1326
    %v1675 = vpack.c.b16 %v1329, %v1327
    %v1676 = vpack.c.b16 %v1332, %v1330
    %v1677 = vpack.c.b16 %v1333, %v1331
    %v1678 = vpack.c.b16 %v1336, %v1334
    %v1679 = vpack.c.b16 %v1337, %v1335
    %v1680 = vpack.c.b16 %v1340, %v1338
    %v1681 = vpack.c.b16 %v1341, %v1339
    %v1682 = vpack.c.b16 %v1344, %v1342
    %v1683 = vpack.c.b16 %v1345, %v1343
    %v1684 = vpack.c.b16 %v1348, %v1346
    %v1685 = vpack.c.b16 %v1349, %v1347
    %v1686 = vpack.c.b16 %v1352, %v1350
    %v1687 = vpack.c.b16 %v1353, %v1351
    %v1688 = vpack.c.b16 %v1356, %v1354
    %v1689 = vpack.c.b16 %v1357, %v1355
    %v1690 = vpack.c.b16 %v1360, %v1358
    %v1691 = vpack.c.b16 %v1361, %v1359
    %v1692 = vpack.c.b16 %v1364, %v1362
    %v1693 = vpack.c.b16 %v1365, %v1363
    %v1694 = vpack.c.b16 %v1368, %v1366
    %v1695 = vpack.c.b16 %v1369, %v1367
    %v1696 = vpack.c.b16 %v1372, %v1370
    %v1697 = vpack.c.b16 %v1373, %v1371
    %vm2022 = vcmask 261120
    %v2023 = vsel %vm2022, %v381, 0
    %2025 = vmatpush.bf16.msra.mxu0 %v1388
    %2026 = vmatpush.bf16.msra.mxu0 %v1386
    %2027 = vmatpush.bf16.msra.mxu0 %v1384
    %2028 = vmatpush.bf16.msra.mxu0 %v1382
    %2029 = vmatpush.bf16.msra.mxu0 %v1380
    %2030 = vmatpush.bf16.msra.mxu0 %v1378
    %2031 = vmatpush.bf16.msra.mxu0 %v1376
    %2032 = vmatpush.bf16.msra.mxu0 %v1374
    %2033 = vmatmul.bf16.gmra.mxu0 %v357
    %v2034 = vpop.f32.mrf.mxu0
    %v2035 = vadd.f32 %v351, %v2034
    %v2036 = vpop.f32.mrf.mxu0
    %2037 = vdwg.mxu0
    %2038 = vmatpush.bf16.msra.mxu0 %v1404
    %2039 = vmatpush.bf16.msra.mxu0 %v1402
    %2040 = vmatpush.bf16.msra.mxu0 %v1400
    %2041 = vmatpush.bf16.msra.mxu0 %v1398
    %2042 = vmatpush.bf16.msra.mxu0 %v1396
    %2043 = vmatpush.bf16.msra.mxu0 %v1394
    %2044 = vmatpush.bf16.msra.mxu0 %v1392
    %2045 = vmatpush.bf16.msra.mxu0 %v1390
    %2046 = vmatmul.bf16.gmra.mxu0 %v358
    %v2047 = vpop.f32.mrf.mxu0
    %v2048 = vadd.f32 %v2035, %v2047
    %v2049 = vpop.f32.mrf.mxu0
    %2050 = vdwg.mxu0
    %2051 = vmatpush.bf16.msra.mxu0 %v1420
    %2052 = vmatpush.bf16.msra.mxu0 %v1418
    %2053 = vmatpush.bf16.msra.mxu0 %v1416
    %2054 = vmatpush.bf16.msra.mxu0 %v1414
    %2055 = vmatpush.bf16.msra.mxu0 %v1412
    %2056 = vmatpush.bf16.msra.mxu0 %v1410
    %2057 = vmatpush.bf16.msra.mxu0 %v1408
    %2058 = vmatpush.bf16.msra.mxu0 %v1406
    %2059 = vmatmul.bf16.gmra.mxu0 %v359
    %v2060 = vpop.f32.mrf.mxu0
    %v2061 = vadd.f32 %v2048, %v2060
    %v2062 = vpop.f32.mrf.mxu0
    %2063 = vdwg.mxu0
    %2064 = vmatpush.bf16.msra.mxu0 %v1436
    %2065 = vmatpush.bf16.msra.mxu0 %v1434
    %2066 = vmatpush.bf16.msra.mxu0 %v1432
    %2067 = vmatpush.bf16.msra.mxu0 %v1430
    %2068 = vmatpush.bf16.msra.mxu0 %v1428
    %2069 = vmatpush.bf16.msra.mxu0 %v1426
    %2070 = vmatpush.bf16.msra.mxu0 %v1424
    %2071 = vmatpush.bf16.msra.mxu0 %v1422
    %2072 = vmatmul.bf16.gmra.mxu0 %v360
    %v2073 = vpop.f32.mrf.mxu0
    %v2074 = vadd.f32 %v2061, %v2073
    %v2075 = vpop.f32.mrf.mxu0
    %2076 = vdwg.mxu0
    %2077 = vmatpush.bf16.msra.mxu0 %v1452
    %2078 = vmatpush.bf16.msra.mxu0 %v1450
    %2079 = vmatpush.bf16.msra.mxu0 %v1448
    %2080 = vmatpush.bf16.msra.mxu0 %v1446
    %2081 = vmatpush.bf16.msra.mxu0 %v1444
    %2082 = vmatpush.bf16.msra.mxu0 %v1442
    %2083 = vmatpush.bf16.msra.mxu0 %v1440
    %2084 = vmatpush.bf16.msra.mxu0 %v1438
    %2085 = vmatmul.bf16.gmra.mxu0 %v361
    %v2086 = vpop.f32.mrf.mxu0
    %v2087 = vadd.f32 %v2074, %v2086
    %v2088 = vpop.f32.mrf.mxu0
    %2089 = vdwg.mxu0
    %2090 = vmatpush.bf16.msra.mxu0 %v1468
    %2091 = vmatpush.bf16.msra.mxu0 %v1466
    %2092 = vmatpush.bf16.msra.mxu0 %v1464
    %2093 = vmatpush.bf16.msra.mxu0 %v1462
    %2094 = vmatpush.bf16.msra.mxu0 %v1460
    %2095 = vmatpush.bf16.msra.mxu0 %v1458
    %2096 = vmatpush.bf16.msra.mxu0 %v1456
    %2097 = vmatpush.bf16.msra.mxu0 %v1454
    %2098 = vmatmul.bf16.gmra.mxu0 %v362
    %v2099 = vpop.f32.mrf.mxu0
    %v2100 = vadd.f32 %v2087, %v2099
    %v2101 = vpop.f32.mrf.mxu0
    %2102 = vdwg.mxu0
    %2103 = vmatpush.bf16.msra.mxu0 %v1484
    %2104 = vmatpush.bf16.msra.mxu0 %v1482
    %2105 = vmatpush.bf16.msra.mxu0 %v1480
    %2106 = vmatpush.bf16.msra.mxu0 %v1478
    %2107 = vmatpush.bf16.msra.mxu0 %v1476
    %2108 = vmatpush.bf16.msra.mxu0 %v1474
    %2109 = vmatpush.bf16.msra.mxu0 %v1472
    %2110 = vmatpush.bf16.msra.mxu0 %v1470
    %2111 = vmatmul.bf16.gmra.mxu0 %v363
    %v2112 = vpop.f32.mrf.mxu0
    %v2113 = vadd.f32 %v2100, %v2112
    %v2114 = vpop.f32.mrf.mxu0
    %2115 = vdwg.mxu0
    %2116 = vmatpush.bf16.msra.mxu0 %v1500
    %2117 = vmatpush.bf16.msra.mxu0 %v1498
    %2118 = vmatpush.bf16.msra.mxu0 %v1496
    %2119 = vmatpush.bf16.msra.mxu0 %v1494
    %2120 = vmatpush.bf16.msra.mxu0 %v1492
    %2121 = vmatpush.bf16.msra.mxu0 %v1490
    %2122 = vmatpush.bf16.msra.mxu0 %v1488
    %2123 = vmatpush.bf16.msra.mxu0 %v1486
    %2124 = vmatmul.bf16.gmra.mxu0 %v364
    %v2125 = vpop.f32.mrf.mxu0
    %v2126 = vadd.f32 %v2113, %v2125
    %v2127 = vpop.f32.mrf.mxu0
    %2128 = vdwg.mxu0
    %2129 = vmatpush.bf16.msra.mxu0 %v1516
    %2130 = vmatpush.bf16.msra.mxu0 %v1514
    %2131 = vmatpush.bf16.msra.mxu0 %v1512
    %2132 = vmatpush.bf16.msra.mxu0 %v1510
    %2133 = vmatpush.bf16.msra.mxu0 %v1508
    %2134 = vmatpush.bf16.msra.mxu0 %v1506
    %2135 = vmatpush.bf16.msra.mxu0 %v1504
    %2136 = vmatpush.bf16.msra.mxu0 %v1502
    %2137 = vmatmul.bf16.gmra.mxu0 %v367
    %v2138 = vpop.f32.mrf.mxu0
    %v2139 = vadd.f32 %v2126, %v2138
    %v2140 = vpop.f32.mrf.mxu0
    %2141 = vdwg.mxu0
    %2142 = vmatpush.bf16.msra.mxu0 %v1532
    %2143 = vmatpush.bf16.msra.mxu0 %v1530
    %2144 = vmatpush.bf16.msra.mxu0 %v1528
    %2145 = vmatpush.bf16.msra.mxu0 %v1526
    %2146 = vmatpush.bf16.msra.mxu0 %v1524
    %2147 = vmatpush.bf16.msra.mxu0 %v1522
    %2148 = vmatpush.bf16.msra.mxu0 %v1520
    %2149 = vmatpush.bf16.msra.mxu0 %v1518
    %2150 = vmatmul.bf16.gmra.mxu0 %v368
    %v2151 = vpop.f32.mrf.mxu0
    %v2152 = vadd.f32 %v2139, %v2151
    %v2153 = vpop.f32.mrf.mxu0
    %2154 = vdwg.mxu0
    %2155 = vmatpush.bf16.msra.mxu0 %v1548
    %2156 = vmatpush.bf16.msra.mxu0 %v1546
    %2157 = vmatpush.bf16.msra.mxu0 %v1544
    %2158 = vmatpush.bf16.msra.mxu0 %v1542
    %2159 = vmatpush.bf16.msra.mxu0 %v1540
    %2160 = vmatpush.bf16.msra.mxu0 %v1538
    %2161 = vmatpush.bf16.msra.mxu0 %v1536
    %2162 = vmatpush.bf16.msra.mxu0 %v1534
    %2163 = vmatmul.bf16.gmra.mxu0 %v369
    %v2164 = vpop.f32.mrf.mxu0
    %v2165 = vadd.f32 %v2152, %v2164
    %v2166 = vpop.f32.mrf.mxu0
    %2167 = vdwg.mxu0
    %2168 = vmatpush.bf16.msra.mxu0 %v1564
    %2169 = vmatpush.bf16.msra.mxu0 %v1562
    %2170 = vmatpush.bf16.msra.mxu0 %v1560
    %2171 = vmatpush.bf16.msra.mxu0 %v1558
    %2172 = vmatpush.bf16.msra.mxu0 %v1556
    %2173 = vmatpush.bf16.msra.mxu0 %v1554
    %2174 = vmatpush.bf16.msra.mxu0 %v1552
    %2175 = vmatpush.bf16.msra.mxu0 %v1550
    %2176 = vmatmul.bf16.gmra.mxu0 %v370
    %v2177 = vpop.f32.mrf.mxu0
    %v2178 = vadd.f32 %v2165, %v2177
    %v2179 = vpop.f32.mrf.mxu0
    %2180 = vdwg.mxu0
    %2181 = vmatpush.bf16.msra.mxu0 %v1580
    %2182 = vmatpush.bf16.msra.mxu0 %v1578
    %2183 = vmatpush.bf16.msra.mxu0 %v1576
    %2184 = vmatpush.bf16.msra.mxu0 %v1574
    %2185 = vmatpush.bf16.msra.mxu0 %v1572
    %2186 = vmatpush.bf16.msra.mxu0 %v1570
    %2187 = vmatpush.bf16.msra.mxu0 %v1568
    %2188 = vmatpush.bf16.msra.mxu0 %v1566
    %2189 = vmatmul.bf16.gmra.mxu0 %v371
    %v2190 = vpop.f32.mrf.mxu0
    %v2191 = vadd.f32 %v2178, %v2190
    %v2192 = vpop.f32.mrf.mxu0
    %2193 = vdwg.mxu0
    %2194 = vmatpush.bf16.msra.mxu0 %v1596
    %2195 = vmatpush.bf16.msra.mxu0 %v1594
    %2196 = vmatpush.bf16.msra.mxu0 %v1592
    %2197 = vmatpush.bf16.msra.mxu0 %v1590
    %2198 = vmatpush.bf16.msra.mxu0 %v1588
    %2199 = vmatpush.bf16.msra.mxu0 %v1586
    %2200 = vmatpush.bf16.msra.mxu0 %v1584
    %2201 = vmatpush.bf16.msra.mxu0 %v1582
    %2202 = vmatmul.bf16.gmra.mxu0 %v372
    %v2203 = vpop.f32.mrf.mxu0
    %v2204 = vadd.f32 %v2191, %v2203
    %v2205 = vpop.f32.mrf.mxu0
    %2206 = vdwg.mxu0
    %2207 = vmatpush.bf16.msra.mxu0 %v1612
    %2208 = vmatpush.bf16.msra.mxu0 %v1610
    %2209 = vmatpush.bf16.msra.mxu0 %v1608
    %2210 = vmatpush.bf16.msra.mxu0 %v1606
    %2211 = vmatpush.bf16.msra.mxu0 %v1604
    %2212 = vmatpush.bf16.msra.mxu0 %v1602
    %2213 = vmatpush.bf16.msra.mxu0 %v1600
    %2214 = vmatpush.bf16.msra.mxu0 %v1598
    %2215 = vmatmul.bf16.gmra.mxu0 %v373
    %v2216 = vpop.f32.mrf.mxu0
    %v2217 = vadd.f32 %v2204, %v2216
    %v2218 = vpop.f32.mrf.mxu0
    %2219 = vdwg.mxu0
    %2220 = vmatpush.bf16.msra.mxu0 %v1628
    %2221 = vmatpush.bf16.msra.mxu0 %v1626
    %2222 = vmatpush.bf16.msra.mxu0 %v1624
    %2223 = vmatpush.bf16.msra.mxu0 %v1622
    %2224 = vmatpush.bf16.msra.mxu0 %v1620
    %2225 = vmatpush.bf16.msra.mxu0 %v1618
    %2226 = vmatpush.bf16.msra.mxu0 %v1616
    %2227 = vmatpush.bf16.msra.mxu0 %v1614
    %2228 = vmatmul.bf16.gmra.mxu0 %v374
    %v2229 = vpop.f32.mrf.mxu0
    %v2230 = vadd.f32 %v2217, %v2229
    %v2231 = vpop.f32.mrf.mxu0
    %2232 = vdwg.mxu0
    %2233 = vmatpush.bf16.msra.mxu0 %v1644
    %2234 = vmatpush.bf16.msra.mxu0 %v1642
    %2235 = vmatpush.bf16.msra.mxu0 %v1640
    %2236 = vmatpush.bf16.msra.mxu0 %v1638
    %2237 = vmatpush.bf16.msra.mxu0 %v1636
    %2238 = vmatpush.bf16.msra.mxu0 %v1634
    %2239 = vmatpush.bf16.msra.mxu0 %v1632
    %2240 = vmatpush.bf16.msra.mxu0 %v1630
    %2241 = vmatmul.bf16.gmra.mxu0 %v377
    %v2242 = vpop.f32.mrf.mxu0
    %v2243 = vadd.f32 %v2230, %v2242
    %v2244 = vpop.f32.mrf.mxu0
    %2245 = vdwg.mxu0
    %2246 = vmatpush.bf16.msra.mxu0 %v1660
    %2247 = vmatpush.bf16.msra.mxu0 %v1658
    %2248 = vmatpush.bf16.msra.mxu0 %v1656
    %2249 = vmatpush.bf16.msra.mxu0 %v1654
    %2250 = vmatpush.bf16.msra.mxu0 %v1652
    %2251 = vmatpush.bf16.msra.mxu0 %v1650
    %2252 = vmatpush.bf16.msra.mxu0 %v1648
    %2253 = vmatpush.bf16.msra.mxu0 %v1646
    %2254 = vmatmul.bf16.gmra.mxu0 %v378
    %v2255 = vpop.f32.mrf.mxu0
    %v2256 = vadd.f32 %v2243, %v2255
    %v2257 = vpop.f32.mrf.mxu0
    %2258 = vdwg.mxu0
    %2259 = vmatpush.bf16.msra.mxu0 %v1676
    %2260 = vmatpush.bf16.msra.mxu0 %v1674
    %2261 = vmatpush.bf16.msra.mxu0 %v1672
    %2262 = vmatpush.bf16.msra.mxu0 %v1670
    %2263 = vmatpush.bf16.msra.mxu0 %v1668
    %2264 = vmatpush.bf16.msra.mxu0 %v1666
    %2265 = vmatpush.bf16.msra.mxu0 %v1664
    %2266 = vmatpush.bf16.msra.mxu0 %v1662
    %2267 = vmatmul.bf16.gmra.mxu0 %v379
    %v2268 = vpop.f32.mrf.mxu0
    %v2269 = vadd.f32 %v2256, %v2268
    %v2270 = vpop.f32.mrf.mxu0
    %2271 = vdwg.mxu0
    %2272 = vmatpush.bf16.msra.mxu0 %v1692
    %2273 = vmatpush.bf16.msra.mxu0 %v1690
    %2274 = vmatpush.bf16.msra.mxu0 %v1688
    %2275 = vmatpush.bf16.msra.mxu0 %v1686
    %2276 = vmatpush.bf16.msra.mxu0 %v1684
    %2277 = vmatpush.bf16.msra.mxu0 %v1682
    %2278 = vmatpush.bf16.msra.mxu0 %v1680
    %2279 = vmatpush.bf16.msra.mxu0 %v1678
    %2280 = vmatmul.bf16.gmra.mxu0 %v380
    %v2281 = vpop.f32.mrf.mxu0
    %v2282 = vadd.f32 %v2269, %v2281
    %v2283 = vpop.f32.mrf.mxu0
    %2284 = vdwg.mxu0
    %2285 = vmatpush.bf16.msra.mxu0 0
    %2286 = vmatpush.bf16.msra.mxu0 0
    %2287 = vmatpush.bf16.msra.mxu0 0
    %2288 = vmatpush.bf16.msra.mxu0 0
    %2289 = vmatpush.bf16.msra.mxu0 0
    %2290 = vmatpush.bf16.msra.mxu0 0
    %2291 = vmatpush.bf16.msra.mxu0 %v1696
    %2292 = vmatpush.bf16.msra.mxu0 %v1694
    %2293 = vmatmul.bf16.gmra.mxu0 %v2023
    %v2294 = vpop.f32.mrf.mxu0
    %v2295 = vadd.f32 %v2282, %v2294
    %v2296 = vpop.f32.mrf.mxu0
    %2297 = vdwg.mxu0
    %2298 = vmatpush.bf16.msra.mxu0 %v1389
    %2299 = vmatpush.bf16.msra.mxu0 %v1387
    %2300 = vmatpush.bf16.msra.mxu0 %v1385
    %2301 = vmatpush.bf16.msra.mxu0 %v1383
    %2302 = vmatpush.bf16.msra.mxu0 %v1381
    %2303 = vmatpush.bf16.msra.mxu0 %v1379
    %2304 = vmatpush.bf16.msra.mxu0 %v1377
    %2305 = vmatpush.bf16.msra.mxu0 %v1375
    %2306 = vmatmul.bf16.gmra.mxu0 %v357
    %v2307 = vpop.f32.mrf.mxu0
    %v2308 = vadd.f32 %v352, %v2307
    %v2309 = vpop.f32.mrf.mxu0
    %2310 = vdwg.mxu0
    %2311 = vmatpush.bf16.msra.mxu0 %v1405
    %2312 = vmatpush.bf16.msra.mxu0 %v1403
    %2313 = vmatpush.bf16.msra.mxu0 %v1401
    %2314 = vmatpush.bf16.msra.mxu0 %v1399
    %2315 = vmatpush.bf16.msra.mxu0 %v1397
    %2316 = vmatpush.bf16.msra.mxu0 %v1395
    %2317 = vmatpush.bf16.msra.mxu0 %v1393
    %2318 = vmatpush.bf16.msra.mxu0 %v1391
    %2319 = vmatmul.bf16.gmra.mxu0 %v358
    %v2320 = vpop.f32.mrf.mxu0
    %v2321 = vadd.f32 %v2308, %v2320
    %v2322 = vpop.f32.mrf.mxu0
    %2323 = vdwg.mxu0
    %2324 = vmatpush.bf16.msra.mxu0 %v1421
    %2325 = vmatpush.bf16.msra.mxu0 %v1419
    %2326 = vmatpush.bf16.msra.mxu0 %v1417
    %2327 = vmatpush.bf16.msra.mxu0 %v1415
    %2328 = vmatpush.bf16.msra.mxu0 %v1413
    %2329 = vmatpush.bf16.msra.mxu0 %v1411
    %2330 = vmatpush.bf16.msra.mxu0 %v1409
    %2331 = vmatpush.bf16.msra.mxu0 %v1407
    %2332 = vmatmul.bf16.gmra.mxu0 %v359
    %v2333 = vpop.f32.mrf.mxu0
    %v2334 = vadd.f32 %v2321, %v2333
    %v2335 = vpop.f32.mrf.mxu0
    %2336 = vdwg.mxu0
    %2337 = vmatpush.bf16.msra.mxu0 %v1437
    %2338 = vmatpush.bf16.msra.mxu0 %v1435
    %2339 = vmatpush.bf16.msra.mxu0 %v1433
    %2340 = vmatpush.bf16.msra.mxu0 %v1431
    %2341 = vmatpush.bf16.msra.mxu0 %v1429
    %2342 = vmatpush.bf16.msra.mxu0 %v1427
    %2343 = vmatpush.bf16.msra.mxu0 %v1425
    %2344 = vmatpush.bf16.msra.mxu0 %v1423
    %2345 = vmatmul.bf16.gmra.mxu0 %v360
    %v2346 = vpop.f32.mrf.mxu0
    %v2347 = vadd.f32 %v2334, %v2346
    %v2348 = vpop.f32.mrf.mxu0
    %2349 = vdwg.mxu0
    %2350 = vmatpush.bf16.msra.mxu0 %v1453
    %2351 = vmatpush.bf16.msra.mxu0 %v1451
    %2352 = vmatpush.bf16.msra.mxu0 %v1449
    %2353 = vmatpush.bf16.msra.mxu0 %v1447
    %2354 = vmatpush.bf16.msra.mxu0 %v1445
    %2355 = vmatpush.bf16.msra.mxu0 %v1443
    %2356 = vmatpush.bf16.msra.mxu0 %v1441
    %2357 = vmatpush.bf16.msra.mxu0 %v1439
    %2358 = vmatmul.bf16.gmra.mxu0 %v361
    %v2359 = vpop.f32.mrf.mxu0
    %v2360 = vadd.f32 %v2347, %v2359
    %v2361 = vpop.f32.mrf.mxu0
    %2362 = vdwg.mxu0
    %2363 = vmatpush.bf16.msra.mxu0 %v1469
    %2364 = vmatpush.bf16.msra.mxu0 %v1467
    %2365 = vmatpush.bf16.msra.mxu0 %v1465
    %2366 = vmatpush.bf16.msra.mxu0 %v1463
    %2367 = vmatpush.bf16.msra.mxu0 %v1461
    %2368 = vmatpush.bf16.msra.mxu0 %v1459
    %2369 = vmatpush.bf16.msra.mxu0 %v1457
    %2370 = vmatpush.bf16.msra.mxu0 %v1455
    %2371 = vmatmul.bf16.gmra.mxu0 %v362
    %v2372 = vpop.f32.mrf.mxu0
    %v2373 = vadd.f32 %v2360, %v2372
    %v2374 = vpop.f32.mrf.mxu0
    %2375 = vdwg.mxu0
    %2376 = vmatpush.bf16.msra.mxu0 %v1485
    %2377 = vmatpush.bf16.msra.mxu0 %v1483
    %2378 = vmatpush.bf16.msra.mxu0 %v1481
    %2379 = vmatpush.bf16.msra.mxu0 %v1479
    %2380 = vmatpush.bf16.msra.mxu0 %v1477
    %2381 = vmatpush.bf16.msra.mxu0 %v1475
    %2382 = vmatpush.bf16.msra.mxu0 %v1473
    %2383 = vmatpush.bf16.msra.mxu0 %v1471
    %2384 = vmatmul.bf16.gmra.mxu0 %v363
    %v2385 = vpop.f32.mrf.mxu0
    %v2386 = vadd.f32 %v2373, %v2385
    %v2387 = vpop.f32.mrf.mxu0
    %2388 = vdwg.mxu0
    %2389 = vmatpush.bf16.msra.mxu0 %v1501
    %2390 = vmatpush.bf16.msra.mxu0 %v1499
    %2391 = vmatpush.bf16.msra.mxu0 %v1497
    %2392 = vmatpush.bf16.msra.mxu0 %v1495
    %2393 = vmatpush.bf16.msra.mxu0 %v1493
    %2394 = vmatpush.bf16.msra.mxu0 %v1491
    %2395 = vmatpush.bf16.msra.mxu0 %v1489
    %2396 = vmatpush.bf16.msra.mxu0 %v1487
    %2397 = vmatmul.bf16.gmra.mxu0 %v364
    %v2398 = vpop.f32.mrf.mxu0
    %v2399 = vadd.f32 %v2386, %v2398
    %v2400 = vpop.f32.mrf.mxu0
    %2401 = vdwg.mxu0
    %2402 = vmatpush.bf16.msra.mxu0 %v1517
    %2403 = vmatpush.bf16.msra.mxu0 %v1515
    %2404 = vmatpush.bf16.msra.mxu0 %v1513
    %2405 = vmatpush.bf16.msra.mxu0 %v1511
    %2406 = vmatpush.bf16.msra.mxu0 %v1509
    %2407 = vmatpush.bf16.msra.mxu0 %v1507
    %2408 = vmatpush.bf16.msra.mxu0 %v1505
    %2409 = vmatpush.bf16.msra.mxu0 %v1503
    %2410 = vmatmul.bf16.gmra.mxu0 %v367
    %v2411 = vpop.f32.mrf.mxu0
    %v2412 = vadd.f32 %v2399, %v2411
    %v2413 = vpop.f32.mrf.mxu0
    %2414 = vdwg.mxu0
    %2415 = vmatpush.bf16.msra.mxu0 %v1533
    %2416 = vmatpush.bf16.msra.mxu0 %v1531
    %2417 = vmatpush.bf16.msra.mxu0 %v1529
    %2418 = vmatpush.bf16.msra.mxu0 %v1527
    %2419 = vmatpush.bf16.msra.mxu0 %v1525
    %2420 = vmatpush.bf16.msra.mxu0 %v1523
    %2421 = vmatpush.bf16.msra.mxu0 %v1521
    %2422 = vmatpush.bf16.msra.mxu0 %v1519
    %2423 = vmatmul.bf16.gmra.mxu0 %v368
    %v2424 = vpop.f32.mrf.mxu0
    %v2425 = vadd.f32 %v2412, %v2424
    %v2426 = vpop.f32.mrf.mxu0
    %2427 = vdwg.mxu0
    %2428 = vmatpush.bf16.msra.mxu0 %v1549
    %2429 = vmatpush.bf16.msra.mxu0 %v1547
    %2430 = vmatpush.bf16.msra.mxu0 %v1545
    %2431 = vmatpush.bf16.msra.mxu0 %v1543
    %2432 = vmatpush.bf16.msra.mxu0 %v1541
    %2433 = vmatpush.bf16.msra.mxu0 %v1539
    %2434 = vmatpush.bf16.msra.mxu0 %v1537
    %2435 = vmatpush.bf16.msra.mxu0 %v1535
    %2436 = vmatmul.bf16.gmra.mxu0 %v369
    %v2437 = vpop.f32.mrf.mxu0
    %v2438 = vadd.f32 %v2425, %v2437
    %v2439 = vpop.f32.mrf.mxu0
    %2440 = vdwg.mxu0
    %2441 = vmatpush.bf16.msra.mxu0 %v1565
    %2442 = vmatpush.bf16.msra.mxu0 %v1563
    %2443 = vmatpush.bf16.msra.mxu0 %v1561
    %2444 = vmatpush.bf16.msra.mxu0 %v1559
    %2445 = vmatpush.bf16.msra.mxu0 %v1557
    %2446 = vmatpush.bf16.msra.mxu0 %v1555
    %2447 = vmatpush.bf16.msra.mxu0 %v1553
    %2448 = vmatpush.bf16.msra.mxu0 %v1551
    %2449 = vmatmul.bf16.gmra.mxu0 %v370
    %v2450 = vpop.f32.mrf.mxu0
    %v2451 = vadd.f32 %v2438, %v2450
    %v2452 = vpop.f32.mrf.mxu0
    %2453 = vdwg.mxu0
    %2454 = vmatpush.bf16.msra.mxu0 %v1581
    %2455 = vmatpush.bf16.msra.mxu0 %v1579
    %2456 = vmatpush.bf16.msra.mxu0 %v1577
    %2457 = vmatpush.bf16.msra.mxu0 %v1575
    %2458 = vmatpush.bf16.msra.mxu0 %v1573
    %2459 = vmatpush.bf16.msra.mxu0 %v1571
    %2460 = vmatpush.bf16.msra.mxu0 %v1569
    %2461 = vmatpush.bf16.msra.mxu0 %v1567
    %2462 = vmatmul.bf16.gmra.mxu0 %v371
    %v2463 = vpop.f32.mrf.mxu0
    %v2464 = vadd.f32 %v2451, %v2463
    %v2465 = vpop.f32.mrf.mxu0
    %2466 = vdwg.mxu0
    %2467 = vmatpush.bf16.msra.mxu0 %v1597
    %2468 = vmatpush.bf16.msra.mxu0 %v1595
    %2469 = vmatpush.bf16.msra.mxu0 %v1593
    %2470 = vmatpush.bf16.msra.mxu0 %v1591
    %2471 = vmatpush.bf16.msra.mxu0 %v1589
    %2472 = vmatpush.bf16.msra.mxu0 %v1587
    %2473 = vmatpush.bf16.msra.mxu0 %v1585
    %2474 = vmatpush.bf16.msra.mxu0 %v1583
    %2475 = vmatmul.bf16.gmra.mxu0 %v372
    %v2476 = vpop.f32.mrf.mxu0
    %v2477 = vadd.f32 %v2464, %v2476
    %v2478 = vpop.f32.mrf.mxu0
    %2479 = vdwg.mxu0
    %2480 = vmatpush.bf16.msra.mxu0 %v1613
    %2481 = vmatpush.bf16.msra.mxu0 %v1611
    %2482 = vmatpush.bf16.msra.mxu0 %v1609
    %2483 = vmatpush.bf16.msra.mxu0 %v1607
    %2484 = vmatpush.bf16.msra.mxu0 %v1605
    %2485 = vmatpush.bf16.msra.mxu0 %v1603
    %2486 = vmatpush.bf16.msra.mxu0 %v1601
    %2487 = vmatpush.bf16.msra.mxu0 %v1599
    %2488 = vmatmul.bf16.gmra.mxu0 %v373
    %v2489 = vpop.f32.mrf.mxu0
    %v2490 = vadd.f32 %v2477, %v2489
    %v2491 = vpop.f32.mrf.mxu0
    %2492 = vdwg.mxu0
    %2493 = vmatpush.bf16.msra.mxu0 %v1629
    %2494 = vmatpush.bf16.msra.mxu0 %v1627
    %2495 = vmatpush.bf16.msra.mxu0 %v1625
    %2496 = vmatpush.bf16.msra.mxu0 %v1623
    %2497 = vmatpush.bf16.msra.mxu0 %v1621
    %2498 = vmatpush.bf16.msra.mxu0 %v1619
    %2499 = vmatpush.bf16.msra.mxu0 %v1617
    %2500 = vmatpush.bf16.msra.mxu0 %v1615
    %2501 = vmatmul.bf16.gmra.mxu0 %v374
    %v2502 = vpop.f32.mrf.mxu0
    %v2503 = vadd.f32 %v2490, %v2502
    %v2504 = vpop.f32.mrf.mxu0
    %2505 = vdwg.mxu0
    %2506 = vmatpush.bf16.msra.mxu0 %v1645
    %2507 = vmatpush.bf16.msra.mxu0 %v1643
    %2508 = vmatpush.bf16.msra.mxu0 %v1641
    %2509 = vmatpush.bf16.msra.mxu0 %v1639
    %2510 = vmatpush.bf16.msra.mxu0 %v1637
    %2511 = vmatpush.bf16.msra.mxu0 %v1635
    %2512 = vmatpush.bf16.msra.mxu0 %v1633
    %2513 = vmatpush.bf16.msra.mxu0 %v1631
    %2514 = vmatmul.bf16.gmra.mxu0 %v377
    %v2515 = vpop.f32.mrf.mxu0
    %v2516 = vadd.f32 %v2503, %v2515
    %v2517 = vpop.f32.mrf.mxu0
    %2518 = vdwg.mxu0
    %2519 = vmatpush.bf16.msra.mxu0 %v1661
    %2520 = vmatpush.bf16.msra.mxu0 %v1659
    %2521 = vmatpush.bf16.msra.mxu0 %v1657
    %2522 = vmatpush.bf16.msra.mxu0 %v1655
    %2523 = vmatpush.bf16.msra.mxu0 %v1653
    %2524 = vmatpush.bf16.msra.mxu0 %v1651
    %2525 = vmatpush.bf16.msra.mxu0 %v1649
    %2526 = vmatpush.bf16.msra.mxu0 %v1647
    %2527 = vmatmul.bf16.gmra.mxu0 %v378
    %v2528 = vpop.f32.mrf.mxu0
    %v2529 = vadd.f32 %v2516, %v2528
    %v2530 = vpop.f32.mrf.mxu0
    %2531 = vdwg.mxu0
    %2532 = vmatpush.bf16.msra.mxu0 %v1677
    %2533 = vmatpush.bf16.msra.mxu0 %v1675
    %2534 = vmatpush.bf16.msra.mxu0 %v1673
    %2535 = vmatpush.bf16.msra.mxu0 %v1671
    %2536 = vmatpush.bf16.msra.mxu0 %v1669
    %2537 = vmatpush.bf16.msra.mxu0 %v1667
    %2538 = vmatpush.bf16.msra.mxu0 %v1665
    %2539 = vmatpush.bf16.msra.mxu0 %v1663
    %2540 = vmatmul.bf16.gmra.mxu0 %v379
    %v2541 = vpop.f32.mrf.mxu0
    %v2542 = vadd.f32 %v2529, %v2541
    %v2543 = vpop.f32.mrf.mxu0
    %2544 = vdwg.mxu0
    %2545 = vmatpush.bf16.msra.mxu0 %v1693
    %2546 = vmatpush.bf16.msra.mxu0 %v1691
    %2547 = vmatpush.bf16.msra.mxu0 %v1689
    %2548 = vmatpush.bf16.msra.mxu0 %v1687
    %2549 = vmatpush.bf16.msra.mxu0 %v1685
    %2550 = vmatpush.bf16.msra.mxu0 %v1683
    %2551 = vmatpush.bf16.msra.mxu0 %v1681
    %2552 = vmatpush.bf16.msra.mxu0 %v1679
    %2553 = vmatmul.bf16.gmra.mxu0 %v380
    %v2554 = vpop.f32.mrf.mxu0
    %v2555 = vadd.f32 %v2542, %v2554
    %v2556 = vpop.f32.mrf.mxu0
    %2557 = vdwg.mxu0
    %2558 = vmatpush.bf16.msra.mxu0 0
    %2559 = vmatpush.bf16.msra.mxu0 0
    %2560 = vmatpush.bf16.msra.mxu0 0
    %2561 = vmatpush.bf16.msra.mxu0 0
    %2562 = vmatpush.bf16.msra.mxu0 0
    %2563 = vmatpush.bf16.msra.mxu0 0
    %2564 = vmatpush.bf16.msra.mxu0 %v1697
    %2565 = vmatpush.bf16.msra.mxu0 %v1695
    %2566 = vmatmul.bf16.gmra.mxu0 %v2023
    %v2567 = vpop.f32.mrf.mxu0
    %v2568 = vadd.f32 %v2555, %v2567
    %v2569 = vpop.f32.mrf.mxu0
    %2570 = vdwg.mxu0
    %v2571 = vmax.f32 %v2295, 0.0
    %v2572 = vmax.f32 %v2568, 0.0
    %v2573 = vpack.c.bf16 %v2571, %v2571
    %v2574 = vpack.c.bf16 %v2572, %v2572
    %v2575 = vld [vmem:[%s3] sm:$0xf]
    %v2576 = vld [vmem:[%s3 + $0x4] sm:$0xf]
    %v2577 = vld [vmem:[%s3 + $0x8] sm:$0xf]
    %v2578 = vld [vmem:[%s3 + $0xc] sm:$0xf]
    %v2579 = vld [vmem:[%s3 + $0x10] sm:$0xf]
    %v2580 = vld [vmem:[%s3 + $0x14] sm:$0xf]
    %v2581 = vld [vmem:[%s3 + $0x18] sm:$0xf]
    %v2582 = vld [vmem:[%s3 + $0x1c] sm:$0xf]
    %v2583 = vld [vmem:[%s3 + $0x20] sm:$0xf]
    %v2584 = vld [vmem:[%s3 + $0x24] sm:$0xf]
    %v2585 = vld [vmem:[%s3 + $0x28] sm:$0xf]
    %v2586 = vld [vmem:[%s3 + $0x2c] sm:$0xf]
    %v2587 = vld [vmem:[%s3 + $0x30] sm:$0xf]
    %v2588 = vld [vmem:[%s3 + $0x34] sm:$0xf]
    %v2589 = vld [vmem:[%s3 + $0x38] sm:$0xf]
    %v2590 = vld [vmem:[%s3 + $0x3c] sm:$0xf]
    %v2591 = vld [vmem:[%s3 + $0x40] sm:$0xf]
    %v2592 = vld [vmem:[%s3 + $0x44] sm:$0xf]
    %v2593 = vld [vmem:[%s3 + $0x48] sm:$0xf]
    %v2594 = vld [vmem:[%s3 + $0x4c] sm:$0xf]
    %v2595 = vld [vmem:[%s3 + $0x50] sm:$0xf]
    %v2596 = vld [vmem:[%s3 + $0x54] sm:$0xf]
    %v2597 = vld [vmem:[%s3 + $0x58] sm:$0xf]
    %v2598 = vld [vmem:[%s3 + $0x5c] sm:$0xf]
    %v2599 = vld [vmem:[%s3 + $0x60] sm:$0xf]
    %v2600 = vld [vmem:[%s3 + $0x64] sm:$0xf]
    %v2601 = vld [vmem:[%s3 + $0x68] sm:$0xf]
    %v2602 = vld [vmem:[%s3 + $0x6c] sm:$0xf]
    %v2603 = vld [vmem:[%s3 + $0x70] sm:$0xf]
    %v2604 = vld [vmem:[%s3 + $0x74] sm:$0xf]
    %v2605 = vld [vmem:[%s3 + $0x78] sm:$0xf]
    %v2606 = vld [vmem:[%s3 + $0x7c] sm:$0xf]
    %v2607 = vld [vmem:[%s4] sm:$0x1]
    %v2609 = vperm.slane %v2607, 0
    %v2643 = vunpack.c.l.b16 %v2575
    %v2644 = vunpack.c.l.b16 %v2576
    %v2645 = vunpack.c.l.b16 %v2577
    %v2646 = vunpack.c.l.b16 %v2578
    %v2647 = vunpack.c.l.b16 %v2579
    %v2648 = vunpack.c.l.b16 %v2580
    %v2649 = vunpack.c.l.b16 %v2581
    %v2650 = vunpack.c.l.b16 %v2582
    %v2651 = vunpack.c.l.b16 %v2583
    %v2652 = vunpack.c.l.b16 %v2584
    %v2653 = vunpack.c.l.b16 %v2585
    %v2654 = vunpack.c.l.b16 %v2586
    %v2655 = vunpack.c.l.b16 %v2587
    %v2656 = vunpack.c.l.b16 %v2588
    %v2657 = vunpack.c.l.b16 %v2589
    %v2658 = vunpack.c.l.b16 %v2590
    %v2659 = vunpack.c.l.b16 %v2591
    %v2660 = vunpack.c.l.b16 %v2592
    %v2661 = vunpack.c.l.b16 %v2593
    %v2662 = vunpack.c.l.b16 %v2594
    %v2663 = vunpack.c.l.b16 %v2595
    %v2664 = vunpack.c.l.b16 %v2596
    %v2665 = vunpack.c.l.b16 %v2597
    %v2666 = vunpack.c.l.b16 %v2598
    %v2667 = vunpack.c.l.b16 %v2599
    %v2668 = vunpack.c.l.b16 %v2600
    %v2669 = vunpack.c.l.b16 %v2601
    %v2670 = vunpack.c.l.b16 %v2602
    %v2671 = vunpack.c.l.b16 %v2603
    %v2672 = vunpack.c.l.b16 %v2604
    %v2673 = vunpack.c.l.b16 %v2605
    %v2674 = vunpack.c.l.b16 %v2606
    %v2675 = vpack.c.b16 %v2644, %v2643
    %v2676 = vpack.c.b16 %v2646, %v2645
    %v2677 = vpack.c.b16 %v2648, %v2647
    %v2678 = vpack.c.b16 %v2650, %v2649
    %v2679 = vpack.c.b16 %v2652, %v2651
    %v2680 = vpack.c.b16 %v2654, %v2653
    %v2681 = vpack.c.b16 %v2656, %v2655
    %v2682 = vpack.c.b16 %v2658, %v2657
    %v2683 = vpack.c.b16 %v2660, %v2659
    %v2684 = vpack.c.b16 %v2662, %v2661
    %v2685 = vpack.c.b16 %v2664, %v2663
    %v2686 = vpack.c.b16 %v2666, %v2665
    %v2687 = vpack.c.b16 %v2668, %v2667
    %v2688 = vpack.c.b16 %v2670, %v2669
    %v2689 = vpack.c.b16 %v2672, %v2671
    %v2690 = vpack.c.b16 %v2674, %v2673
    %2707 = vmatpush.bf16.msra.mxu0 %v2682
    %2708 = vmatpush.bf16.msra.mxu0 %v2681
    %2709 = vmatpush.bf16.msra.mxu0 %v2680
    %2710 = vmatpush.bf16.msra.mxu0 %v2679
    %2711 = vmatpush.bf16.msra.mxu0 %v2678
    %2712 = vmatpush.bf16.msra.mxu0 %v2677
    %2713 = vmatpush.bf16.msra.mxu0 %v2676
    %2714 = vmatpush.bf16.msra.mxu0 %v2675
    %2715 = vmatmul.bf16.gmra.mxu0 %v2573
    %v2716 = vpop.f32.mrf.mxu0
    %v2717 = vadd.f32 %v2609, %v2716
    %v2718 = vpop.f32.mrf.mxu0
    %2719 = vdwg.mxu0
    %2720 = vmatpush.bf16.msra.mxu0 %v2690
    %2721 = vmatpush.bf16.msra.mxu0 %v2689
    %2722 = vmatpush.bf16.msra.mxu0 %v2688
    %2723 = vmatpush.bf16.msra.mxu0 %v2687
    %2724 = vmatpush.bf16.msra.mxu0 %v2686
    %2725 = vmatpush.bf16.msra.mxu0 %v2685
    %2726 = vmatpush.bf16.msra.mxu0 %v2684
    %2727 = vmatpush.bf16.msra.mxu0 %v2683
    %2728 = vmatmul.bf16.gmra.mxu0 %v2574
    %v2729 = vpop.f32.mrf.mxu0
    %v2730 = vadd.f32 %v2717, %v2729
    %v2731 = vpop.f32.mrf.mxu0
    %2732 = vdwg.mxu0
    %vm2733 = vcmask 517120
    %2734 = vst.msk [vmem:[#allocation2] sm:$0x3] %vm2733, %v2730
    // Predicated region
    $region22: #{dqn_forward.5} parent=1 // pred_check
      _
    $region23: #{dqn_forward.5} parent=1 // pred_check_branch
      %2736 = sbr.rel (0) target = $region25
    $region24: #{dqn_forward.5} parent=1 // pred_region
      %2738 = vsyncadd [#allocation3], 0
      %s2740 = sshll.u32 [#allocation2], 4
      %s2741 = int_to_ptr.vmem [resolvable:$true] %s2740
      %s2742 = sshll.u32 %s5, 4
      %s2743 = int_to_ptr.hbm [resolvable:$true] %s2742
      %2745 = dma.vmem_to_hbm [thread:$0]  %s2741, 32, %s2743, [#allocation3]
    $region25: #{dqn_forward.5} parent=1 // pred_fallthru
      _
    // Predicated region
    $region26: #{dqn_forward.5} parent=1 // pred_check
      _
    $region27: #{dqn_forward.5} parent=1 // pred_check_branch
      %2747 = sbr.rel (0) target = $region29
    $region28: #{dqn_forward.5} parent=1 // pred_region
      %2749 = dma.done [#allocation3], 32
    $region29: #{dqn_forward.5} parent=1 // pred_fallthru
      _
    %2750 = vsyncpa [#allocation3], 1

</llo_original>
